<compile_context>
chip_gen: v5e
topology: v5e:2x2
jax: 0.10.0
libtpu: 0.0.40
codegen_flags: <defaults>
</compile_context>

<pallas_src>
import functools
import math

import jax
import jax.numpy as jnp
from jax.experimental import pallas as pl
from jax.experimental.pallas import tpu as pltpu


# ---------------------------------------------------------------------------
# Fused Pallas kernel: L-layer LSTM + Linear head, single grid step.
# ---------------------------------------------------------------------------
def _fused_lstm_mlp_kernel(*refs, num_layers, seq_len, hidden):
    """Argument order (flat):
        inputs : x (S,B,In), h0 (L,B,H), c0 (L,B,H),
                 [w_ih^T (In_l,4H), w_hh^T (H,4H), bias (1,4H)] * L,
                 w_out^T (H,Out), b_out (1,Out)
        outputs: out (S,B,Out), hn (L,B,H), cn (L,B,H)
        scratch: xp_scr (S,B,4H), y_scr (S,B,H)
    """
    L, S, H = num_layers, seq_len, hidden
    it = iter(refs)
    x_ref, h0_ref, c0_ref = next(it), next(it), next(it)
    layer_refs = [(next(it), next(it), next(it)) for _ in range(L)]
    wout_ref, bout_ref = next(it), next(it)
    out_ref, hn_ref, cn_ref = next(it), next(it), next(it)
    xp_scr, y_scr = next(it), next(it)

    wout = wout_ref[...]          # (H, Out)
    bout = bout_ref[...]          # (1, Out)

    def lstm_cell(gates, c):
        # Two full-vreg EUP passes over the whole (B, 4H) gate block,
        # then static lane slices for i/f/g/o (PyTorch gate order).
        sig = jax.nn.sigmoid(gates)
        th = jnp.tanh(gates)
        i = sig[:, 0 * H:1 * H]
        f = sig[:, 1 * H:2 * H]
        g = th[:, 2 * H:3 * H]
        o = sig[:, 3 * H:4 * H]
        c_new = f * c + i * g
        h_new = o * jnp.tanh(c_new)
        return h_new, c_new

    for l in range(L):
        wih_ref, whh_ref, b_ref = layer_refs[l]
        wih = wih_ref[...]        # (In_l, 4H)
        whh = whh_ref[...]        # (H, 4H)
        b = b_ref[...]            # (1, 4H)
        src = x_ref if l == 0 else y_scr
        last = (l == L - 1)

        # --- hoisted input projection for the whole sequence (off the
        #     recurrent critical path) ---------------------------------
        for s in range(S):
            xp_scr[s] = (jnp.dot(src[s], wih,
                                 preferred_element_type=jnp.float32) + b)

        # --- recurrence: one h @ W_hh matmul per step ------------------
        h = h0_ref[l]             # (B, H)
        c = c0_ref[l]             # (B, H)
        for t in range(S):
            gates = xp_scr[t] + jnp.dot(h, whh,
                                        preferred_element_type=jnp.float32)
            h, c = lstm_cell(gates, c)
            if last:
                # Fused linear head (does not feed the recurrent chain).
                out_ref[t] = (jnp.dot(h, wout,
                                      preferred_element_type=jnp.float32)
                              + bout)
            else:
                y_scr[t] = h      # kept resident in VMEM for the next layer

        hn_ref[l] = h
        cn_ref[l] = c


# ---------------------------------------------------------------------------
# Wrapper: one pallas_call for the whole forward pass.
# ---------------------------------------------------------------------------
def fused_lstm_forward(x_tm, h0, c0, layer_params, w_out_t, b_out):
    """x_tm: (S, B, In) time-major.
       layer_params: list of (w_ih^T (In_l,4H), w_hh^T (H,4H), bias (1,4H)).
       Returns (out (S,B,Out), hn (L,B,H), cn (L,B,H))."""
    S, B, In = x_tm.shape
    L = len(layer_params)
    H = h0.shape[-1]
    Out = w_out_t.shape[-1]

    kernel = functools.partial(_fused_lstm_mlp_kernel,
                               num_layers=L, seq_len=S, hidden=H)

    in_specs = [
        pl.BlockSpec((S, B, In), lambda i: (0, 0, 0)),   # x
        pl.BlockSpec((L, B, H), lambda i: (0, 0, 0)),    # h0
        pl.BlockSpec((L, B, H), lambda i: (0, 0, 0)),    # c0
    ]
    args = [x_tm, h0, c0]
    for (w_ih_t, w_hh_t, bias) in layer_params:
        in_specs += [
            pl.BlockSpec(w_ih_t.shape, lambda i: (0, 0)),
            pl.BlockSpec(w_hh_t.shape, lambda i: (0, 0)),
            pl.BlockSpec(bias.shape, lambda i: (0, 0)),
        ]
        args += [w_ih_t, w_hh_t, bias]
    in_specs += [
        pl.BlockSpec((H, Out), lambda i: (0, 0)),        # W_out^T
        pl.BlockSpec((1, Out), lambda i: (0, 0)),        # b_out
    ]
    args += [w_out_t, b_out]

    out, hn, cn = pl.pallas_call(
        kernel,
        out_shape=(
            jax.ShapeDtypeStruct((S, B, Out), jnp.float32),
            jax.ShapeDtypeStruct((L, B, H), jnp.float32),
            jax.ShapeDtypeStruct((L, B, H), jnp.float32),
        ),
        grid_spec=pltpu.PrefetchScalarGridSpec(
            num_scalar_prefetch=0,
            grid=(1,),                         # single step: no per-t pipeline overhead
            in_specs=in_specs,
            out_specs=(
                pl.BlockSpec((S, B, Out), lambda i: (0, 0, 0)),
                pl.BlockSpec((L, B, H), lambda i: (0, 0, 0)),
                pl.BlockSpec((L, B, H), lambda i: (0, 0, 0)),
            ),
            scratch_shapes=[
                pltpu.VMEM((S, B, 4 * H), jnp.float32),  # hoisted gate projections
                pltpu.VMEM((S, B, H), jnp.float32),      # inter-layer activations
            ],
        ),
        compiler_params=pltpu.CompilerParams(
            dimension_semantics=("arbitrary",)),
    )(*args)
    return out, hn, cn


# ---------------------------------------------------------------------------
# Model (mirrors models/LSTM.py forward)
# ---------------------------------------------------------------------------
class Configs:
    enc_in = 4
    dec_in = 4
    d_model = 32
    e_layers = 2
    batch_size = 2
    output_attention = False


class PallasLSTMModel:
    def __init__(self, configs, key):
        self.configs = configs
        H, In, L = configs.d_model, configs.enc_in, configs.e_layers
        stdv = 1.0 / math.sqrt(H)

        keys = jax.random.split(key, 4 * L + 4)     # exactly what we consume
        k = iter(keys)

        # Per-layer LSTM parameters (PyTorch shapes, stored pre-transposed).
        self.layers = []
        for layer in range(L):
            in_sz = In if layer == 0 else H
            w_ih = jax.random.uniform(next(k), (4 * H, in_sz), jnp.float32,
                                      -stdv, stdv)
            w_hh = jax.random.uniform(next(k), (4 * H, H), jnp.float32,
                                      -stdv, stdv)
            b_ih = jax.random.uniform(next(k), (4 * H,), jnp.float32,
                                      -stdv, stdv)
            b_hh = jax.random.uniform(next(k), (4 * H,), jnp.float32,
                                      -stdv, stdv)
            self.layers.append(
                (w_ih.T, w_hh.T, (b_ih + b_hh).reshape(1, 4 * H)))

        # Linear head: Linear(d_model, dec_in), stored pre-transposed.
        self.w_mlp_t = jax.random.uniform(next(k), (configs.dec_in, H),
                                          jnp.float32, -stdv, stdv).T
        self.b_mlp = jax.random.uniform(next(k), (configs.dec_in,),
                                        jnp.float32, -stdv, stdv
                                        ).reshape(1, -1)

        # init_hidden: randn (e_layers, batch, d_model)
        self.h0 = jax.random.normal(next(k),
                                    (L, configs.batch_size, H), jnp.float32)
        self.c0 = jax.random.normal(next(k),
                                    (L, configs.batch_size, H), jnp.float32)

    def __call__(self, x, enc_mark=None, dec=None, dec_mark=None):
        # x: (B, S, enc_in) batch-first, exactly like the PyTorch module.
        x_tm = jnp.transpose(x, (1, 0, 2)).astype(jnp.float32)   # (S, B, In)
        out_tm, hn, cn = fused_lstm_forward(
            x_tm, self.h0, self.c0, self.layers, self.w_mlp_t, self.b_mlp)
        output = jnp.transpose(out_tm, (1, 0, 2))                # (B, S, dec_in)
        if self.configs.output_attention:
            return output, (hn, cn)
        return output


# ---------------------------------------------------------------------------
if __name__ == "__main__":
    cfg = Configs()
    key = jax.random.PRNGKey(0)
    k_model, k_x = jax.random.split(key)

    model = PallasLSTMModel(cfg, k_model)

    B, S = cfg.batch_size, 8
    x = jax.random.normal(k_x, (B, S, cfg.enc_in), jnp.float32)
    # enc_mark / dec / dec_mark are unused by the reference forward.
    out = model(x, None, None, None)
    jax.block_until_ready(out)

    assert out.shape == (B, S, cfg.dec_in), out.shape
    print("KERNEL_OK")
</pallas_src>

<mosaic_0001>
module attributes {stable_mosaic.version = 11 : i64} {
  func.func @_fused_lstm_mlp_kernel(%arg0: i32, %arg1: memref<8x2x4xf32, #tpu.memory_space<vmem>>, %arg2: memref<2x2x32xf32, #tpu.memory_space<vmem>>, %arg3: memref<2x2x32xf32, #tpu.memory_space<vmem>>, %arg4: memref<4x128xf32, #tpu.memory_space<vmem>>, %arg5: memref<32x128xf32, #tpu.memory_space<vmem>>, %arg6: memref<1x128xf32, #tpu.memory_space<vmem>>, %arg7: memref<32x128xf32, #tpu.memory_space<vmem>>, %arg8: memref<32x128xf32, #tpu.memory_space<vmem>>, %arg9: memref<1x128xf32, #tpu.memory_space<vmem>>, %arg10: memref<32x4xf32, #tpu.memory_space<vmem>>, %arg11: memref<1x4xf32, #tpu.memory_space<vmem>>, %arg12: memref<8x2x4xf32, #tpu.memory_space<vmem>>, %arg13: memref<2x2x32xf32, #tpu.memory_space<vmem>>, %arg14: memref<2x2x32xf32, #tpu.memory_space<vmem>>, %arg15: memref<8x2x128xf32, #tpu.memory_space<vmem>>, %arg16: memref<8x2x32xf32, #tpu.memory_space<vmem>>) attributes {dimension_semantics = [#tpu.dimension_semantics<arbitrary>], iteration_bounds = array<i64: 1>, scalar_prefetch = 0 : i64, scratch_operands = 2 : i64, tpu.core_type = #tpu.core_type<tc>, window_params = [{pipeline_mode = #tpu.pipeline_mode<synchronous>, transform_indices = @transform_0, window_bounds = array<i64: 8, 2, 4>}, {pipeline_mode = #tpu.pipeline_mode<synchronous>, transform_indices = @transform_1, window_bounds = array<i64: 2, 2, 32>}, {pipeline_mode = #tpu.pipeline_mode<synchronous>, transform_indices = @transform_2, window_bounds = array<i64: 2, 2, 32>}, {pipeline_mode = #tpu.pipeline_mode<synchronous>, transform_indices = @transform_3, window_bounds = array<i64: 4, 128>}, {pipeline_mode = #tpu.pipeline_mode<synchronous>, transform_indices = @transform_4, window_bounds = array<i64: 32, 128>}, {pipeline_mode = #tpu.pipeline_mode<synchronous>, transform_indices = @transform_5, window_bounds = array<i64: 1, 128>}, {pipeline_mode = #tpu.pipeline_mode<synchronous>, transform_indices = @transform_6, window_bounds = array<i64: 32, 128>}, {pipeline_mode = #tpu.pipeline_mode<synchronous>, transform_indices = @transform_7, window_bounds = array<i64: 32, 128>}, {pipeline_mode = #tpu.pipeline_mode<synchronous>, transform_indices = @transform_8, window_bounds = array<i64: 1, 128>}, {pipeline_mode = #tpu.pipeline_mode<synchronous>, transform_indices = @transform_9, window_bounds = array<i64: 32, 4>}, {pipeline_mode = #tpu.pipeline_mode<synchronous>, transform_indices = @transform_10, window_bounds = array<i64: 1, 4>}, {pipeline_mode = #tpu.pipeline_mode<synchronous>, transform_indices = @transform_11, window_bounds = array<i64: 8, 2, 4>}, {pipeline_mode = #tpu.pipeline_mode<synchronous>, transform_indices = @transform_12, window_bounds = array<i64: 2, 2, 32>}, {pipeline_mode = #tpu.pipeline_mode<synchronous>, transform_indices = @transform_13, window_bounds = array<i64: 2, 2, 32>}]} {
    %c0 = arith.constant 0 : index
    %c0_0 = arith.constant 0 : index
    %0 = vector.load %arg10[%c0, %c0_0] : memref<32x4xf32, #tpu.memory_space<vmem>>, vector<32x4xf32>
    %c0_1 = arith.constant 0 : index
    %c0_2 = arith.constant 0 : index
    %1 = vector.load %arg11[%c0_1, %c0_2] : memref<1x4xf32, #tpu.memory_space<vmem>>, vector<1x4xf32>
    %c0_3 = arith.constant 0 : index
    %c0_4 = arith.constant 0 : index
    %2 = vector.load %arg4[%c0_3, %c0_4] : memref<4x128xf32, #tpu.memory_space<vmem>>, vector<4x128xf32>
    %c0_5 = arith.constant 0 : index
    %c0_6 = arith.constant 0 : index
    %3 = vector.load %arg5[%c0_5, %c0_6] : memref<32x128xf32, #tpu.memory_space<vmem>>, vector<32x128xf32>
    %c0_7 = arith.constant 0 : index
    %c0_8 = arith.constant 0 : index
    %4 = vector.load %arg6[%c0_7, %c0_8] : memref<1x128xf32, #tpu.memory_space<vmem>>, vector<1x128xf32>
    %c0_9 = arith.constant 0 : index
    %c0_10 = arith.constant 0 : index
    %c0_11 = arith.constant 0 : index
    %5 = vector.load %arg1[%c0_9, %c0_10, %c0_11] : memref<8x2x4xf32, #tpu.memory_space<vmem>>, vector<1x2x4xf32>
    %6 = vector.shape_cast %5 : vector<1x2x4xf32> to vector<2x4xf32>
    %cst = arith.constant dense<0.000000e+00> : vector<2x128xf32>
    %7 = tpu.matmul %6, %2, %cst {dimension_numbers = #tpu.dot_dimension_numbers<[1], [0], [0], [1], [0, 0, 1, 1], [], []>} : vector<2x4xf32>, vector<4x128xf32>, vector<2x128xf32> -> vector<2x128xf32>
    %8 = vector.broadcast %4 : vector<1x128xf32> to vector<2x128xf32>
    %9 = arith.addf %7, %8 : vector<2x128xf32>
    %c0_12 = arith.constant 0 : index
    %c0_13 = arith.constant 0 : index
    %c0_14 = arith.constant 0 : index
    %10 = vector.load %arg15[%c0_12, %c0_13, %c0_14] : memref<8x2x128xf32, #tpu.memory_space<vmem>>, vector<1x2x128xf32>
    %11 = vector.shape_cast %10 : vector<1x2x128xf32> to vector<2x128xf32>
    %12 = vector.shape_cast %9 : vector<2x128xf32> to vector<1x2x128xf32>
    tpu.vector_store %arg15[%c0_12, %c0_13, %c0_14], %12 {strides = array<i32>} : memref<8x2x128xf32, #tpu.memory_space<vmem>>, vector<1x2x128xf32>,
    %c1 = arith.constant 1 : index
    %c0_15 = arith.constant 0 : index
    %c0_16 = arith.constant 0 : index
    %13 = vector.load %arg1[%c1, %c0_15, %c0_16] : memref<8x2x4xf32, #tpu.memory_space<vmem>>, vector<1x2x4xf32>
    %14 = vector.shape_cast %13 : vector<1x2x4xf32> to vector<2x4xf32>
    %cst_17 = arith.constant dense<0.000000e+00> : vector<2x128xf32>
    %15 = tpu.matmul %14, %2, %cst_17 {dimension_numbers = #tpu.dot_dimension_numbers<[1], [0], [0], [1], [0, 0, 1, 1], [], []>} : vector<2x4xf32>, vector<4x128xf32>, vector<2x128xf32> -> vector<2x128xf32>
    %16 = vector.broadcast %4 : vector<1x128xf32> to vector<2x128xf32>
    %17 = arith.addf %15, %16 : vector<2x128xf32>
    %c1_18 = arith.constant 1 : index
    %c0_19 = arith.constant 0 : index
    %c0_20 = arith.constant 0 : index
    %18 = vector.load %arg15[%c1_18, %c0_19, %c0_20] : memref<8x2x128xf32, #tpu.memory_space<vmem>>, vector<1x2x128xf32>
    %19 = vector.shape_cast %18 : vector<1x2x128xf32> to vector<2x128xf32>
    %20 = vector.shape_cast %17 : vector<2x128xf32> to vector<1x2x128xf32>
    tpu.vector_store %arg15[%c1_18, %c0_19, %c0_20], %20 {strides = array<i32>} : memref<8x2x128xf32, #tpu.memory_space<vmem>>, vector<1x2x128xf32>,
    %c2 = arith.constant 2 : index
    %c0_21 = arith.constant 0 : index
    %c0_22 = arith.constant 0 : index
    %21 = vector.load %arg1[%c2, %c0_21, %c0_22] : memref<8x2x4xf32, #tpu.memory_space<vmem>>, vector<1x2x4xf32>
    %22 = vector.shape_cast %21 : vector<1x2x4xf32> to vector<2x4xf32>
    %cst_23 = arith.constant dense<0.000000e+00> : vector<2x128xf32>
    %23 = tpu.matmul %22, %2, %cst_23 {dimension_numbers = #tpu.dot_dimension_numbers<[1], [0], [0], [1], [0, 0, 1, 1], [], []>} : vector<2x4xf32>, vector<4x128xf32>, vector<2x128xf32> -> vector<2x128xf32>
    %24 = vector.broadcast %4 : vector<1x128xf32> to vector<2x128xf32>
    %25 = arith.addf %23, %24 : vector<2x128xf32>
    %c2_24 = arith.constant 2 : index
    %c0_25 = arith.constant 0 : index
    %c0_26 = arith.constant 0 : index
    %26 = vector.load %arg15[%c2_24, %c0_25, %c0_26] : memref<8x2x128xf32, #tpu.memory_space<vmem>>, vector<1x2x128xf32>
    %27 = vector.shape_cast %26 : vector<1x2x128xf32> to vector<2x128xf32>
    %28 = vector.shape_cast %25 : vector<2x128xf32> to vector<1x2x128xf32>
    tpu.vector_store %arg15[%c2_24, %c0_25, %c0_26], %28 {strides = array<i32>} : memref<8x2x128xf32, #tpu.memory_space<vmem>>, vector<1x2x128xf32>,
    %c3 = arith.constant 3 : index
    %c0_27 = arith.constant 0 : index
    %c0_28 = arith.constant 0 : index
    %29 = vector.load %arg1[%c3, %c0_27, %c0_28] : memref<8x2x4xf32, #tpu.memory_space<vmem>>, vector<1x2x4xf32>
    %30 = vector.shape_cast %29 : vector<1x2x4xf32> to vector<2x4xf32>
    %cst_29 = arith.constant dense<0.000000e+00> : vector<2x128xf32>
    %31 = tpu.matmul %30, %2, %cst_29 {dimension_numbers = #tpu.dot_dimension_numbers<[1], [0], [0], [1], [0, 0, 1, 1], [], []>} : vector<2x4xf32>, vector<4x128xf32>, vector<2x128xf32> -> vector<2x128xf32>
    %32 = vector.broadcast %4 : vector<1x128xf32> to vector<2x128xf32>
    %33 = arith.addf %31, %32 : vector<2x128xf32>
    %c3_30 = arith.constant 3 : index
    %c0_31 = arith.constant 0 : index
    %c0_32 = arith.constant 0 : index
    %34 = vector.load %arg15[%c3_30, %c0_31, %c0_32] : memref<8x2x128xf32, #tpu.memory_space<vmem>>, vector<1x2x128xf32>
    %35 = vector.shape_cast %34 : vector<1x2x128xf32> to vector<2x128xf32>
    %36 = vector.shape_cast %33 : vector<2x128xf32> to vector<1x2x128xf32>
    tpu.vector_store %arg15[%c3_30, %c0_31, %c0_32], %36 {strides = array<i32>} : memref<8x2x128xf32, #tpu.memory_space<vmem>>, vector<1x2x128xf32>,
    %c4 = arith.constant 4 : index
    %c0_33 = arith.constant 0 : index
    %c0_34 = arith.constant 0 : index
    %37 = vector.load %arg1[%c4, %c0_33, %c0_34] : memref<8x2x4xf32, #tpu.memory_space<vmem>>, vector<1x2x4xf32>
    %38 = vector.shape_cast %37 : vector<1x2x4xf32> to vector<2x4xf32>
    %cst_35 = arith.constant dense<0.000000e+00> : vector<2x128xf32>
    %39 = tpu.matmul %38, %2, %cst_35 {dimension_numbers = #tpu.dot_dimension_numbers<[1], [0], [0], [1], [0, 0, 1, 1], [], []>} : vector<2x4xf32>, vector<4x128xf32>, vector<2x128xf32> -> vector<2x128xf32>
    %40 = vector.broadcast %4 : vector<1x128xf32> to vector<2x128xf32>
    %41 = arith.addf %39, %40 : vector<2x128xf32>
    %c4_36 = arith.constant 4 : index
    %c0_37 = arith.constant 0 : index
    %c0_38 = arith.constant 0 : index
    %42 = vector.load %arg15[%c4_36, %c0_37, %c0_38] : memref<8x2x128xf32, #tpu.memory_space<vmem>>, vector<1x2x128xf32>
    %43 = vector.shape_cast %42 : vector<1x2x128xf32> to vector<2x128xf32>
    %44 = vector.shape_cast %41 : vector<2x128xf32> to vector<1x2x128xf32>
    tpu.vector_store %arg15[%c4_36, %c0_37, %c0_38], %44 {strides = array<i32>} : memref<8x2x128xf32, #tpu.memory_space<vmem>>, vector<1x2x128xf32>,
    %c5 = arith.constant 5 : index
    %c0_39 = arith.constant 0 : index
    %c0_40 = arith.constant 0 : index
    %45 = vector.load %arg1[%c5, %c0_39, %c0_40] : memref<8x2x4xf32, #tpu.memory_space<vmem>>, vector<1x2x4xf32>
    %46 = vector.shape_cast %45 : vector<1x2x4xf32> to vector<2x4xf32>
    %cst_41 = arith.constant dense<0.000000e+00> : vector<2x128xf32>
    %47 = tpu.matmul %46, %2, %cst_41 {dimension_numbers = #tpu.dot_dimension_numbers<[1], [0], [0], [1], [0, 0, 1, 1], [], []>} : vector<2x4xf32>, vector<4x128xf32>, vector<2x128xf32> -> vector<2x128xf32>
    %48 = vector.broadcast %4 : vector<1x128xf32> to vector<2x128xf32>
    %49 = arith.addf %47, %48 : vector<2x128xf32>
    %c5_42 = arith.constant 5 : index
    %c0_43 = arith.constant 0 : index
    %c0_44 = arith.constant 0 : index
    %50 = vector.load %arg15[%c5_42, %c0_43, %c0_44] : memref<8x2x128xf32, #tpu.memory_space<vmem>>, vector<1x2x128xf32>
    %51 = vector.shape_cast %50 : vector<1x2x128xf32> to vector<2x128xf32>
    %52 = vector.shape_cast %49 : vector<2x128xf32> to vector<1x2x128xf32>
    tpu.vector_store %arg15[%c5_42, %c0_43, %c0_44], %52 {strides = array<i32>} : memref<8x2x128xf32, #tpu.memory_space<vmem>>, vector<1x2x128xf32>,
    %c6 = arith.constant 6 : index
    %c0_45 = arith.constant 0 : index
    %c0_46 = arith.constant 0 : index
    %53 = vector.load %arg1[%c6, %c0_45, %c0_46] : memref<8x2x4xf32, #tpu.memory_space<vmem>>, vector<1x2x4xf32>
    %54 = vector.shape_cast %53 : vector<1x2x4xf32> to vector<2x4xf32>
    %cst_47 = arith.constant dense<0.000000e+00> : vector<2x128xf32>
    %55 = tpu.matmul %54, %2, %cst_47 {dimension_numbers = #tpu.dot_dimension_numbers<[1], [0], [0], [1], [0, 0, 1, 1], [], []>} : vector<2x4xf32>, vector<4x128xf32>, vector<2x128xf32> -> vector<2x128xf32>
    %56 = vector.broadcast %4 : vector<1x128xf32> to vector<2x128xf32>
    %57 = arith.addf %55, %56 : vector<2x128xf32>
    %c6_48 = arith.constant 6 : index
    %c0_49 = arith.constant 0 : index
    %c0_50 = arith.constant 0 : index
    %58 = vector.load %arg15[%c6_48, %c0_49, %c0_50] : memref<8x2x128xf32, #tpu.memory_space<vmem>>, vector<1x2x128xf32>
    %59 = vector.shape_cast %58 : vector<1x2x128xf32> to vector<2x128xf32>
    %60 = vector.shape_cast %57 : vector<2x128xf32> to vector<1x2x128xf32>
    tpu.vector_store %arg15[%c6_48, %c0_49, %c0_50], %60 {strides = array<i32>} : memref<8x2x128xf32, #tpu.memory_space<vmem>>, vector<1x2x128xf32>,
    %c7 = arith.constant 7 : index
    %c0_51 = arith.constant 0 : index
    %c0_52 = arith.constant 0 : index
    %61 = vector.load %arg1[%c7, %c0_51, %c0_52] : memref<8x2x4xf32, #tpu.memory_space<vmem>>, vector<1x2x4xf32>
    %62 = vector.shape_cast %61 : vector<1x2x4xf32> to vector<2x4xf32>
    %cst_53 = arith.constant dense<0.000000e+00> : vector<2x128xf32>
    %63 = tpu.matmul %62, %2, %cst_53 {dimension_numbers = #tpu.dot_dimension_numbers<[1], [0], [0], [1], [0, 0, 1, 1], [], []>} : vector<2x4xf32>, vector<4x128xf32>, vector<2x128xf32> -> vector<2x128xf32>
    %64 = vector.broadcast %4 : vector<1x128xf32> to vector<2x128xf32>
    %65 = arith.addf %63, %64 : vector<2x128xf32>
    %c7_54 = arith.constant 7 : index
    %c0_55 = arith.constant 0 : index
    %c0_56 = arith.constant 0 : index
    %66 = vector.load %arg15[%c7_54, %c0_55, %c0_56] : memref<8x2x128xf32, #tpu.memory_space<vmem>>, vector<1x2x128xf32>
    %67 = vector.shape_cast %66 : vector<1x2x128xf32> to vector<2x128xf32>
    %68 = vector.shape_cast %65 : vector<2x128xf32> to vector<1x2x128xf32>
    tpu.vector_store %arg15[%c7_54, %c0_55, %c0_56], %68 {strides = array<i32>} : memref<8x2x128xf32, #tpu.memory_space<vmem>>, vector<1x2x128xf32>,
    %c0_57 = arith.constant 0 : index
    %c0_58 = arith.constant 0 : index
    %c0_59 = arith.constant 0 : index
    %69 = vector.load %arg2[%c0_57, %c0_58, %c0_59] : memref<2x2x32xf32, #tpu.memory_space<vmem>>, vector<1x2x32xf32>
    %70 = vector.shape_cast %69 : vector<1x2x32xf32> to vector<2x32xf32>
    %c0_60 = arith.constant 0 : index
    %c0_61 = arith.constant 0 : index
    %c0_62 = arith.constant 0 : index
    %71 = vector.load %arg3[%c0_60, %c0_61, %c0_62] : memref<2x2x32xf32, #tpu.memory_space<vmem>>, vector<1x2x32xf32>
    %72 = vector.shape_cast %71 : vector<1x2x32xf32> to vector<2x32xf32>
    %c0_63 = arith.constant 0 : index
    %c0_64 = arith.constant 0 : index
    %c0_65 = arith.constant 0 : index
    %73 = vector.load %arg15[%c0_63, %c0_64, %c0_65] : memref<8x2x128xf32, #tpu.memory_space<vmem>>, vector<1x2x128xf32>
    %74 = vector.shape_cast %73 : vector<1x2x128xf32> to vector<2x128xf32>
    %cst_66 = arith.constant dense<0.000000e+00> : vector<2x128xf32>
    %75 = tpu.matmul %70, %3, %cst_66 {dimension_numbers = #tpu.dot_dimension_numbers<[1], [0], [0], [1], [0, 0, 1, 1], [], []>} : vector<2x32xf32>, vector<32x128xf32>, vector<2x128xf32> -> vector<2x128xf32>
    %76 = arith.addf %74, %75 : vector<2x128xf32>
    %77 = arith.negf %76 : vector<2x128xf32>
    %78 = math.exp %77 : vector<2x128xf32>
    %cst_67 = arith.constant 1.000000e+00 : f32
    %79 = vector.broadcast %cst_67 : f32 to vector<2x128xf32>
    %80 = arith.addf %79, %78 : vector<2x128xf32>
    %81 = arith.divf %79, %80 : vector<2x128xf32>
    %82 = math.tanh %76 : vector<2x128xf32>
    %83 = vector.extract_strided_slice %81 {offsets = [0, 0], sizes = [2, 32], strides = [1, 1]} : vector<2x128xf32> to vector<2x32xf32>
    %84 = vector.extract_strided_slice %81 {offsets = [0, 32], sizes = [2, 32], strides = [1, 1]} : vector<2x128xf32> to vector<2x32xf32>
    %85 = vector.extract_strided_slice %82 {offsets = [0, 64], sizes = [2, 32], strides = [1, 1]} : vector<2x128xf32> to vector<2x32xf32>
    %86 = vector.extract_strided_slice %81 {offsets = [0, 96], sizes = [2, 32], strides = [1, 1]} : vector<2x128xf32> to vector<2x32xf32>
    %87 = arith.mulf %84, %72 : vector<2x32xf32>
    %88 = arith.mulf %83, %85 : vector<2x32xf32>
    %89 = arith.addf %87, %88 : vector<2x32xf32>
    %90 = math.tanh %89 : vector<2x32xf32>
    %91 = arith.mulf %86, %90 : vector<2x32xf32>
    %c0_68 = arith.constant 0 : index
    %c0_69 = arith.constant 0 : index
    %c0_70 = arith.constant 0 : index
    %92 = vector.load %arg16[%c0_68, %c0_69, %c0_70] : memref<8x2x32xf32, #tpu.memory_space<vmem>>, vector<1x2x32xf32>
    %93 = vector.shape_cast %92 : vector<1x2x32xf32> to vector<2x32xf32>
    %94 = vector.shape_cast %91 : vector<2x32xf32> to vector<1x2x32xf32>
    tpu.vector_store %arg16[%c0_68, %c0_69, %c0_70], %94 {strides = array<i32>} : memref<8x2x32xf32, #tpu.memory_space<vmem>>, vector<1x2x32xf32>,
    %c1_71 = arith.constant 1 : index
    %c0_72 = arith.constant 0 : index
    %c0_73 = arith.constant 0 : index
    %95 = vector.load %arg15[%c1_71, %c0_72, %c0_73] : memref<8x2x128xf32, #tpu.memory_space<vmem>>, vector<1x2x128xf32>
    %96 = vector.shape_cast %95 : vector<1x2x128xf32> to vector<2x128xf32>
    %cst_74 = arith.constant dense<0.000000e+00> : vector<2x128xf32>
    %97 = tpu.matmul %91, %3, %cst_74 {dimension_numbers = #tpu.dot_dimension_numbers<[1], [0], [0], [1], [0, 0, 1, 1], [], []>} : vector<2x32xf32>, vector<32x128xf32>, vector<2x128xf32> -> vector<2x128xf32>
    %98 = arith.addf %96, %97 : vector<2x128xf32>
    %99 = arith.negf %98 : vector<2x128xf32>
    %100 = math.exp %99 : vector<2x128xf32>
    %cst_75 = arith.constant 1.000000e+00 : f32
    %101 = vector.broadcast %cst_75 : f32 to vector<2x128xf32>
    %102 = arith.addf %101, %100 : vector<2x128xf32>
    %103 = arith.divf %101, %102 : vector<2x128xf32>
    %104 = math.tanh %98 : vector<2x128xf32>
    %105 = vector.extract_strided_slice %103 {offsets = [0, 0], sizes = [2, 32], strides = [1, 1]} : vector<2x128xf32> to vector<2x32xf32>
    %106 = vector.extract_strided_slice %103 {offsets = [0, 32], sizes = [2, 32], strides = [1, 1]} : vector<2x128xf32> to vector<2x32xf32>
    %107 = vector.extract_strided_slice %104 {offsets = [0, 64], sizes = [2, 32], strides = [1, 1]} : vector<2x128xf32> to vector<2x32xf32>
    %108 = vector.extract_strided_slice %103 {offsets = [0, 96], sizes = [2, 32], strides = [1, 1]} : vector<2x128xf32> to vector<2x32xf32>
    %109 = arith.mulf %106, %89 : vector<2x32xf32>
    %110 = arith.mulf %105, %107 : vector<2x32xf32>
    %111 = arith.addf %109, %110 : vector<2x32xf32>
    %112 = math.tanh %111 : vector<2x32xf32>
    %113 = arith.mulf %108, %112 : vector<2x32xf32>
    %c1_76 = arith.constant 1 : index
    %c0_77 = arith.constant 0 : index
    %c0_78 = arith.constant 0 : index
    %114 = vector.load %arg16[%c1_76, %c0_77, %c0_78] : memref<8x2x32xf32, #tpu.memory_space<vmem>>, vector<1x2x32xf32>
    %115 = vector.shape_cast %114 : vector<1x2x32xf32> to vector<2x32xf32>
    %116 = vector.shape_cast %113 : vector<2x32xf32> to vector<1x2x32xf32>
    tpu.vector_store %arg16[%c1_76, %c0_77, %c0_78], %116 {strides = array<i32>} : memref<8x2x32xf32, #tpu.memory_space<vmem>>, vector<1x2x32xf32>,
    %c2_79 = arith.constant 2 : index
    %c0_80 = arith.constant 0 : index
    %c0_81 = arith.constant 0 : index
    %117 = vector.load %arg15[%c2_79, %c0_80, %c0_81] : memref<8x2x128xf32, #tpu.memory_space<vmem>>, vector<1x2x128xf32>
    %118 = vector.shape_cast %117 : vector<1x2x128xf32> to vector<2x128xf32>
    %cst_82 = arith.constant dense<0.000000e+00> : vector<2x128xf32>
    %119 = tpu.matmul %113, %3, %cst_82 {dimension_numbers = #tpu.dot_dimension_numbers<[1], [0], [0], [1], [0, 0, 1, 1], [], []>} : vector<2x32xf32>, vector<32x128xf32>, vector<2x128xf32> -> vector<2x128xf32>
    %120 = arith.addf %118, %119 : vector<2x128xf32>
    %121 = arith.negf %120 : vector<2x128xf32>
    %122 = math.exp %121 : vector<2x128xf32>
    %cst_83 = arith.constant 1.000000e+00 : f32
    %123 = vector.broadcast %cst_83 : f32 to vector<2x128xf32>
    %124 = arith.addf %123, %122 : vector<2x128xf32>
    %125 = arith.divf %123, %124 : vector<2x128xf32>
    %126 = math.tanh %120 : vector<2x128xf32>
    %127 = vector.extract_strided_slice %125 {offsets = [0, 0], sizes = [2, 32], strides = [1, 1]} : vector<2x128xf32> to vector<2x32xf32>
    %128 = vector.extract_strided_slice %125 {offsets = [0, 32], sizes = [2, 32], strides = [1, 1]} : vector<2x128xf32> to vector<2x32xf32>
    %129 = vector.extract_strided_slice %126 {offsets = [0, 64], sizes = [2, 32], strides = [1, 1]} : vector<2x128xf32> to vector<2x32xf32>
    %130 = vector.extract_strided_slice %125 {offsets = [0, 96], sizes = [2, 32], strides = [1, 1]} : vector<2x128xf32> to vector<2x32xf32>
    %131 = arith.mulf %128, %111 : vector<2x32xf32>
    %132 = arith.mulf %127, %129 : vector<2x32xf32>
    %133 = arith.addf %131, %132 : vector<2x32xf32>
    %134 = math.tanh %133 : vector<2x32xf32>
    %135 = arith.mulf %130, %134 : vector<2x32xf32>
    %c2_84 = arith.constant 2 : index
    %c0_85 = arith.constant 0 : index
    %c0_86 = arith.constant 0 : index
    %136 = vector.load %arg16[%c2_84, %c0_85, %c0_86] : memref<8x2x32xf32, #tpu.memory_space<vmem>>, vector<1x2x32xf32>
    %137 = vector.shape_cast %136 : vector<1x2x32xf32> to vector<2x32xf32>
    %138 = vector.shape_cast %135 : vector<2x32xf32> to vector<1x2x32xf32>
    tpu.vector_store %arg16[%c2_84, %c0_85, %c0_86], %138 {strides = array<i32>} : memref<8x2x32xf32, #tpu.memory_space<vmem>>, vector<1x2x32xf32>,
    %c3_87 = arith.constant 3 : index
    %c0_88 = arith.constant 0 : index
    %c0_89 = arith.constant 0 : index
    %139 = vector.load %arg15[%c3_87, %c0_88, %c0_89] : memref<8x2x128xf32, #tpu.memory_space<vmem>>, vector<1x2x128xf32>
    %140 = vector.shape_cast %139 : vector<1x2x128xf32> to vector<2x128xf32>
    %cst_90 = arith.constant dense<0.000000e+00> : vector<2x128xf32>
    %141 = tpu.matmul %135, %3, %cst_90 {dimension_numbers = #tpu.dot_dimension_numbers<[1], [0], [0], [1], [0, 0, 1, 1], [], []>} : vector<2x32xf32>, vector<32x128xf32>, vector<2x128xf32> -> vector<2x128xf32>
    %142 = arith.addf %140, %141 : vector<2x128xf32>
    %143 = arith.negf %142 : vector<2x128xf32>
    %144 = math.exp %143 : vector<2x128xf32>
    %cst_91 = arith.constant 1.000000e+00 : f32
    %145 = vector.broadcast %cst_91 : f32 to vector<2x128xf32>
    %146 = arith.addf %145, %144 : vector<2x128xf32>
    %147 = arith.divf %145, %146 : vector<2x128xf32>
    %148 = math.tanh %142 : vector<2x128xf32>
    %149 = vector.extract_strided_slice %147 {offsets = [0, 0], sizes = [2, 32], strides = [1, 1]} : vector<2x128xf32> to vector<2x32xf32>
    %150 = vector.extract_strided_slice %147 {offsets = [0, 32], sizes = [2, 32], strides = [1, 1]} : vector<2x128xf32> to vector<2x32xf32>
    %151 = vector.extract_strided_slice %148 {offsets = [0, 64], sizes = [2, 32], strides = [1, 1]} : vector<2x128xf32> to vector<2x32xf32>
    %152 = vector.extract_strided_slice %147 {offsets = [0, 96], sizes = [2, 32], strides = [1, 1]} : vector<2x128xf32> to vector<2x32xf32>
    %153 = arith.mulf %150, %133 : vector<2x32xf32>
    %154 = arith.mulf %149, %151 : vector<2x32xf32>
    %155 = arith.addf %153, %154 : vector<2x32xf32>
    %156 = math.tanh %155 : vector<2x32xf32>
    %157 = arith.mulf %152, %156 : vector<2x32xf32>
    %c3_92 = arith.constant 3 : index
    %c0_93 = arith.constant 0 : index
    %c0_94 = arith.constant 0 : index
    %158 = vector.load %arg16[%c3_92, %c0_93, %c0_94] : memref<8x2x32xf32, #tpu.memory_space<vmem>>, vector<1x2x32xf32>
    %159 = vector.shape_cast %158 : vector<1x2x32xf32> to vector<2x32xf32>
    %160 = vector.shape_cast %157 : vector<2x32xf32> to vector<1x2x32xf32>
    tpu.vector_store %arg16[%c3_92, %c0_93, %c0_94], %160 {strides = array<i32>} : memref<8x2x32xf32, #tpu.memory_space<vmem>>, vector<1x2x32xf32>,
    %c4_95 = arith.constant 4 : index
    %c0_96 = arith.constant 0 : index
    %c0_97 = arith.constant 0 : index
    %161 = vector.load %arg15[%c4_95, %c0_96, %c0_97] : memref<8x2x128xf32, #tpu.memory_space<vmem>>, vector<1x2x128xf32>
    %162 = vector.shape_cast %161 : vector<1x2x128xf32> to vector<2x128xf32>
    %cst_98 = arith.constant dense<0.000000e+00> : vector<2x128xf32>
    %163 = tpu.matmul %157, %3, %cst_98 {dimension_numbers = #tpu.dot_dimension_numbers<[1], [0], [0], [1], [0, 0, 1, 1], [], []>} : vector<2x32xf32>, vector<32x128xf32>, vector<2x128xf32> -> vector<2x128xf32>
    %164 = arith.addf %162, %163 : vector<2x128xf32>
    %165 = arith.negf %164 : vector<2x128xf32>
    %166 = math.exp %165 : vector<2x128xf32>
    %cst_99 = arith.constant 1.000000e+00 : f32
    %167 = vector.broadcast %cst_99 : f32 to vector<2x128xf32>
    %168 = arith.addf %167, %166 : vector<2x128xf32>
    %169 = arith.divf %167, %168 : vector<2x128xf32>
    %170 = math.tanh %164 : vector<2x128xf32>
    %171 = vector.extract_strided_slice %169 {offsets = [0, 0], sizes = [2, 32], strides = [1, 1]} : vector<2x128xf32> to vector<2x32xf32>
    %172 = vector.extract_strided_slice %169 {offsets = [0, 32], sizes = [2, 32], strides = [1, 1]} : vector<2x128xf32> to vector<2x32xf32>
    %173 = vector.extract_strided_slice %170 {offsets = [0, 64], sizes = [2, 32], strides = [1, 1]} : vector<2x128xf32> to vector<2x32xf32>
    %174 = vector.extract_strided_slice %169 {offsets = [0, 96], sizes = [2, 32], strides = [1, 1]} : vector<2x128xf32> to vector<2x32xf32>
    %175 = arith.mulf %172, %155 : vector<2x32xf32>
    %176 = arith.mulf %171, %173 : vector<2x32xf32>
    %177 = arith.addf %175, %176 : vector<2x32xf32>
    %178 = math.tanh %177 : vector<2x32xf32>
    %179 = arith.mulf %174, %178 : vector<2x32xf32>
    %c4_100 = arith.constant 4 : index
    %c0_101 = arith.constant 0 : index
    %c0_102 = arith.constant 0 : index
    %180 = vector.load %arg16[%c4_100, %c0_101, %c0_102] : memref<8x2x32xf32, #tpu.memory_space<vmem>>, vector<1x2x32xf32>
    %181 = vector.shape_cast %180 : vector<1x2x32xf32> to vector<2x32xf32>
    %182 = vector.shape_cast %179 : vector<2x32xf32> to vector<1x2x32xf32>
    tpu.vector_store %arg16[%c4_100, %c0_101, %c0_102], %182 {strides = array<i32>} : memref<8x2x32xf32, #tpu.memory_space<vmem>>, vector<1x2x32xf32>,
    %c5_103 = arith.constant 5 : index
    %c0_104 = arith.constant 0 : index
    %c0_105 = arith.constant 0 : index
    %183 = vector.load %arg15[%c5_103, %c0_104, %c0_105] : memref<8x2x128xf32, #tpu.memory_space<vmem>>, vector<1x2x128xf32>
    %184 = vector.shape_cast %183 : vector<1x2x128xf32> to vector<2x128xf32>
    %cst_106 = arith.constant dense<0.000000e+00> : vector<2x128xf32>
    %185 = tpu.matmul %179, %3, %cst_106 {dimension_numbers = #tpu.dot_dimension_numbers<[1], [0], [0], [1], [0, 0, 1, 1], [], []>} : vector<2x32xf32>, vector<32x128xf32>, vector<2x128xf32> -> vector<2x128xf32>
    %186 = arith.addf %184, %185 : vector<2x128xf32>
    %187 = arith.negf %186 : vector<2x128xf32>
    %188 = math.exp %187 : vector<2x128xf32>
    %cst_107 = arith.constant 1.000000e+00 : f32
    %189 = vector.broadcast %cst_107 : f32 to vector<2x128xf32>
    %190 = arith.addf %189, %188 : vector<2x128xf32>
    %191 = arith.divf %189, %190 : vector<2x128xf32>
    %192 = math.tanh %186 : vector<2x128xf32>
    %193 = vector.extract_strided_slice %191 {offsets = [0, 0], sizes = [2, 32], strides = [1, 1]} : vector<2x128xf32> to vector<2x32xf32>
    %194 = vector.extract_strided_slice %191 {offsets = [0, 32], sizes = [2, 32], strides = [1, 1]} : vector<2x128xf32> to vector<2x32xf32>
    %195 = vector.extract_strided_slice %192 {offsets = [0, 64], sizes = [2, 32], strides = [1, 1]} : vector<2x128xf32> to vector<2x32xf32>
    %196 = vector.extract_strided_slice %191 {offsets = [0, 96], sizes = [2, 32], strides = [1, 1]} : vector<2x128xf32> to vector<2x32xf32>
    %197 = arith.mulf %194, %177 : vector<2x32xf32>
    %198 = arith.mulf %193, %195 : vector<2x32xf32>
    %199 = arith.addf %197, %198 : vector<2x32xf32>
    %200 = math.tanh %199 : vector<2x32xf32>
    %201 = arith.mulf %196, %200 : vector<2x32xf32>
    %c5_108 = arith.constant 5 : index
    %c0_109 = arith.constant 0 : index
    %c0_110 = arith.constant 0 : index
    %202 = vector.load %arg16[%c5_108, %c0_109, %c0_110] : memref<8x2x32xf32, #tpu.memory_space<vmem>>, vector<1x2x32xf32>
    %203 = vector.shape_cast %202 : vector<1x2x32xf32> to vector<2x32xf32>
    %204 = vector.shape_cast %201 : vector<2x32xf32> to vector<1x2x32xf32>
    tpu.vector_store %arg16[%c5_108, %c0_109, %c0_110], %204 {strides = array<i32>} : memref<8x2x32xf32, #tpu.memory_space<vmem>>, vector<1x2x32xf32>,
    %c6_111 = arith.constant 6 : index
    %c0_112 = arith.constant 0 : index
    %c0_113 = arith.constant 0 : index
    %205 = vector.load %arg15[%c6_111, %c0_112, %c0_113] : memref<8x2x128xf32, #tpu.memory_space<vmem>>, vector<1x2x128xf32>
    %206 = vector.shape_cast %205 : vector<1x2x128xf32> to vector<2x128xf32>
    %cst_114 = arith.constant dense<0.000000e+00> : vector<2x128xf32>
    %207 = tpu.matmul %201, %3, %cst_114 {dimension_numbers = #tpu.dot_dimension_numbers<[1], [0], [0], [1], [0, 0, 1, 1], [], []>} : vector<2x32xf32>, vector<32x128xf32>, vector<2x128xf32> -> vector<2x128xf32>
    %208 = arith.addf %206, %207 : vector<2x128xf32>
    %209 = arith.negf %208 : vector<2x128xf32>
    %210 = math.exp %209 : vector<2x128xf32>
    %cst_115 = arith.constant 1.000000e+00 : f32
    %211 = vector.broadcast %cst_115 : f32 to vector<2x128xf32>
    %212 = arith.addf %211, %210 : vector<2x128xf32>
    %213 = arith.divf %211, %212 : vector<2x128xf32>
    %214 = math.tanh %208 : vector<2x128xf32>
    %215 = vector.extract_strided_slice %213 {offsets = [0, 0], sizes = [2, 32], strides = [1, 1]} : vector<2x128xf32> to vector<2x32xf32>
    %216 = vector.extract_strided_slice %213 {offsets = [0, 32], sizes = [2, 32], strides = [1, 1]} : vector<2x128xf32> to vector<2x32xf32>
    %217 = vector.extract_strided_slice %214 {offsets = [0, 64], sizes = [2, 32], strides = [1, 1]} : vector<2x128xf32> to vector<2x32xf32>
    %218 = vector.extract_strided_slice %213 {offsets = [0, 96], sizes = [2, 32], strides = [1, 1]} : vector<2x128xf32> to vector<2x32xf32>
    %219 = arith.mulf %216, %199 : vector<2x32xf32>
    %220 = arith.mulf %215, %217 : vector<2x32xf32>
    %221 = arith.addf %219, %220 : vector<2x32xf32>
    %222 = math.tanh %221 : vector<2x32xf32>
    %223 = arith.mulf %218, %222 : vector<2x32xf32>
    %c6_116 = arith.constant 6 : index
    %c0_117 = arith.constant 0 : index
    %c0_118 = arith.constant 0 : index
    %224 = vector.load %arg16[%c6_116, %c0_117, %c0_118] : memref<8x2x32xf32, #tpu.memory_space<vmem>>, vector<1x2x32xf32>
    %225 = vector.shape_cast %224 : vector<1x2x32xf32> to vector<2x32xf32>
    %226 = vector.shape_cast %223 : vector<2x32xf32> to vector<1x2x32xf32>
    tpu.vector_store %arg16[%c6_116, %c0_117, %c0_118], %226 {strides = array<i32>} : memref<8x2x32xf32, #tpu.memory_space<vmem>>, vector<1x2x32xf32>,
    %c7_119 = arith.constant 7 : index
    %c0_120 = arith.constant 0 : index
    %c0_121 = arith.constant 0 : index
    %227 = vector.load %arg15[%c7_119, %c0_120, %c0_121] : memref<8x2x128xf32, #tpu.memory_space<vmem>>, vector<1x2x128xf32>
    %228 = vector.shape_cast %227 : vector<1x2x128xf32> to vector<2x128xf32>
    %cst_122 = arith.constant dense<0.000000e+00> : vector<2x128xf32>
    %229 = tpu.matmul %223, %3, %cst_122 {dimension_numbers = #tpu.dot_dimension_numbers<[1], [0], [0], [1], [0, 0, 1, 1], [], []>} : vector<2x32xf32>, vector<32x128xf32>, vector<2x128xf32> -> vector<2x128xf32>
    %230 = arith.addf %228, %229 : vector<2x128xf32>
    %231 = arith.negf %230 : vector<2x128xf32>
    %232 = math.exp %231 : vector<2x128xf32>
    %cst_123 = arith.constant 1.000000e+00 : f32
    %233 = vector.broadcast %cst_123 : f32 to vector<2x128xf32>
    %234 = arith.addf %233, %232 : vector<2x128xf32>
    %235 = arith.divf %233, %234 : vector<2x128xf32>
    %236 = math.tanh %230 : vector<2x128xf32>
    %237 = vector.extract_strided_slice %235 {offsets = [0, 0], sizes = [2, 32], strides = [1, 1]} : vector<2x128xf32> to vector<2x32xf32>
    %238 = vector.extract_strided_slice %235 {offsets = [0, 32], sizes = [2, 32], strides = [1, 1]} : vector<2x128xf32> to vector<2x32xf32>
    %239 = vector.extract_strided_slice %236 {offsets = [0, 64], sizes = [2, 32], strides = [1, 1]} : vector<2x128xf32> to vector<2x32xf32>
    %240 = vector.extract_strided_slice %235 {offsets = [0, 96], sizes = [2, 32], strides = [1, 1]} : vector<2x128xf32> to vector<2x32xf32>
    %241 = arith.mulf %238, %221 : vector<2x32xf32>
    %242 = arith.mulf %237, %239 : vector<2x32xf32>
    %243 = arith.addf %241, %242 : vector<2x32xf32>
    %244 = math.tanh %243 : vector<2x32xf32>
    %245 = arith.mulf %240, %244 : vector<2x32xf32>
    %c7_124 = arith.constant 7 : index
    %c0_125 = arith.constant 0 : index
    %c0_126 = arith.constant 0 : index
    %246 = vector.load %arg16[%c7_124, %c0_125, %c0_126] : memref<8x2x32xf32, #tpu.memory_space<vmem>>, vector<1x2x32xf32>
    %247 = vector.shape_cast %246 : vector<1x2x32xf32> to vector<2x32xf32>
    %248 = vector.shape_cast %245 : vector<2x32xf32> to vector<1x2x32xf32>
    tpu.vector_store %arg16[%c7_124, %c0_125, %c0_126], %248 {strides = array<i32>} : memref<8x2x32xf32, #tpu.memory_space<vmem>>, vector<1x2x32xf32>,
    %c0_127 = arith.constant 0 : index
    %c0_128 = arith.constant 0 : index
    %c0_129 = arith.constant 0 : index
    %249 = vector.load %arg13[%c0_127, %c0_128, %c0_129] : memref<2x2x32xf32, #tpu.memory_space<vmem>>, vector<1x2x32xf32>
    %250 = vector.shape_cast %249 : vector<1x2x32xf32> to vector<2x32xf32>
    %251 = vector.shape_cast %245 : vector<2x32xf32> to vector<1x2x32xf32>
    tpu.vector_store %arg13[%c0_127, %c0_128, %c0_129], %251 {strides = array<i32>} : memref<2x2x32xf32, #tpu.memory_space<vmem>>, vector<1x2x32xf32>,
    %c0_130 = arith.constant 0 : index
    %c0_131 = arith.constant 0 : index
    %c0_132 = arith.constant 0 : index
    %252 = vector.load %arg14[%c0_130, %c0_131, %c0_132] : memref<2x2x32xf32, #tpu.memory_space<vmem>>, vector<1x2x32xf32>
    %253 = vector.shape_cast %252 : vector<1x2x32xf32> to vector<2x32xf32>
    %254 = vector.shape_cast %243 : vector<2x32xf32> to vector<1x2x32xf32>
    tpu.vector_store %arg14[%c0_130, %c0_131, %c0_132], %254 {strides = array<i32>} : memref<2x2x32xf32, #tpu.memory_space<vmem>>, vector<1x2x32xf32>,
    %c0_133 = arith.constant 0 : index
    %c0_134 = arith.constant 0 : index
    %255 = vector.load %arg7[%c0_133, %c0_134] : memref<32x128xf32, #tpu.memory_space<vmem>>, vector<32x128xf32>
    %c0_135 = arith.constant 0 : index
    %c0_136 = arith.constant 0 : index
    %256 = vector.load %arg8[%c0_135, %c0_136] : memref<32x128xf32, #tpu.memory_space<vmem>>, vector<32x128xf32>
    %c0_137 = arith.constant 0 : index
    %c0_138 = arith.constant 0 : index
    %257 = vector.load %arg9[%c0_137, %c0_138] : memref<1x128xf32, #tpu.memory_space<vmem>>, vector<1x128xf32>
    %c0_139 = arith.constant 0 : index
    %c0_140 = arith.constant 0 : index
    %c0_141 = arith.constant 0 : index
    %258 = vector.load %arg16[%c0_139, %c0_140, %c0_141] : memref<8x2x32xf32, #tpu.memory_space<vmem>>, vector<1x2x32xf32>
    %259 = vector.shape_cast %258 : vector<1x2x32xf32> to vector<2x32xf32>
    %cst_142 = arith.constant dense<0.000000e+00> : vector<2x128xf32>
    %260 = tpu.matmul %259, %255, %cst_142 {dimension_numbers = #tpu.dot_dimension_numbers<[1], [0], [0], [1], [0, 0, 1, 1], [], []>} : vector<2x32xf32>, vector<32x128xf32>, vector<2x128xf32> -> vector<2x128xf32>
    %261 = vector.broadcast %257 : vector<1x128xf32> to vector<2x128xf32>
    %262 = arith.addf %260, %261 : vector<2x128xf32>
    %c0_143 = arith.constant 0 : index
    %c0_144 = arith.constant 0 : index
    %c0_145 = arith.constant 0 : index
    %263 = vector.load %arg15[%c0_143, %c0_144, %c0_145] : memref<8x2x128xf32, #tpu.memory_space<vmem>>, vector<1x2x128xf32>
    %264 = vector.shape_cast %263 : vector<1x2x128xf32> to vector<2x128xf32>
    %265 = vector.shape_cast %262 : vector<2x128xf32> to vector<1x2x128xf32>
    tpu.vector_store %arg15[%c0_143, %c0_144, %c0_145], %265 {strides = array<i32>} : memref<8x2x128xf32, #tpu.memory_space<vmem>>, vector<1x2x128xf32>,
    %c1_146 = arith.constant 1 : index
    %c0_147 = arith.constant 0 : index
    %c0_148 = arith.constant 0 : index
    %266 = vector.load %arg16[%c1_146, %c0_147, %c0_148] : memref<8x2x32xf32, #tpu.memory_space<vmem>>, vector<1x2x32xf32>
    %267 = vector.shape_cast %266 : vector<1x2x32xf32> to vector<2x32xf32>
    %cst_149 = arith.constant dense<0.000000e+00> : vector<2x128xf32>
    %268 = tpu.matmul %267, %255, %cst_149 {dimension_numbers = #tpu.dot_dimension_numbers<[1], [0], [0], [1], [0, 0, 1, 1], [], []>} : vector<2x32xf32>, vector<32x128xf32>, vector<2x128xf32> -> vector<2x128xf32>
    %269 = vector.broadcast %257 : vector<1x128xf32> to vector<2x128xf32>
    %270 = arith.addf %268, %269 : vector<2x128xf32>
    %c1_150 = arith.constant 1 : index
    %c0_151 = arith.constant 0 : index
    %c0_152 = arith.constant 0 : index
    %271 = vector.load %arg15[%c1_150, %c0_151, %c0_152] : memref<8x2x128xf32, #tpu.memory_space<vmem>>, vector<1x2x128xf32>
    %272 = vector.shape_cast %271 : vector<1x2x128xf32> to vector<2x128xf32>
    %273 = vector.shape_cast %270 : vector<2x128xf32> to vector<1x2x128xf32>
    tpu.vector_store %arg15[%c1_150, %c0_151, %c0_152], %273 {strides = array<i32>} : memref<8x2x128xf32, #tpu.memory_space<vmem>>, vector<1x2x128xf32>,
    %c2_153 = arith.constant 2 : index
    %c0_154 = arith.constant 0 : index
    %c0_155 = arith.constant 0 : index
    %274 = vector.load %arg16[%c2_153, %c0_154, %c0_155] : memref<8x2x32xf32, #tpu.memory_space<vmem>>, vector<1x2x32xf32>
    %275 = vector.shape_cast %274 : vector<1x2x32xf32> to vector<2x32xf32>
    %cst_156 = arith.constant dense<0.000000e+00> : vector<2x128xf32>
    %276 = tpu.matmul %275, %255, %cst_156 {dimension_numbers = #tpu.dot_dimension_numbers<[1], [0], [0], [1], [0, 0, 1, 1], [], []>} : vector<2x32xf32>, vector<32x128xf32>, vector<2x128xf32> -> vector<2x128xf32>
    %277 = vector.broadcast %257 : vector<1x128xf32> to vector<2x128xf32>
    %278 = arith.addf %276, %277 : vector<2x128xf32>
    %c2_157 = arith.constant 2 : index
    %c0_158 = arith.constant 0 : index
    %c0_159 = arith.constant 0 : index
    %279 = vector.load %arg15[%c2_157, %c0_158, %c0_159] : memref<8x2x128xf32, #tpu.memory_space<vmem>>, vector<1x2x128xf32>
    %280 = vector.shape_cast %279 : vector<1x2x128xf32> to vector<2x128xf32>
    %281 = vector.shape_cast %278 : vector<2x128xf32> to vector<1x2x128xf32>
    tpu.vector_store %arg15[%c2_157, %c0_158, %c0_159], %281 {strides = array<i32>} : memref<8x2x128xf32, #tpu.memory_space<vmem>>, vector<1x2x128xf32>,
    %c3_160 = arith.constant 3 : index
    %c0_161 = arith.constant 0 : index
    %c0_162 = arith.constant 0 : index
    %282 = vector.load %arg16[%c3_160, %c0_161, %c0_162] : memref<8x2x32xf32, #tpu.memory_space<vmem>>, vector<1x2x32xf32>
    %283 = vector.shape_cast %282 : vector<1x2x32xf32> to vector<2x32xf32>
    %cst_163 = arith.constant dense<0.000000e+00> : vector<2x128xf32>
    %284 = tpu.matmul %283, %255, %cst_163 {dimension_numbers = #tpu.dot_dimension_numbers<[1], [0], [0], [1], [0, 0, 1, 1], [], []>} : vector<2x32xf32>, vector<32x128xf32>, vector<2x128xf32> -> vector<2x128xf32>
    %285 = vector.broadcast %257 : vector<1x128xf32> to vector<2x128xf32>
    %286 = arith.addf %284, %285 : vector<2x128xf32>
    %c3_164 = arith.constant 3 : index
    %c0_165 = arith.constant 0 : index
    %c0_166 = arith.constant 0 : index
    %287 = vector.load %arg15[%c3_164, %c0_165, %c0_166] : memref<8x2x128xf32, #tpu.memory_space<vmem>>, vector<1x2x128xf32>
    %288 = vector.shape_cast %287 : vector<1x2x128xf32> to vector<2x128xf32>
    %289 = vector.shape_cast %286 : vector<2x128xf32> to vector<1x2x128xf32>
    tpu.vector_store %arg15[%c3_164, %c0_165, %c0_166], %289 {strides = array<i32>} : memref<8x2x128xf32, #tpu.memory_space<vmem>>, vector<1x2x128xf32>,
    %c4_167 = arith.constant 4 : index
    %c0_168 = arith.constant 0 : index
    %c0_169 = arith.constant 0 : index
    %290 = vector.load %arg16[%c4_167, %c0_168, %c0_169] : memref<8x2x32xf32, #tpu.memory_space<vmem>>, vector<1x2x32xf32>
    %291 = vector.shape_cast %290 : vector<1x2x32xf32> to vector<2x32xf32>
    %cst_170 = arith.constant dense<0.000000e+00> : vector<2x128xf32>
    %292 = tpu.matmul %291, %255, %cst_170 {dimension_numbers = #tpu.dot_dimension_numbers<[1], [0], [0], [1], [0, 0, 1, 1], [], []>} : vector<2x32xf32>, vector<32x128xf32>, vector<2x128xf32> -> vector<2x128xf32>
    %293 = vector.broadcast %257 : vector<1x128xf32> to vector<2x128xf32>
    %294 = arith.addf %292, %293 : vector<2x128xf32>
    %c4_171 = arith.constant 4 : index
    %c0_172 = arith.constant 0 : index
    %c0_173 = arith.constant 0 : index
    %295 = vector.load %arg15[%c4_171, %c0_172, %c0_173] : memref<8x2x128xf32, #tpu.memory_space<vmem>>, vector<1x2x128xf32>
    %296 = vector.shape_cast %295 : vector<1x2x128xf32> to vector<2x128xf32>
    %297 = vector.shape_cast %294 : vector<2x128xf32> to vector<1x2x128xf32>
    tpu.vector_store %arg15[%c4_171, %c0_172, %c0_173], %297 {strides = array<i32>} : memref<8x2x128xf32, #tpu.memory_space<vmem>>, vector<1x2x128xf32>,
    %c5_174 = arith.constant 5 : index
    %c0_175 = arith.constant 0 : index
    %c0_176 = arith.constant 0 : index
    %298 = vector.load %arg16[%c5_174, %c0_175, %c0_176] : memref<8x2x32xf32, #tpu.memory_space<vmem>>, vector<1x2x32xf32>
    %299 = vector.shape_cast %298 : vector<1x2x32xf32> to vector<2x32xf32>
    %cst_177 = arith.constant dense<0.000000e+00> : vector<2x128xf32>
    %300 = tpu.matmul %299, %255, %cst_177 {dimension_numbers = #tpu.dot_dimension_numbers<[1], [0], [0], [1], [0, 0, 1, 1], [], []>} : vector<2x32xf32>, vector<32x128xf32>, vector<2x128xf32> -> vector<2x128xf32>
    %301 = vector.broadcast %257 : vector<1x128xf32> to vector<2x128xf32>
    %302 = arith.addf %300, %301 : vector<2x128xf32>
    %c5_178 = arith.constant 5 : index
    %c0_179 = arith.constant 0 : index
    %c0_180 = arith.constant 0 : index
    %303 = vector.load %arg15[%c5_178, %c0_179, %c0_180] : memref<8x2x128xf32, #tpu.memory_space<vmem>>, vector<1x2x128xf32>
    %304 = vector.shape_cast %303 : vector<1x2x128xf32> to vector<2x128xf32>
    %305 = vector.shape_cast %302 : vector<2x128xf32> to vector<1x2x128xf32>
    tpu.vector_store %arg15[%c5_178, %c0_179, %c0_180], %305 {strides = array<i32>} : memref<8x2x128xf32, #tpu.memory_space<vmem>>, vector<1x2x128xf32>,
    %c6_181 = arith.constant 6 : index
    %c0_182 = arith.constant 0 : index
    %c0_183 = arith.constant 0 : index
    %306 = vector.load %arg16[%c6_181, %c0_182, %c0_183] : memref<8x2x32xf32, #tpu.memory_space<vmem>>, vector<1x2x32xf32>
    %307 = vector.shape_cast %306 : vector<1x2x32xf32> to vector<2x32xf32>
    %cst_184 = arith.constant dense<0.000000e+00> : vector<2x128xf32>
    %308 = tpu.matmul %307, %255, %cst_184 {dimension_numbers = #tpu.dot_dimension_numbers<[1], [0], [0], [1], [0, 0, 1, 1], [], []>} : vector<2x32xf32>, vector<32x128xf32>, vector<2x128xf32> -> vector<2x128xf32>
    %309 = vector.broadcast %257 : vector<1x128xf32> to vector<2x128xf32>
    %310 = arith.addf %308, %309 : vector<2x128xf32>
    %c6_185 = arith.constant 6 : index
    %c0_186 = arith.constant 0 : index
    %c0_187 = arith.constant 0 : index
    %311 = vector.load %arg15[%c6_185, %c0_186, %c0_187] : memref<8x2x128xf32, #tpu.memory_space<vmem>>, vector<1x2x128xf32>
    %312 = vector.shape_cast %311 : vector<1x2x128xf32> to vector<2x128xf32>
    %313 = vector.shape_cast %310 : vector<2x128xf32> to vector<1x2x128xf32>
    tpu.vector_store %arg15[%c6_185, %c0_186, %c0_187], %313 {strides = array<i32>} : memref<8x2x128xf32, #tpu.memory_space<vmem>>, vector<1x2x128xf32>,
    %c7_188 = arith.constant 7 : index
    %c0_189 = arith.constant 0 : index
    %c0_190 = arith.constant 0 : index
    %314 = vector.load %arg16[%c7_188, %c0_189, %c0_190] : memref<8x2x32xf32, #tpu.memory_space<vmem>>, vector<1x2x32xf32>
    %315 = vector.shape_cast %314 : vector<1x2x32xf32> to vector<2x32xf32>
    %cst_191 = arith.constant dense<0.000000e+00> : vector<2x128xf32>
    %316 = tpu.matmul %315, %255, %cst_191 {dimension_numbers = #tpu.dot_dimension_numbers<[1], [0], [0], [1], [0, 0, 1, 1], [], []>} : vector<2x32xf32>, vector<32x128xf32>, vector<2x128xf32> -> vector<2x128xf32>
    %317 = vector.broadcast %257 : vector<1x128xf32> to vector<2x128xf32>
    %318 = arith.addf %316, %317 : vector<2x128xf32>
    %c7_192 = arith.constant 7 : index
    %c0_193 = arith.constant 0 : index
    %c0_194 = arith.constant 0 : index
    %319 = vector.load %arg15[%c7_192, %c0_193, %c0_194] : memref<8x2x128xf32, #tpu.memory_space<vmem>>, vector<1x2x128xf32>
    %320 = vector.shape_cast %319 : vector<1x2x128xf32> to vector<2x128xf32>
    %321 = vector.shape_cast %318 : vector<2x128xf32> to vector<1x2x128xf32>
    tpu.vector_store %arg15[%c7_192, %c0_193, %c0_194], %321 {strides = array<i32>} : memref<8x2x128xf32, #tpu.memory_space<vmem>>, vector<1x2x128xf32>,
    %c1_195 = arith.constant 1 : index
    %c0_196 = arith.constant 0 : index
    %c0_197 = arith.constant 0 : index
    %322 = vector.load %arg2[%c1_195, %c0_196, %c0_197] : memref<2x2x32xf32, #tpu.memory_space<vmem>>, vector<1x2x32xf32>
    %323 = vector.shape_cast %322 : vector<1x2x32xf32> to vector<2x32xf32>
    %c1_198 = arith.constant 1 : index
    %c0_199 = arith.constant 0 : index
    %c0_200 = arith.constant 0 : index
    %324 = vector.load %arg3[%c1_198, %c0_199, %c0_200] : memref<2x2x32xf32, #tpu.memory_space<vmem>>, vector<1x2x32xf32>
    %325 = vector.shape_cast %324 : vector<1x2x32xf32> to vector<2x32xf32>
    %c0_201 = arith.constant 0 : index
    %c0_202 = arith.constant 0 : index
    %c0_203 = arith.constant 0 : index
    %326 = vector.load %arg15[%c0_201, %c0_202, %c0_203] : memref<8x2x128xf32, #tpu.memory_space<vmem>>, vector<1x2x128xf32>
    %327 = vector.shape_cast %326 : vector<1x2x128xf32> to vector<2x128xf32>
    %cst_204 = arith.constant dense<0.000000e+00> : vector<2x128xf32>
    %328 = tpu.matmul %323, %256, %cst_204 {dimension_numbers = #tpu.dot_dimension_numbers<[1], [0], [0], [1], [0, 0, 1, 1], [], []>} : vector<2x32xf32>, vector<32x128xf32>, vector<2x128xf32> -> vector<2x128xf32>
    %329 = arith.addf %327, %328 : vector<2x128xf32>
    %330 = arith.negf %329 : vector<2x128xf32>
    %331 = math.exp %330 : vector<2x128xf32>
    %cst_205 = arith.constant 1.000000e+00 : f32
    %332 = vector.broadcast %cst_205 : f32 to vector<2x128xf32>
    %333 = arith.addf %332, %331 : vector<2x128xf32>
    %334 = arith.divf %332, %333 : vector<2x128xf32>
    %335 = math.tanh %329 : vector<2x128xf32>
    %336 = vector.extract_strided_slice %334 {offsets = [0, 0], sizes = [2, 32], strides = [1, 1]} : vector<2x128xf32> to vector<2x32xf32>
    %337 = vector.extract_strided_slice %334 {offsets = [0, 32], sizes = [2, 32], strides = [1, 1]} : vector<2x128xf32> to vector<2x32xf32>
    %338 = vector.extract_strided_slice %335 {offsets = [0, 64], sizes = [2, 32], strides = [1, 1]} : vector<2x128xf32> to vector<2x32xf32>
    %339 = vector.extract_strided_slice %334 {offsets = [0, 96], sizes = [2, 32], strides = [1, 1]} : vector<2x128xf32> to vector<2x32xf32>
    %340 = arith.mulf %337, %325 : vector<2x32xf32>
    %341 = arith.mulf %336, %338 : vector<2x32xf32>
    %342 = arith.addf %340, %341 : vector<2x32xf32>
    %343 = math.tanh %342 : vector<2x32xf32>
    %344 = arith.mulf %339, %343 : vector<2x32xf32>
    %cst_206 = arith.constant dense<0.000000e+00> : vector<2x4xf32>
    %345 = tpu.matmul %344, %0, %cst_206 {dimension_numbers = #tpu.dot_dimension_numbers<[1], [0], [0], [1], [0, 0, 1, 1], [], []>} : vector<2x32xf32>, vector<32x4xf32>, vector<2x4xf32> -> vector<2x4xf32>
    %346 = vector.broadcast %1 : vector<1x4xf32> to vector<2x4xf32>
    %347 = arith.addf %345, %346 : vector<2x4xf32>
    %c0_207 = arith.constant 0 : index
    %c0_208 = arith.constant 0 : index
    %c0_209 = arith.constant 0 : index
    %348 = vector.load %arg12[%c0_207, %c0_208, %c0_209] : memref<8x2x4xf32, #tpu.memory_space<vmem>>, vector<1x2x4xf32>
    %349 = vector.shape_cast %348 : vector<1x2x4xf32> to vector<2x4xf32>
    %350 = vector.shape_cast %347 : vector<2x4xf32> to vector<1x2x4xf32>
    tpu.vector_store %arg12[%c0_207, %c0_208, %c0_209], %350 {strides = array<i32>} : memref<8x2x4xf32, #tpu.memory_space<vmem>>, vector<1x2x4xf32>,
    %c1_210 = arith.constant 1 : index
    %c0_211 = arith.constant 0 : index
    %c0_212 = arith.constant 0 : index
    %351 = vector.load %arg15[%c1_210, %c0_211, %c0_212] : memref<8x2x128xf32, #tpu.memory_space<vmem>>, vector<1x2x128xf32>
    %352 = vector.shape_cast %351 : vector<1x2x128xf32> to vector<2x128xf32>
    %cst_213 = arith.constant dense<0.000000e+00> : vector<2x128xf32>
    %353 = tpu.matmul %344, %256, %cst_213 {dimension_numbers = #tpu.dot_dimension_numbers<[1], [0], [0], [1], [0, 0, 1, 1], [], []>} : vector<2x32xf32>, vector<32x128xf32>, vector<2x128xf32> -> vector<2x128xf32>
    %354 = arith.addf %352, %353 : vector<2x128xf32>
    %355 = arith.negf %354 : vector<2x128xf32>
    %356 = math.exp %355 : vector<2x128xf32>
    %cst_214 = arith.constant 1.000000e+00 : f32
    %357 = vector.broadcast %cst_214 : f32 to vector<2x128xf32>
    %358 = arith.addf %357, %356 : vector<2x128xf32>
    %359 = arith.divf %357, %358 : vector<2x128xf32>
    %360 = math.tanh %354 : vector<2x128xf32>
    %361 = vector.extract_strided_slice %359 {offsets = [0, 0], sizes = [2, 32], strides = [1, 1]} : vector<2x128xf32> to vector<2x32xf32>
    %362 = vector.extract_strided_slice %359 {offsets = [0, 32], sizes = [2, 32], strides = [1, 1]} : vector<2x128xf32> to vector<2x32xf32>
    %363 = vector.extract_strided_slice %360 {offsets = [0, 64], sizes = [2, 32], strides = [1, 1]} : vector<2x128xf32> to vector<2x32xf32>
    %364 = vector.extract_strided_slice %359 {offsets = [0, 96], sizes = [2, 32], strides = [1, 1]} : vector<2x128xf32> to vector<2x32xf32>
    %365 = arith.mulf %362, %342 : vector<2x32xf32>
    %366 = arith.mulf %361, %363 : vector<2x32xf32>
    %367 = arith.addf %365, %366 : vector<2x32xf32>
    %368 = math.tanh %367 : vector<2x32xf32>
    %369 = arith.mulf %364, %368 : vector<2x32xf32>
    %cst_215 = arith.constant dense<0.000000e+00> : vector<2x4xf32>
    %370 = tpu.matmul %369, %0, %cst_215 {dimension_numbers = #tpu.dot_dimension_numbers<[1], [0], [0], [1], [0, 0, 1, 1], [], []>} : vector<2x32xf32>, vector<32x4xf32>, vector<2x4xf32> -> vector<2x4xf32>
    %371 = vector.broadcast %1 : vector<1x4xf32> to vector<2x4xf32>
    %372 = arith.addf %370, %371 : vector<2x4xf32>
    %c1_216 = arith.constant 1 : index
    %c0_217 = arith.constant 0 : index
    %c0_218 = arith.constant 0 : index
    %373 = vector.load %arg12[%c1_216, %c0_217, %c0_218] : memref<8x2x4xf32, #tpu.memory_space<vmem>>, vector<1x2x4xf32>
    %374 = vector.shape_cast %373 : vector<1x2x4xf32> to vector<2x4xf32>
    %375 = vector.shape_cast %372 : vector<2x4xf32> to vector<1x2x4xf32>
    tpu.vector_store %arg12[%c1_216, %c0_217, %c0_218], %375 {strides = array<i32>} : memref<8x2x4xf32, #tpu.memory_space<vmem>>, vector<1x2x4xf32>,
    %c2_219 = arith.constant 2 : index
    %c0_220 = arith.constant 0 : index
    %c0_221 = arith.constant 0 : index
    %376 = vector.load %arg15[%c2_219, %c0_220, %c0_221] : memref<8x2x128xf32, #tpu.memory_space<vmem>>, vector<1x2x128xf32>
    %377 = vector.shape_cast %376 : vector<1x2x128xf32> to vector<2x128xf32>
    %cst_222 = arith.constant dense<0.000000e+00> : vector<2x128xf32>
    %378 = tpu.matmul %369, %256, %cst_222 {dimension_numbers = #tpu.dot_dimension_numbers<[1], [0], [0], [1], [0, 0, 1, 1], [], []>} : vector<2x32xf32>, vector<32x128xf32>, vector<2x128xf32> -> vector<2x128xf32>
    %379 = arith.addf %377, %378 : vector<2x128xf32>
    %380 = arith.negf %379 : vector<2x128xf32>
    %381 = math.exp %380 : vector<2x128xf32>
    %cst_223 = arith.constant 1.000000e+00 : f32
    %382 = vector.broadcast %cst_223 : f32 to vector<2x128xf32>
    %383 = arith.addf %382, %381 : vector<2x128xf32>
    %384 = arith.divf %382, %383 : vector<2x128xf32>
    %385 = math.tanh %379 : vector<2x128xf32>
    %386 = vector.extract_strided_slice %384 {offsets = [0, 0], sizes = [2, 32], strides = [1, 1]} : vector<2x128xf32> to vector<2x32xf32>
    %387 = vector.extract_strided_slice %384 {offsets = [0, 32], sizes = [2, 32], strides = [1, 1]} : vector<2x128xf32> to vector<2x32xf32>
    %388 = vector.extract_strided_slice %385 {offsets = [0, 64], sizes = [2, 32], strides = [1, 1]} : vector<2x128xf32> to vector<2x32xf32>
    %389 = vector.extract_strided_slice %384 {offsets = [0, 96], sizes = [2, 32], strides = [1, 1]} : vector<2x128xf32> to vector<2x32xf32>
    %390 = arith.mulf %387, %367 : vector<2x32xf32>
    %391 = arith.mulf %386, %388 : vector<2x32xf32>
    %392 = arith.addf %390, %391 : vector<2x32xf32>
    %393 = math.tanh %392 : vector<2x32xf32>
    %394 = arith.mulf %389, %393 : vector<2x32xf32>
    %cst_224 = arith.constant dense<0.000000e+00> : vector<2x4xf32>
    %395 = tpu.matmul %394, %0, %cst_224 {dimension_numbers = #tpu.dot_dimension_numbers<[1], [0], [0], [1], [0, 0, 1, 1], [], []>} : vector<2x32xf32>, vector<32x4xf32>, vector<2x4xf32> -> vector<2x4xf32>
    %396 = vector.broadcast %1 : vector<1x4xf32> to vector<2x4xf32>
    %397 = arith.addf %395, %396 : vector<2x4xf32>
    %c2_225 = arith.constant 2 : index
    %c0_226 = arith.constant 0 : index
    %c0_227 = arith.constant 0 : index
    %398 = vector.load %arg12[%c2_225, %c0_226, %c0_227] : memref<8x2x4xf32, #tpu.memory_space<vmem>>, vector<1x2x4xf32>
    %399 = vector.shape_cast %398 : vector<1x2x4xf32> to vector<2x4xf32>
    %400 = vector.shape_cast %397 : vector<2x4xf32> to vector<1x2x4xf32>
    tpu.vector_store %arg12[%c2_225, %c0_226, %c0_227], %400 {strides = array<i32>} : memref<8x2x4xf32, #tpu.memory_space<vmem>>, vector<1x2x4xf32>,
    %c3_228 = arith.constant 3 : index
    %c0_229 = arith.constant 0 : index
    %c0_230 = arith.constant 0 : index
    %401 = vector.load %arg15[%c3_228, %c0_229, %c0_230] : memref<8x2x128xf32, #tpu.memory_space<vmem>>, vector<1x2x128xf32>
    %402 = vector.shape_cast %401 : vector<1x2x128xf32> to vector<2x128xf32>
    %cst_231 = arith.constant dense<0.000000e+00> : vector<2x128xf32>
    %403 = tpu.matmul %394, %256, %cst_231 {dimension_numbers = #tpu.dot_dimension_numbers<[1], [0], [0], [1], [0, 0, 1, 1], [], []>} : vector<2x32xf32>, vector<32x128xf32>, vector<2x128xf32> -> vector<2x128xf32>
    %404 = arith.addf %402, %403 : vector<2x128xf32>
    %405 = arith.negf %404 : vector<2x128xf32>
    %406 = math.exp %405 : vector<2x128xf32>
    %cst_232 = arith.constant 1.000000e+00 : f32
    %407 = vector.broadcast %cst_232 : f32 to vector<2x128xf32>
    %408 = arith.addf %407, %406 : vector<2x128xf32>
    %409 = arith.divf %407, %408 : vector<2x128xf32>
    %410 = math.tanh %404 : vector<2x128xf32>
    %411 = vector.extract_strided_slice %409 {offsets = [0, 0], sizes = [2, 32], strides = [1, 1]} : vector<2x128xf32> to vector<2x32xf32>
    %412 = vector.extract_strided_slice %409 {offsets = [0, 32], sizes = [2, 32], strides = [1, 1]} : vector<2x128xf32> to vector<2x32xf32>
    %413 = vector.extract_strided_slice %410 {offsets = [0, 64], sizes = [2, 32], strides = [1, 1]} : vector<2x128xf32> to vector<2x32xf32>
    %414 = vector.extract_strided_slice %409 {offsets = [0, 96], sizes = [2, 32], strides = [1, 1]} : vector<2x128xf32> to vector<2x32xf32>
    %415 = arith.mulf %412, %392 : vector<2x32xf32>
    %416 = arith.mulf %411, %413 : vector<2x32xf32>
    %417 = arith.addf %415, %416 : vector<2x32xf32>
    %418 = math.tanh %417 : vector<2x32xf32>
    %419 = arith.mulf %414, %418 : vector<2x32xf32>
    %cst_233 = arith.constant dense<0.000000e+00> : vector<2x4xf32>
    %420 = tpu.matmul %419, %0, %cst_233 {dimension_numbers = #tpu.dot_dimension_numbers<[1], [0], [0], [1], [0, 0, 1, 1], [], []>} : vector<2x32xf32>, vector<32x4xf32>, vector<2x4xf32> -> vector<2x4xf32>
    %421 = vector.broadcast %1 : vector<1x4xf32> to vector<2x4xf32>
    %422 = arith.addf %420, %421 : vector<2x4xf32>
    %c3_234 = arith.constant 3 : index
    %c0_235 = arith.constant 0 : index
    %c0_236 = arith.constant 0 : index
    %423 = vector.load %arg12[%c3_234, %c0_235, %c0_236] : memref<8x2x4xf32, #tpu.memory_space<vmem>>, vector<1x2x4xf32>
    %424 = vector.shape_cast %423 : vector<1x2x4xf32> to vector<2x4xf32>
    %425 = vector.shape_cast %422 : vector<2x4xf32> to vector<1x2x4xf32>
    tpu.vector_store %arg12[%c3_234, %c0_235, %c0_236], %425 {strides = array<i32>} : memref<8x2x4xf32, #tpu.memory_space<vmem>>, vector<1x2x4xf32>,
    %c4_237 = arith.constant 4 : index
    %c0_238 = arith.constant 0 : index
    %c0_239 = arith.constant 0 : index
    %426 = vector.load %arg15[%c4_237, %c0_238, %c0_239] : memref<8x2x128xf32, #tpu.memory_space<vmem>>, vector<1x2x128xf32>
    %427 = vector.shape_cast %426 : vector<1x2x128xf32> to vector<2x128xf32>
    %cst_240 = arith.constant dense<0.000000e+00> : vector<2x128xf32>
    %428 = tpu.matmul %419, %256, %cst_240 {dimension_numbers = #tpu.dot_dimension_numbers<[1], [0], [0], [1], [0, 0, 1, 1], [], []>} : vector<2x32xf32>, vector<32x128xf32>, vector<2x128xf32> -> vector<2x128xf32>
    %429 = arith.addf %427, %428 : vector<2x128xf32>
    %430 = arith.negf %429 : vector<2x128xf32>
    %431 = math.exp %430 : vector<2x128xf32>
    %cst_241 = arith.constant 1.000000e+00 : f32
    %432 = vector.broadcast %cst_241 : f32 to vector<2x128xf32>
    %433 = arith.addf %432, %431 : vector<2x128xf32>
    %434 = arith.divf %432, %433 : vector<2x128xf32>
    %435 = math.tanh %429 : vector<2x128xf32>
    %436 = vector.extract_strided_slice %434 {offsets = [0, 0], sizes = [2, 32], strides = [1, 1]} : vector<2x128xf32> to vector<2x32xf32>
    %437 = vector.extract_strided_slice %434 {offsets = [0, 32], sizes = [2, 32], strides = [1, 1]} : vector<2x128xf32> to vector<2x32xf32>
    %438 = vector.extract_strided_slice %435 {offsets = [0, 64], sizes = [2, 32], strides = [1, 1]} : vector<2x128xf32> to vector<2x32xf32>
    %439 = vector.extract_strided_slice %434 {offsets = [0, 96], sizes = [2, 32], strides = [1, 1]} : vector<2x128xf32> to vector<2x32xf32>
    %440 = arith.mulf %437, %417 : vector<2x32xf32>
    %441 = arith.mulf %436, %438 : vector<2x32xf32>
    %442 = arith.addf %440, %441 : vector<2x32xf32>
    %443 = math.tanh %442 : vector<2x32xf32>
    %444 = arith.mulf %439, %443 : vector<2x32xf32>
    %cst_242 = arith.constant dense<0.000000e+00> : vector<2x4xf32>
    %445 = tpu.matmul %444, %0, %cst_242 {dimension_numbers = #tpu.dot_dimension_numbers<[1], [0], [0], [1], [0, 0, 1, 1], [], []>} : vector<2x32xf32>, vector<32x4xf32>, vector<2x4xf32> -> vector<2x4xf32>
    %446 = vector.broadcast %1 : vector<1x4xf32> to vector<2x4xf32>
    %447 = arith.addf %445, %446 : vector<2x4xf32>
    %c4_243 = arith.constant 4 : index
    %c0_244 = arith.constant 0 : index
    %c0_245 = arith.constant 0 : index
    %448 = vector.load %arg12[%c4_243, %c0_244, %c0_245] : memref<8x2x4xf32, #tpu.memory_space<vmem>>, vector<1x2x4xf32>
    %449 = vector.shape_cast %448 : vector<1x2x4xf32> to vector<2x4xf32>
    %450 = vector.shape_cast %447 : vector<2x4xf32> to vector<1x2x4xf32>
    tpu.vector_store %arg12[%c4_243, %c0_244, %c0_245], %450 {strides = array<i32>} : memref<8x2x4xf32, #tpu.memory_space<vmem>>, vector<1x2x4xf32>,
    %c5_246 = arith.constant 5 : index
    %c0_247 = arith.constant 0 : index
    %c0_248 = arith.constant 0 : index
    %451 = vector.load %arg15[%c5_246, %c0_247, %c0_248] : memref<8x2x128xf32, #tpu.memory_space<vmem>>, vector<1x2x128xf32>
    %452 = vector.shape_cast %451 : vector<1x2x128xf32> to vector<2x128xf32>
    %cst_249 = arith.constant dense<0.000000e+00> : vector<2x128xf32>
    %453 = tpu.matmul %444, %256, %cst_249 {dimension_numbers = #tpu.dot_dimension_numbers<[1], [0], [0], [1], [0, 0, 1, 1], [], []>} : vector<2x32xf32>, vector<32x128xf32>, vector<2x128xf32> -> vector<2x128xf32>
    %454 = arith.addf %452, %453 : vector<2x128xf32>
    %455 = arith.negf %454 : vector<2x128xf32>
    %456 = math.exp %455 : vector<2x128xf32>
    %cst_250 = arith.constant 1.000000e+00 : f32
    %457 = vector.broadcast %cst_250 : f32 to vector<2x128xf32>
    %458 = arith.addf %457, %456 : vector<2x128xf32>
    %459 = arith.divf %457, %458 : vector<2x128xf32>
    %460 = math.tanh %454 : vector<2x128xf32>
    %461 = vector.extract_strided_slice %459 {offsets = [0, 0], sizes = [2, 32], strides = [1, 1]} : vector<2x128xf32> to vector<2x32xf32>
    %462 = vector.extract_strided_slice %459 {offsets = [0, 32], sizes = [2, 32], strides = [1, 1]} : vector<2x128xf32> to vector<2x32xf32>
    %463 = vector.extract_strided_slice %460 {offsets = [0, 64], sizes = [2, 32], strides = [1, 1]} : vector<2x128xf32> to vector<2x32xf32>
    %464 = vector.extract_strided_slice %459 {offsets = [0, 96], sizes = [2, 32], strides = [1, 1]} : vector<2x128xf32> to vector<2x32xf32>
    %465 = arith.mulf %462, %442 : vector<2x32xf32>
    %466 = arith.mulf %461, %463 : vector<2x32xf32>
    %467 = arith.addf %465, %466 : vector<2x32xf32>
    %468 = math.tanh %467 : vector<2x32xf32>
    %469 = arith.mulf %464, %468 : vector<2x32xf32>
    %cst_251 = arith.constant dense<0.000000e+00> : vector<2x4xf32>
    %470 = tpu.matmul %469, %0, %cst_251 {dimension_numbers = #tpu.dot_dimension_numbers<[1], [0], [0], [1], [0, 0, 1, 1], [], []>} : vector<2x32xf32>, vector<32x4xf32>, vector<2x4xf32> -> vector<2x4xf32>
    %471 = vector.broadcast %1 : vector<1x4xf32> to vector<2x4xf32>
    %472 = arith.addf %470, %471 : vector<2x4xf32>
    %c5_252 = arith.constant 5 : index
    %c0_253 = arith.constant 0 : index
    %c0_254 = arith.constant 0 : index
    %473 = vector.load %arg12[%c5_252, %c0_253, %c0_254] : memref<8x2x4xf32, #tpu.memory_space<vmem>>, vector<1x2x4xf32>
    %474 = vector.shape_cast %473 : vector<1x2x4xf32> to vector<2x4xf32>
    %475 = vector.shape_cast %472 : vector<2x4xf32> to vector<1x2x4xf32>
    tpu.vector_store %arg12[%c5_252, %c0_253, %c0_254], %475 {strides = array<i32>} : memref<8x2x4xf32, #tpu.memory_space<vmem>>, vector<1x2x4xf32>,
    %c6_255 = arith.constant 6 : index
    %c0_256 = arith.constant 0 : index
    %c0_257 = arith.constant 0 : index
    %476 = vector.load %arg15[%c6_255, %c0_256, %c0_257] : memref<8x2x128xf32, #tpu.memory_space<vmem>>, vector<1x2x128xf32>
    %477 = vector.shape_cast %476 : vector<1x2x128xf32> to vector<2x128xf32>
    %cst_258 = arith.constant dense<0.000000e+00> : vector<2x128xf32>
    %478 = tpu.matmul %469, %256, %cst_258 {dimension_numbers = #tpu.dot_dimension_numbers<[1], [0], [0], [1], [0, 0, 1, 1], [], []>} : vector<2x32xf32>, vector<32x128xf32>, vector<2x128xf32> -> vector<2x128xf32>
    %479 = arith.addf %477, %478 : vector<2x128xf32>
    %480 = arith.negf %479 : vector<2x128xf32>
    %481 = math.exp %480 : vector<2x128xf32>
    %cst_259 = arith.constant 1.000000e+00 : f32
    %482 = vector.broadcast %cst_259 : f32 to vector<2x128xf32>
    %483 = arith.addf %482, %481 : vector<2x128xf32>
    %484 = arith.divf %482, %483 : vector<2x128xf32>
    %485 = math.tanh %479 : vector<2x128xf32>
    %486 = vector.extract_strided_slice %484 {offsets = [0, 0], sizes = [2, 32], strides = [1, 1]} : vector<2x128xf32> to vector<2x32xf32>
    %487 = vector.extract_strided_slice %484 {offsets = [0, 32], sizes = [2, 32], strides = [1, 1]} : vector<2x128xf32> to vector<2x32xf32>
    %488 = vector.extract_strided_slice %485 {offsets = [0, 64], sizes = [2, 32], strides = [1, 1]} : vector<2x128xf32> to vector<2x32xf32>
    %489 = vector.extract_strided_slice %484 {offsets = [0, 96], sizes = [2, 32], strides = [1, 1]} : vector<2x128xf32> to vector<2x32xf32>
    %490 = arith.mulf %487, %467 : vector<2x32xf32>
    %491 = arith.mulf %486, %488 : vector<2x32xf32>
    %492 = arith.addf %490, %491 : vector<2x32xf32>
    %493 = math.tanh %492 : vector<2x32xf32>
    %494 = arith.mulf %489, %493 : vector<2x32xf32>
    %cst_260 = arith.constant dense<0.000000e+00> : vector<2x4xf32>
    %495 = tpu.matmul %494, %0, %cst_260 {dimension_numbers = #tpu.dot_dimension_numbers<[1], [0], [0], [1], [0, 0, 1, 1], [], []>} : vector<2x32xf32>, vector<32x4xf32>, vector<2x4xf32> -> vector<2x4xf32>
    %496 = vector.broadcast %1 : vector<1x4xf32> to vector<2x4xf32>
    %497 = arith.addf %495, %496 : vector<2x4xf32>
    %c6_261 = arith.constant 6 : index
    %c0_262 = arith.constant 0 : index
    %c0_263 = arith.constant 0 : index
    %498 = vector.load %arg12[%c6_261, %c0_262, %c0_263] : memref<8x2x4xf32, #tpu.memory_space<vmem>>, vector<1x2x4xf32>
    %499 = vector.shape_cast %498 : vector<1x2x4xf32> to vector<2x4xf32>
    %500 = vector.shape_cast %497 : vector<2x4xf32> to vector<1x2x4xf32>
    tpu.vector_store %arg12[%c6_261, %c0_262, %c0_263], %500 {strides = array<i32>} : memref<8x2x4xf32, #tpu.memory_space<vmem>>, vector<1x2x4xf32>,
    %c7_264 = arith.constant 7 : index
    %c0_265 = arith.constant 0 : index
    %c0_266 = arith.constant 0 : index
    %501 = vector.load %arg15[%c7_264, %c0_265, %c0_266] : memref<8x2x128xf32, #tpu.memory_space<vmem>>, vector<1x2x128xf32>
    %502 = vector.shape_cast %501 : vector<1x2x128xf32> to vector<2x128xf32>
    %cst_267 = arith.constant dense<0.000000e+00> : vector<2x128xf32>
    %503 = tpu.matmul %494, %256, %cst_267 {dimension_numbers = #tpu.dot_dimension_numbers<[1], [0], [0], [1], [0, 0, 1, 1], [], []>} : vector<2x32xf32>, vector<32x128xf32>, vector<2x128xf32> -> vector<2x128xf32>
    %504 = arith.addf %502, %503 : vector<2x128xf32>
    %505 = arith.negf %504 : vector<2x128xf32>
    %506 = math.exp %505 : vector<2x128xf32>
    %cst_268 = arith.constant 1.000000e+00 : f32
    %507 = vector.broadcast %cst_268 : f32 to vector<2x128xf32>
    %508 = arith.addf %507, %506 : vector<2x128xf32>
    %509 = arith.divf %507, %508 : vector<2x128xf32>
    %510 = math.tanh %504 : vector<2x128xf32>
    %511 = vector.extract_strided_slice %509 {offsets = [0, 0], sizes = [2, 32], strides = [1, 1]} : vector<2x128xf32> to vector<2x32xf32>
    %512 = vector.extract_strided_slice %509 {offsets = [0, 32], sizes = [2, 32], strides = [1, 1]} : vector<2x128xf32> to vector<2x32xf32>
    %513 = vector.extract_strided_slice %510 {offsets = [0, 64], sizes = [2, 32], strides = [1, 1]} : vector<2x128xf32> to vector<2x32xf32>
    %514 = vector.extract_strided_slice %509 {offsets = [0, 96], sizes = [2, 32], strides = [1, 1]} : vector<2x128xf32> to vector<2x32xf32>
    %515 = arith.mulf %512, %492 : vector<2x32xf32>
    %516 = arith.mulf %511, %513 : vector<2x32xf32>
    %517 = arith.addf %515, %516 : vector<2x32xf32>
    %518 = math.tanh %517 : vector<2x32xf32>
    %519 = arith.mulf %514, %518 : vector<2x32xf32>
    %cst_269 = arith.constant dense<0.000000e+00> : vector<2x4xf32>
    %520 = tpu.matmul %519, %0, %cst_269 {dimension_numbers = #tpu.dot_dimension_numbers<[1], [0], [0], [1], [0, 0, 1, 1], [], []>} : vector<2x32xf32>, vector<32x4xf32>, vector<2x4xf32> -> vector<2x4xf32>
    %521 = vector.broadcast %1 : vector<1x4xf32> to vector<2x4xf32>
    %522 = arith.addf %520, %521 : vector<2x4xf32>
    %c7_270 = arith.constant 7 : index
    %c0_271 = arith.constant 0 : index
    %c0_272 = arith.constant 0 : index
    %523 = vector.load %arg12[%c7_270, %c0_271, %c0_272] : memref<8x2x4xf32, #tpu.memory_space<vmem>>, vector<1x2x4xf32>
    %524 = vector.shape_cast %523 : vector<1x2x4xf32> to vector<2x4xf32>
    %525 = vector.shape_cast %522 : vector<2x4xf32> to vector<1x2x4xf32>
    tpu.vector_store %arg12[%c7_270, %c0_271, %c0_272], %525 {strides = array<i32>} : memref<8x2x4xf32, #tpu.memory_space<vmem>>, vector<1x2x4xf32>,
    %c1_273 = arith.constant 1 : index
    %c0_274 = arith.constant 0 : index
    %c0_275 = arith.constant 0 : index
    %526 = vector.load %arg13[%c1_273, %c0_274, %c0_275] : memref<2x2x32xf32, #tpu.memory_space<vmem>>, vector<1x2x32xf32>
    %527 = vector.shape_cast %526 : vector<1x2x32xf32> to vector<2x32xf32>
    %528 = vector.shape_cast %519 : vector<2x32xf32> to vector<1x2x32xf32>
    tpu.vector_store %arg13[%c1_273, %c0_274, %c0_275], %528 {strides = array<i32>} : memref<2x2x32xf32, #tpu.memory_space<vmem>>, vector<1x2x32xf32>,
    %c1_276 = arith.constant 1 : index
    %c0_277 = arith.constant 0 : index
    %c0_278 = arith.constant 0 : index
    %529 = vector.load %arg14[%c1_276, %c0_277, %c0_278] : memref<2x2x32xf32, #tpu.memory_space<vmem>>, vector<1x2x32xf32>
    %530 = vector.shape_cast %529 : vector<1x2x32xf32> to vector<2x32xf32>
    %531 = vector.shape_cast %517 : vector<2x32xf32> to vector<1x2x32xf32>
    tpu.vector_store %arg14[%c1_276, %c0_277, %c0_278], %531 {strides = array<i32>} : memref<2x2x32xf32, #tpu.memory_space<vmem>>, vector<1x2x32xf32>,
    return
  }
  func.func @transform_0(%arg0: i32) -> (i32, i32, i32) {
    %c0_i32 = arith.constant 0 : i32
    %c0_i32_0 = arith.constant 0 : i32
    %c0_i32_1 = arith.constant 0 : i32
    %c0_i32_2 = arith.constant 0 : i32
    return %c0_i32, %c0_i32_0, %c0_i32_1 : i32, i32, i32
  }
  func.func @transform_1(%arg0: i32) -> (i32, i32, i32) {
    %c0_i32 = arith.constant 0 : i32
    %c0_i32_0 = arith.constant 0 : i32
    %c0_i32_1 = arith.constant 0 : i32
    %c0_i32_2 = arith.constant 0 : i32
    return %c0_i32, %c0_i32_0, %c0_i32_1 : i32, i32, i32
  }
  func.func @transform_2(%arg0: i32) -> (i32, i32, i32) {
    %c0_i32 = arith.constant 0 : i32
    %c0_i32_0 = arith.constant 0 : i32
    %c0_i32_1 = arith.constant 0 : i32
    %c0_i32_2 = arith.constant 0 : i32
    return %c0_i32, %c0_i32_0, %c0_i32_1 : i32, i32, i32
  }
  func.func @transform_3(%arg0: i32) -> (i32, i32) {
    %c0_i32 = arith.constant 0 : i32
    %c0_i32_0 = arith.constant 0 : i32
    %c0_i32_1 = arith.constant 0 : i32
    return %c0_i32, %c0_i32_0 : i32, i32
  }
  func.func @transform_4(%arg0: i32) -> (i32, i32) {
    %c0_i32 = arith.constant 0 : i32
    %c0_i32_0 = arith.constant 0 : i32
    %c0_i32_1 = arith.constant 0 : i32
    return %c0_i32, %c0_i32_0 : i32, i32
  }
  func.func @transform_5(%arg0: i32) -> (i32, i32) {
    %c0_i32 = arith.constant 0 : i32
    %c0_i32_0 = arith.constant 0 : i32
    %c0_i32_1 = arith.constant 0 : i32
    return %c0_i32, %c0_i32_0 : i32, i32
  }
  func.func @transform_6(%arg0: i32) -> (i32, i32) {
    %c0_i32 = arith.constant 0 : i32
    %c0_i32_0 = arith.constant 0 : i32
    %c0_i32_1 = arith.constant 0 : i32
    return %c0_i32, %c0_i32_0 : i32, i32
  }
  func.func @transform_7(%arg0: i32) -> (i32, i32) {
    %c0_i32 = arith.constant 0 : i32
    %c0_i32_0 = arith.constant 0 : i32
    %c0_i32_1 = arith.constant 0 : i32
    return %c0_i32, %c0_i32_0 : i32, i32
  }
  func.func @transform_8(%arg0: i32) -> (i32, i32) {
    %c0_i32 = arith.constant 0 : i32
    %c0_i32_0 = arith.constant 0 : i32
    %c0_i32_1 = arith.constant 0 : i32
    return %c0_i32, %c0_i32_0 : i32, i32
  }
  func.func @transform_9(%arg0: i32) -> (i32, i32) {
    %c0_i32 = arith.constant 0 : i32
    %c0_i32_0 = arith.constant 0 : i32
    %c0_i32_1 = arith.constant 0 : i32
    return %c0_i32, %c0_i32_0 : i32, i32
  }
  func.func @transform_10(%arg0: i32) -> (i32, i32) {
    %c0_i32 = arith.constant 0 : i32
    %c0_i32_0 = arith.constant 0 : i32
    %c0_i32_1 = arith.constant 0 : i32
    return %c0_i32, %c0_i32_0 : i32, i32
  }
  func.func @transform_11(%arg0: i32) -> (i32, i32, i32) {
    %c0_i32 = arith.constant 0 : i32
    %c0_i32_0 = arith.constant 0 : i32
    %c0_i32_1 = arith.constant 0 : i32
    %c0_i32_2 = arith.constant 0 : i32
    return %c0_i32, %c0_i32_0, %c0_i32_1 : i32, i32, i32
  }
  func.func @transform_12(%arg0: i32) -> (i32, i32, i32) {
    %c0_i32 = arith.constant 0 : i32
    %c0_i32_0 = arith.constant 0 : i32
    %c0_i32_1 = arith.constant 0 : i32
    %c0_i32_2 = arith.constant 0 : i32
    return %c0_i32, %c0_i32_0, %c0_i32_1 : i32, i32, i32
  }
  func.func @transform_13(%arg0: i32) -> (i32, i32, i32) {
    %c0_i32 = arith.constant 0 : i32
    %c0_i32_0 = arith.constant 0 : i32
    %c0_i32_1 = arith.constant 0 : i32
    %c0_i32_2 = arith.constant 0 : i32
    return %c0_i32, %c0_i32_0, %c0_i32_1 : i32, i32, i32
  }
}

</mosaic_0001>

<llo_original>
// kernel: tpu_custom_call.1
$region0: #{tpu_custom_call.1}
  #allocation0 [shape = 'u32[]', space=smem, size = 0x4, offset = 0x4, fixed_abs, tag = 'smem constant byte address 0x4 - core index']
  #allocation1 [shape = 'u32[72,128]{1,0:T(1,128)}', space=vmem, size = 0x9000, scoped, tag = 'internal scratch']
  #allocation2 [shape = 'f32[8,2,128]{2,1,0:T(2,128)}', space=vmem, size = 0x2000, scoped, tag = 'scratch operand']
  #allocation3 [shape = 'f32[8,2,32]{2,1,0:T(2,128)}', space=vmem, size = 0x2000, scoped, tag = 'scratch operand']
  %s0 = inlined_call_operand.vmem [shape: f32[8,2,4], index: 0, kind: input, shape index: {}]
  %s1 = inlined_call_operand.vmem [shape: f32[2,2,32], index: 1, kind: input, shape index: {}]
  %s2 = inlined_call_operand.vmem [shape: f32[2,2,32], index: 2, kind: input, shape index: {}]
  %s3 = inlined_call_operand.vmem [shape: f32[4,128], index: 3, kind: input, shape index: {}]
  %s4 = inlined_call_operand.vmem [shape: f32[32,128], index: 4, kind: input, shape index: {}]
  %s5 = inlined_call_operand.vmem [shape: f32[1,128], index: 5, kind: input, shape index: {}]
  %s6 = inlined_call_operand.hbm [shape: f32[32,128], index: 6, kind: input, shape index: {}]
  %s7 = inlined_call_operand.hbm [shape: f32[32,128], index: 7, kind: input, shape index: {}]
  %s8 = inlined_call_operand.vmem [shape: f32[1,128], index: 8, kind: input, shape index: {}]
  %s9 = inlined_call_operand.vmem [shape: f32[32,4], index: 9, kind: input, shape index: {}]
  %s10 = inlined_call_operand.vmem [shape: f32[1,4], index: 10, kind: input, shape index: {}]
  %s11 = inlined_call_operand.vmem [shape: f32[8,2,4], index: 11, kind: output, shape index: {0}]
  %s12 = inlined_call_operand.hbm [shape: f32[2,2,32], index: 12, kind: output, shape index: {1}]
  %s13 = inlined_call_operand.hbm [shape: f32[2,2,32], index: 13, kind: output, shape index: {2}]
  %14 = xla_tuple %s11, %s12, %s13
  %s15 = sld [smem:[#allocation0]]
  $region78: #{tpu_custom_call.1} parent=0
    _
  %s17 = ssub.s32 1, %s15
  %s18 = scalar_select 0, %s17, %s15
  $region1: #{tpu_custom_call.1} parent=0
    #allocation4 [shape = 'u8[16384]{0}', space=vmem, size = 0x4000, scoped, tag = 'input window, operand 6, single buffered']
    #allocation5 [shape = 's32[1]{0}', space=sflag, size = 0x4, scoped, tag = 'scoped memory for tpu_custom_call.1']
    #allocation6 [shape = 's32[1]{0}', space=sflag, size = 0x4, scoped, tag = 'scoped memory for tpu_custom_call.1']
    #allocation7 [shape = 'u8[16384]{0}', space=vmem, size = 0x4000, scoped, tag = 'input window, operand 7, single buffered']
    #allocation8 [shape = 's32[1]{0}', space=sflag, size = 0x4, scoped, tag = 'scoped memory for tpu_custom_call.1']
    #allocation9 [shape = 'u8[2048]{0}', space=vmem, size = 0x800, scoped, tag = 'output window, operand 1, single buffered']
    #allocation10 [shape = 'u8[2048]{0}', space=vmem, size = 0x800, scoped, tag = 'output window, operand 2, single buffered']
    #allocation11 [shape = 's32[1]{0}', space=sflag, size = 0x4, scoped, tag = 'scoped memory for tpu_custom_call.1']
    %19 = vsyncpa [#allocation5], 0
    %20 = vsyncpa [#allocation8], 0
    %21 = vsyncpa [#allocation6], 0
    %22 = vsyncpa [#allocation11], 0
    // Predicated region
    $region2: #{tpu_custom_call.1} parent=1 // pred_check
      _
    $region3: #{tpu_custom_call.1} parent=1 // pred_check_branch
      %24 = sbr.rel (0) target = $region5
    $region4: #{tpu_custom_call.1} parent=1 // pred_region
      _
    $region5: #{tpu_custom_call.1} parent=1 // pred_fallthru
      _
    // Predicated region
    $region6: #{tpu_custom_call.1} parent=1 // pred_check
      _
    $region7: #{tpu_custom_call.1} parent=1 // pred_check_branch
      %26 = sbr.rel (0) target = $region9
    $region8: #{tpu_custom_call.1} parent=1 // pred_region
      _
    $region9: #{tpu_custom_call.1} parent=1 // pred_fallthru
      _
    // Predicated region
    $region10: #{tpu_custom_call.1} parent=1 // pred_check
      _
    $region11: #{tpu_custom_call.1} parent=1 // pred_check_branch
      %28 = sbr.rel (0) target = $region13
    $region12: #{tpu_custom_call.1} parent=1 // pred_region
      _
    $region13: #{tpu_custom_call.1} parent=1 // pred_fallthru
      _
    // Predicated region
    $region14: #{tpu_custom_call.1} parent=1 // pred_check
      _
    $region15: #{tpu_custom_call.1} parent=1 // pred_check_branch
      %30 = sbr.rel (0) target = $region17
    $region16: #{tpu_custom_call.1} parent=1 // pred_region
      _
    $region17: #{tpu_custom_call.1} parent=1 // pred_fallthru
      _
    // Predicated region
    $region18: #{tpu_custom_call.1} parent=1 // pred_check
      _
    $region19: #{tpu_custom_call.1} parent=1 // pred_check_branch
      %32 = sbr.rel (0) target = $region21
    $region20: #{tpu_custom_call.1} parent=1 // pred_region
      _
    $region21: #{tpu_custom_call.1} parent=1 // pred_fallthru
      _
    // Predicated region
    $region22: #{tpu_custom_call.1} parent=1 // pred_check
      _
    $region23: #{tpu_custom_call.1} parent=1 // pred_check_branch
      %34 = sbr.rel (0) target = $region25
    $region24: #{tpu_custom_call.1} parent=1 // pred_region
      _
    $region25: #{tpu_custom_call.1} parent=1 // pred_fallthru
      _
    // Predicated region
    $region26: #{tpu_custom_call.1} parent=1 // pred_check
      _
    $region27: #{tpu_custom_call.1} parent=1 // pred_check_branch
      %36 = sbr.rel (0) target = $region29
    $region28: #{tpu_custom_call.1} parent=1 // pred_region
      %38 = vsyncadd [#allocation5], 0
      %s39 = sshll.u32 %s6, 4
      %s40 = int_to_ptr.hbm [resolvable:$true] %s39
      %s41 = sshll.u32 [#allocation4], 4
      %s42 = int_to_ptr.vmem [resolvable:$true] %s41
      %47 = dma.hbm_to_vmem [thread:$0]  %s40, 512, %s42, [#allocation5], 128, 128, 8
    $region29: #{tpu_custom_call.1} parent=1 // pred_fallthru
      _
    // Predicated region
    $region30: #{tpu_custom_call.1} parent=1 // pred_check
      _
    $region31: #{tpu_custom_call.1} parent=1 // pred_check_branch
      %49 = sbr.rel (0) target = $region33
    $region32: #{tpu_custom_call.1} parent=1 // pred_region
      %51 = vsyncadd [#allocation8], 0
      %s52 = sshll.u32 %s7, 4
      %s53 = int_to_ptr.hbm [resolvable:$true] %s52
      %s54 = sshll.u32 [#allocation7], 4
      %s55 = int_to_ptr.vmem [resolvable:$true] %s54
      %60 = dma.hbm_to_vmem [thread:$0]  %s53, 512, %s55, [#allocation8], 128, 128, 8
    $region33: #{tpu_custom_call.1} parent=1 // pred_fallthru
      _
    // Predicated region
    $region34: #{tpu_custom_call.1} parent=1 // pred_check
      _
    $region35: #{tpu_custom_call.1} parent=1 // pred_check_branch
      %62 = sbr.rel (0) target = $region37
    $region36: #{tpu_custom_call.1} parent=1 // pred_region
      _
    $region37: #{tpu_custom_call.1} parent=1 // pred_fallthru
      _
    // Predicated region
    $region38: #{tpu_custom_call.1} parent=1 // pred_check
      _
    $region39: #{tpu_custom_call.1} parent=1 // pred_check_branch
      %64 = sbr.rel (0) target = $region41
    $region40: #{tpu_custom_call.1} parent=1 // pred_region
      _
    $region41: #{tpu_custom_call.1} parent=1 // pred_fallthru
      _
    // Predicated region
    $region42: #{tpu_custom_call.1} parent=1 // pred_check
      _
    $region43: #{tpu_custom_call.1} parent=1 // pred_check_branch
      %66 = sbr.rel (0) target = $region45
    $region44: #{tpu_custom_call.1} parent=1 // pred_region
      _
    $region45: #{tpu_custom_call.1} parent=1 // pred_fallthru
      _
    // Predicated region
    $region46: #{tpu_custom_call.1} parent=1 // pred_check
      _
    $region47: #{tpu_custom_call.1} parent=1 // pred_check_branch
      %68 = sbr.rel (0) target = $region49
    $region48: #{tpu_custom_call.1} parent=1 // pred_region
      %70 = dma.done [#allocation5], 512
    $region49: #{tpu_custom_call.1} parent=1 // pred_fallthru
      _
    // Predicated region
    $region50: #{tpu_custom_call.1} parent=1 // pred_check
      _
    $region51: #{tpu_custom_call.1} parent=1 // pred_check_branch
      %72 = sbr.rel (0) target = $region53
    $region52: #{tpu_custom_call.1} parent=1 // pred_region
      %74 = dma.done [#allocation8], 512
    $region53: #{tpu_custom_call.1} parent=1 // pred_fallthru
      _
    %v75 = vld [vmem:[%s9] sm:$0xff]
    %v76 = vld [vmem:[%s9 + $0x8] sm:$0xff]
    %v77 = vld [vmem:[%s9 + $0x10] sm:$0xff]
    %v78 = vld [vmem:[%s9 + $0x18] sm:$0xff]
    %v79 = vld [vmem:[%s10] sm:$0x1]
    %v80 = vld [vmem:[%s3] sm:$0xf]
    %v81 = vld [vmem:[%s4] sm:$0xff]
    %v82 = vld [vmem:[%s4 + $0x8] sm:$0xff]
    %v83 = vld [vmem:[%s4 + $0x10] sm:$0xff]
    %v84 = vld [vmem:[%s4 + $0x18] sm:$0xff]
    %v85 = vld [vmem:[%s5] sm:$0x1]
    %v86 = vld [vmem:[%s0] sm:$0x3]
    %v88 = vperm.slane %v85, 0
    %vm90 = vcmask 31744
    %v92 = vsel %vm90, %v86, 0
    %vm94 = vcmask 1043456
    %v96 = vsel %vm94, %v80, 0
    %98 = vmatpush.msra.mxu0 0.0
    %99 = vmatpush.msra.mxu0 0.0
    %100 = vmatpush.msra.mxu0 0.0
    %101 = vmatpush.msra.mxu0 0.0
    %102 = vmatpush.msra.mxu0 0.0
    %103 = vmatpush.msra.mxu0 0.0
    %104 = vmatpush.msra.mxu0 0.0
    %105 = vmatpush.msra.mxu0 0.0
    %106 = vmatpush.msra.mxu0 0.0
    %107 = vmatpush.msra.mxu0 0.0
    %108 = vmatpush.msra.mxu0 0.0
    %109 = vmatpush.msra.mxu0 0.0
    %110 = vmatpush.msra.mxu0 0.0
    %111 = vmatpush.msra.mxu0 0.0
    %112 = vmatpush.msra.mxu0 0.0
    %113 = vmatpush.msra.mxu0 %v96
    %114 = vmatmul.f32.gmra.mxu0 %v92
    %v115 = vpop.f32.mrf.mxu0
    %v116 = vadd.f32 %v88, %v115
    %117 = vdwg.mxu0
    %118 = vst [vmem:[#allocation2] sm:$0x3] %v116
    %s119 = scalar_lea.vmem %s0, 2
    %v120 = vld [vmem:[%s119] sm:$0x3]
    %v122 = vsel %vm90, %v120, 0
    %124 = vmatpush.msra.mxu0 0.0
    %125 = vmatpush.msra.mxu0 0.0
    %126 = vmatpush.msra.mxu0 0.0
    %127 = vmatpush.msra.mxu0 0.0
    %128 = vmatpush.msra.mxu0 0.0
    %129 = vmatpush.msra.mxu0 0.0
    %130 = vmatpush.msra.mxu0 0.0
    %131 = vmatpush.msra.mxu0 0.0
    %132 = vmatpush.msra.mxu0 0.0
    %133 = vmatpush.msra.mxu0 0.0
    %134 = vmatpush.msra.mxu0 0.0
    %135 = vmatpush.msra.mxu0 0.0
    %136 = vmatpush.msra.mxu0 0.0
    %137 = vmatpush.msra.mxu0 0.0
    %138 = vmatpush.msra.mxu0 0.0
    %139 = vmatpush.msra.mxu0 %v96
    %140 = vmatmul.f32.gmra.mxu0 %v122
    %v141 = vpop.f32.mrf.mxu0
    %v142 = vadd.f32 %v88, %v141
    %143 = vdwg.mxu0
    %s144 = scalar_lea.vmem [#allocation2], 2
    %145 = vst [vmem:[%s144] sm:$0x3] %v142
    %s146 = scalar_lea.vmem %s0, 4
    %v147 = vld [vmem:[%s146] sm:$0x3]
    %v149 = vsel %vm90, %v147, 0
    %151 = vmatpush.msra.mxu0 0.0
    %152 = vmatpush.msra.mxu0 0.0
    %153 = vmatpush.msra.mxu0 0.0
    %154 = vmatpush.msra.mxu0 0.0
    %155 = vmatpush.msra.mxu0 0.0
    %156 = vmatpush.msra.mxu0 0.0
    %157 = vmatpush.msra.mxu0 0.0
    %158 = vmatpush.msra.mxu0 0.0
    %159 = vmatpush.msra.mxu0 0.0
    %160 = vmatpush.msra.mxu0 0.0
    %161 = vmatpush.msra.mxu0 0.0
    %162 = vmatpush.msra.mxu0 0.0
    %163 = vmatpush.msra.mxu0 0.0
    %164 = vmatpush.msra.mxu0 0.0
    %165 = vmatpush.msra.mxu0 0.0
    %166 = vmatpush.msra.mxu0 %v96
    %167 = vmatmul.f32.gmra.mxu0 %v149
    %v168 = vpop.f32.mrf.mxu0
    %v169 = vadd.f32 %v88, %v168
    %170 = vdwg.mxu0
    %s171 = scalar_lea.vmem [#allocation2], 4
    %172 = vst [vmem:[%s171] sm:$0x3] %v169
    %s173 = scalar_lea.vmem %s0, 6
    %v174 = vld [vmem:[%s173] sm:$0x3]
    %v176 = vsel %vm90, %v174, 0
    %178 = vmatpush.msra.mxu0 0.0
    %179 = vmatpush.msra.mxu0 0.0
    %180 = vmatpush.msra.mxu0 0.0
    %181 = vmatpush.msra.mxu0 0.0
    %182 = vmatpush.msra.mxu0 0.0
    %183 = vmatpush.msra.mxu0 0.0
    %184 = vmatpush.msra.mxu0 0.0
    %185 = vmatpush.msra.mxu0 0.0
    %186 = vmatpush.msra.mxu0 0.0
    %187 = vmatpush.msra.mxu0 0.0
    %188 = vmatpush.msra.mxu0 0.0
    %189 = vmatpush.msra.mxu0 0.0
    %190 = vmatpush.msra.mxu0 0.0
    %191 = vmatpush.msra.mxu0 0.0
    %192 = vmatpush.msra.mxu0 0.0
    %193 = vmatpush.msra.mxu0 %v96
    %194 = vmatmul.f32.gmra.mxu0 %v176
    %v195 = vpop.f32.mrf.mxu0
    %v196 = vadd.f32 %v88, %v195
    %197 = vdwg.mxu0
    %s198 = scalar_lea.vmem [#allocation2], 6
    %199 = vst [vmem:[%s198] sm:$0x3] %v196
    %s200 = scalar_lea.vmem %s0, 8
    %v201 = vld [vmem:[%s200] sm:$0x3]
    %v203 = vsel %vm90, %v201, 0
    %205 = vmatpush.msra.mxu0 0.0
    %206 = vmatpush.msra.mxu0 0.0
    %207 = vmatpush.msra.mxu0 0.0
    %208 = vmatpush.msra.mxu0 0.0
    %209 = vmatpush.msra.mxu0 0.0
    %210 = vmatpush.msra.mxu0 0.0
    %211 = vmatpush.msra.mxu0 0.0
    %212 = vmatpush.msra.mxu0 0.0
    %213 = vmatpush.msra.mxu0 0.0
    %214 = vmatpush.msra.mxu0 0.0
    %215 = vmatpush.msra.mxu0 0.0
    %216 = vmatpush.msra.mxu0 0.0
    %217 = vmatpush.msra.mxu0 0.0
    %218 = vmatpush.msra.mxu0 0.0
    %219 = vmatpush.msra.mxu0 0.0
    %220 = vmatpush.msra.mxu0 %v96
    %221 = vmatmul.f32.gmra.mxu0 %v203
    %v222 = vpop.f32.mrf.mxu0
    %v223 = vadd.f32 %v88, %v222
    %224 = vdwg.mxu0
    %s225 = scalar_lea.vmem [#allocation2], 8
    %226 = vst [vmem:[%s225] sm:$0x3] %v223
    %s227 = scalar_lea.vmem %s0, 10
    %v228 = vld [vmem:[%s227] sm:$0x3]
    %v230 = vsel %vm90, %v228, 0
    %232 = vmatpush.msra.mxu0 0.0
    %233 = vmatpush.msra.mxu0 0.0
    %234 = vmatpush.msra.mxu0 0.0
    %235 = vmatpush.msra.mxu0 0.0
    %236 = vmatpush.msra.mxu0 0.0
    %237 = vmatpush.msra.mxu0 0.0
    %238 = vmatpush.msra.mxu0 0.0
    %239 = vmatpush.msra.mxu0 0.0
    %240 = vmatpush.msra.mxu0 0.0
    %241 = vmatpush.msra.mxu0 0.0
    %242 = vmatpush.msra.mxu0 0.0
    %243 = vmatpush.msra.mxu0 0.0
    %244 = vmatpush.msra.mxu0 0.0
    %245 = vmatpush.msra.mxu0 0.0
    %246 = vmatpush.msra.mxu0 0.0
    %247 = vmatpush.msra.mxu0 %v96
    %248 = vmatmul.f32.gmra.mxu0 %v230
    %v249 = vpop.f32.mrf.mxu0
    %v250 = vadd.f32 %v88, %v249
    %251 = vdwg.mxu0
    %s252 = scalar_lea.vmem [#allocation2], 10
    %253 = vst [vmem:[%s252] sm:$0x3] %v250
    %s254 = scalar_lea.vmem %s0, 12
    %v255 = vld [vmem:[%s254] sm:$0x3]
    %v257 = vsel %vm90, %v255, 0
    %259 = vmatpush.msra.mxu0 0.0
    %260 = vmatpush.msra.mxu0 0.0
    %261 = vmatpush.msra.mxu0 0.0
    %262 = vmatpush.msra.mxu0 0.0
    %263 = vmatpush.msra.mxu0 0.0
    %264 = vmatpush.msra.mxu0 0.0
    %265 = vmatpush.msra.mxu0 0.0
    %266 = vmatpush.msra.mxu0 0.0
    %267 = vmatpush.msra.mxu0 0.0
    %268 = vmatpush.msra.mxu0 0.0
    %269 = vmatpush.msra.mxu0 0.0
    %270 = vmatpush.msra.mxu0 0.0
    %271 = vmatpush.msra.mxu0 0.0
    %272 = vmatpush.msra.mxu0 0.0
    %273 = vmatpush.msra.mxu0 0.0
    %274 = vmatpush.msra.mxu0 %v96
    %275 = vmatmul.f32.gmra.mxu0 %v257
    %v276 = vpop.f32.mrf.mxu0
    %v277 = vadd.f32 %v88, %v276
    %278 = vdwg.mxu0
    %s279 = scalar_lea.vmem [#allocation2], 12
    %280 = vst [vmem:[%s279] sm:$0x3] %v277
    %s281 = scalar_lea.vmem %s0, 14
    %v282 = vld [vmem:[%s281] sm:$0x3]
    %v284 = vsel %vm90, %v282, 0
    %286 = vmatpush.msra.mxu0 0.0
    %287 = vmatpush.msra.mxu0 0.0
    %288 = vmatpush.msra.mxu0 0.0
    %289 = vmatpush.msra.mxu0 0.0
    %290 = vmatpush.msra.mxu0 0.0
    %291 = vmatpush.msra.mxu0 0.0
    %292 = vmatpush.msra.mxu0 0.0
    %293 = vmatpush.msra.mxu0 0.0
    %294 = vmatpush.msra.mxu0 0.0
    %295 = vmatpush.msra.mxu0 0.0
    %296 = vmatpush.msra.mxu0 0.0
    %297 = vmatpush.msra.mxu0 0.0
    %298 = vmatpush.msra.mxu0 0.0
    %299 = vmatpush.msra.mxu0 0.0
    %300 = vmatpush.msra.mxu0 0.0
    %301 = vmatpush.msra.mxu0 %v96
    %302 = vmatmul.f32.gmra.mxu0 %v284
    %v303 = vpop.f32.mrf.mxu0
    %v304 = vadd.f32 %v88, %v303
    %305 = vdwg.mxu0
    %s306 = scalar_lea.vmem [#allocation2], 14
    %307 = vst [vmem:[%s306] sm:$0x3] %v304
    %v308 = vld [vmem:[%s1] sm:$0x3]
    %v309 = vld [vmem:[%s2] sm:$0x3]
    %v310 = vld [vmem:[#allocation2] sm:$0x3]
    %vm311 = vcmask 261120
    %v313 = vsel %vm311, %v308, 0
    %315 = vmatpush.msra.mxu0 0.0
    %316 = vmatpush.msra.mxu0 0.0
    %317 = vmatpush.msra.mxu0 0.0
    %318 = vmatpush.msra.mxu0 0.0
    %319 = vmatpush.msra.mxu0 0.0
    %320 = vmatpush.msra.mxu0 0.0
    %321 = vmatpush.msra.mxu0 0.0
    %322 = vmatpush.msra.mxu0 0.0
    %323 = vmatpush.msra.mxu0 0.0
    %324 = vmatpush.msra.mxu0 0.0
    %325 = vmatpush.msra.mxu0 0.0
    %326 = vmatpush.msra.mxu0 0.0
    %327 = vmatpush.msra.mxu0 %v84
    %328 = vmatpush.msra.mxu0 %v83
    %329 = vmatpush.msra.mxu0 %v82
    %330 = vmatpush.msra.mxu0 %v81
    %331 = vmatmul.f32.gmra.mxu0 %v313
    %v332 = vpop.f32.mrf.mxu0
    %v333 = vadd.f32 0.0, %v332
    %334 = vdwg.mxu0
    %v335 = vadd.f32 %v310, %v333
    %v336 = vxor.u32 %v335, 2147483648
    %v337 = vmul.f32 %v336, 1.442695
    %v338 = vpow.pop %v337
    %v339 = vadd.f32 %v338, 1.0
    %v340 = vrcp.pop %v339
    %v341 = vmul.f32 %v339, %v340
    %v342 = vsub.f32 1.0, %v341
    %v343 = vmul.f32 %v340, %v342
    %v344 = vadd.f32 %v340, %v343
    %vm345 = vweird.f32 %v339
    %vm346 = vweird.f32 %v340
    %vm347 = vmor %vm345, %vm346
    %v348 = vsel %vm347, %v340, %v344
    %v349 = vand.u32 2147483647, %v339
    %vm350 = vcmp.eq.f32.partialorder %v349, 8.507059e+37
    %v351 = vand.u32 %v339, 2147483648
    %v352 = vor.u32 1.1754944e-38, %v351
    %v353 = vsel %vm350, %v352, %v348
    %v354 = vmul.f32 1.0, %v353
    %v355 = vtanh.pop %v335
    %357 = vrot.lane.b32.xlu0 %v309, 32
    %v358 = vpop.permute.xlu0 %357
    %v360 = vmul.f32 %v354, %v358
    %362 = vrot.lane.b32.xlu0 %v355, 64
    %v363 = vpop.permute.xlu0 %362
    %v365 = vmul.f32 %v354, %v363
    %367 = vrot.lane.b32.xlu0 %v365, 32
    %v368 = vpop.permute.xlu0 %367
    %v370 = vadd.f32 %v360, %v368
    %v371 = vtanh.pop %v370
    %373 = vrot.lane.b32.xlu0 %v371, 64
    %v374 = vpop.permute.xlu0 %373
    %v376 = vmul.f32 %v354, %v374
    %378 = vrot.lane.b32.xlu0 %v376, 32
    %v379 = vpop.permute.xlu0 %378
    %vm381 = vcmask 254976
    %382 = vst.msk [vmem:[#allocation3] sm:$0x3] %vm381, %v379
    %v383 = vld [vmem:[%s144] sm:$0x3]
    %v384 = vsel %vm311, %v379, 0
    %386 = vmatpush.msra.mxu0 0.0
    %387 = vmatpush.msra.mxu0 0.0
    %388 = vmatpush.msra.mxu0 0.0
    %389 = vmatpush.msra.mxu0 0.0
    %390 = vmatpush.msra.mxu0 0.0
    %391 = vmatpush.msra.mxu0 0.0
    %392 = vmatpush.msra.mxu0 0.0
    %393 = vmatpush.msra.mxu0 0.0
    %394 = vmatpush.msra.mxu0 0.0
    %395 = vmatpush.msra.mxu0 0.0
    %396 = vmatpush.msra.mxu0 0.0
    %397 = vmatpush.msra.mxu0 0.0
    %398 = vmatpush.msra.mxu0 %v84
    %399 = vmatpush.msra.mxu0 %v83
    %400 = vmatpush.msra.mxu0 %v82
    %401 = vmatpush.msra.mxu0 %v81
    %402 = vmatmul.f32.gmra.mxu0 %v384
    %v403 = vpop.f32.mrf.mxu0
    %v404 = vadd.f32 0.0, %v403
    %405 = vdwg.mxu0
    %v406 = vadd.f32 %v383, %v404
    %v407 = vxor.u32 %v406, 2147483648
    %v408 = vmul.f32 %v407, 1.442695
    %v409 = vpow.pop %v408
    %v410 = vadd.f32 %v409, 1.0
    %v411 = vrcp.pop %v410
    %v412 = vmul.f32 %v410, %v411
    %v413 = vsub.f32 1.0, %v412
    %v414 = vmul.f32 %v411, %v413
    %v415 = vadd.f32 %v411, %v414
    %vm416 = vweird.f32 %v410
    %vm417 = vweird.f32 %v411
    %vm418 = vmor %vm416, %vm417
    %v419 = vsel %vm418, %v411, %v415
    %v420 = vand.u32 2147483647, %v410
    %vm421 = vcmp.eq.f32.partialorder %v420, 8.507059e+37
    %v422 = vand.u32 %v410, 2147483648
    %v423 = vor.u32 1.1754944e-38, %v422
    %v424 = vsel %vm421, %v423, %v419
    %v425 = vmul.f32 1.0, %v424
    %v426 = vtanh.pop %v406
    %v427 = vmul.f32 %v425, %v370
    %429 = vrot.lane.b32.xlu0 %v426, 64
    %v430 = vpop.permute.xlu0 %429
    %v432 = vmul.f32 %v425, %v430
    %434 = vrot.lane.b32.xlu0 %v432, 32
    %v435 = vpop.permute.xlu0 %434
    %v437 = vadd.f32 %v427, %v435
    %v438 = vtanh.pop %v437
    %440 = vrot.lane.b32.xlu0 %v438, 64
    %v441 = vpop.permute.xlu0 %440
    %v443 = vmul.f32 %v425, %v441
    %445 = vrot.lane.b32.xlu0 %v443, 32
    %v446 = vpop.permute.xlu0 %445
    %s448 = scalar_lea.vmem [#allocation3], 2
    %449 = vst.msk [vmem:[%s448] sm:$0x3] %vm381, %v446
    %v450 = vld [vmem:[%s171] sm:$0x3]
    %v451 = vsel %vm311, %v446, 0
    %453 = vmatpush.msra.mxu0 0.0
    %454 = vmatpush.msra.mxu0 0.0
    %455 = vmatpush.msra.mxu0 0.0
    %456 = vmatpush.msra.mxu0 0.0
    %457 = vmatpush.msra.mxu0 0.0
    %458 = vmatpush.msra.mxu0 0.0
    %459 = vmatpush.msra.mxu0 0.0
    %460 = vmatpush.msra.mxu0 0.0
    %461 = vmatpush.msra.mxu0 0.0
    %462 = vmatpush.msra.mxu0 0.0
    %463 = vmatpush.msra.mxu0 0.0
    %464 = vmatpush.msra.mxu0 0.0
    %465 = vmatpush.msra.mxu0 %v84
    %466 = vmatpush.msra.mxu0 %v83
    %467 = vmatpush.msra.mxu0 %v82
    %468 = vmatpush.msra.mxu0 %v81
    %469 = vmatmul.f32.gmra.mxu0 %v451
    %v470 = vpop.f32.mrf.mxu0
    %v471 = vadd.f32 0.0, %v470
    %472 = vdwg.mxu0
    %v473 = vadd.f32 %v450, %v471
    %v474 = vxor.u32 %v473, 2147483648
    %v475 = vmul.f32 %v474, 1.442695
    %v476 = vpow.pop %v475
    %v477 = vadd.f32 %v476, 1.0
    %v478 = vrcp.pop %v477
    %v479 = vmul.f32 %v477, %v478
    %v480 = vsub.f32 1.0, %v479
    %v481 = vmul.f32 %v478, %v480
    %v482 = vadd.f32 %v478, %v481
    %vm483 = vweird.f32 %v477
    %vm484 = vweird.f32 %v478
    %vm485 = vmor %vm483, %vm484
    %v486 = vsel %vm485, %v478, %v482
    %v487 = vand.u32 2147483647, %v477
    %vm488 = vcmp.eq.f32.partialorder %v487, 8.507059e+37
    %v489 = vand.u32 %v477, 2147483648
    %v490 = vor.u32 1.1754944e-38, %v489
    %v491 = vsel %vm488, %v490, %v486
    %v492 = vmul.f32 1.0, %v491
    %v493 = vtanh.pop %v473
    %v494 = vmul.f32 %v492, %v437
    %496 = vrot.lane.b32.xlu0 %v493, 64
    %v497 = vpop.permute.xlu0 %496
    %v499 = vmul.f32 %v492, %v497
    %501 = vrot.lane.b32.xlu0 %v499, 32
    %v502 = vpop.permute.xlu0 %501
    %v504 = vadd.f32 %v494, %v502
    %v505 = vtanh.pop %v504
    %507 = vrot.lane.b32.xlu0 %v505, 64
    %v508 = vpop.permute.xlu0 %507
    %v510 = vmul.f32 %v492, %v508
    %512 = vrot.lane.b32.xlu0 %v510, 32
    %v513 = vpop.permute.xlu0 %512
    %s515 = scalar_lea.vmem [#allocation3], 4
    %516 = vst.msk [vmem:[%s515] sm:$0x3] %vm381, %v513
    %v517 = vld [vmem:[%s198] sm:$0x3]
    %v518 = vsel %vm311, %v513, 0
    %520 = vmatpush.msra.mxu0 0.0
    %521 = vmatpush.msra.mxu0 0.0
    %522 = vmatpush.msra.mxu0 0.0
    %523 = vmatpush.msra.mxu0 0.0
    %524 = vmatpush.msra.mxu0 0.0
    %525 = vmatpush.msra.mxu0 0.0
    %526 = vmatpush.msra.mxu0 0.0
    %527 = vmatpush.msra.mxu0 0.0
    %528 = vmatpush.msra.mxu0 0.0
    %529 = vmatpush.msra.mxu0 0.0
    %530 = vmatpush.msra.mxu0 0.0
    %531 = vmatpush.msra.mxu0 0.0
    %532 = vmatpush.msra.mxu0 %v84
    %533 = vmatpush.msra.mxu0 %v83
    %534 = vmatpush.msra.mxu0 %v82
    %535 = vmatpush.msra.mxu0 %v81
    %536 = vmatmul.f32.gmra.mxu0 %v518
    %v537 = vpop.f32.mrf.mxu0
    %v538 = vadd.f32 0.0, %v537
    %539 = vdwg.mxu0
    %v540 = vadd.f32 %v517, %v538
    %v541 = vxor.u32 %v540, 2147483648
    %v542 = vmul.f32 %v541, 1.442695
    %v543 = vpow.pop %v542
    %v544 = vadd.f32 %v543, 1.0
    %v545 = vrcp.pop %v544
    %v546 = vmul.f32 %v544, %v545
    %v547 = vsub.f32 1.0, %v546
    %v548 = vmul.f32 %v545, %v547
    %v549 = vadd.f32 %v545, %v548
    %vm550 = vweird.f32 %v544
    %vm551 = vweird.f32 %v545
    %vm552 = vmor %vm550, %vm551
    %v553 = vsel %vm552, %v545, %v549
    %v554 = vand.u32 2147483647, %v544
    %vm555 = vcmp.eq.f32.partialorder %v554, 8.507059e+37
    %v556 = vand.u32 %v544, 2147483648
    %v557 = vor.u32 1.1754944e-38, %v556
    %v558 = vsel %vm555, %v557, %v553
    %v559 = vmul.f32 1.0, %v558
    %v560 = vtanh.pop %v540
    %v561 = vmul.f32 %v559, %v504
    %563 = vrot.lane.b32.xlu0 %v560, 64
    %v564 = vpop.permute.xlu0 %563
    %v566 = vmul.f32 %v559, %v564
    %568 = vrot.lane.b32.xlu0 %v566, 32
    %v569 = vpop.permute.xlu0 %568
    %v571 = vadd.f32 %v561, %v569
    %v572 = vtanh.pop %v571
    %574 = vrot.lane.b32.xlu0 %v572, 64
    %v575 = vpop.permute.xlu0 %574
    %v577 = vmul.f32 %v559, %v575
    %579 = vrot.lane.b32.xlu0 %v577, 32
    %v580 = vpop.permute.xlu0 %579
    %s582 = scalar_lea.vmem [#allocation3], 6
    %583 = vst.msk [vmem:[%s582] sm:$0x3] %vm381, %v580
    %v584 = vld [vmem:[%s225] sm:$0x3]
    %v585 = vsel %vm311, %v580, 0
    %587 = vmatpush.msra.mxu0 0.0
    %588 = vmatpush.msra.mxu0 0.0
    %589 = vmatpush.msra.mxu0 0.0
    %590 = vmatpush.msra.mxu0 0.0
    %591 = vmatpush.msra.mxu0 0.0
    %592 = vmatpush.msra.mxu0 0.0
    %593 = vmatpush.msra.mxu0 0.0
    %594 = vmatpush.msra.mxu0 0.0
    %595 = vmatpush.msra.mxu0 0.0
    %596 = vmatpush.msra.mxu0 0.0
    %597 = vmatpush.msra.mxu0 0.0
    %598 = vmatpush.msra.mxu0 0.0
    %599 = vmatpush.msra.mxu0 %v84
    %600 = vmatpush.msra.mxu0 %v83
    %601 = vmatpush.msra.mxu0 %v82
    %602 = vmatpush.msra.mxu0 %v81
    %603 = vmatmul.f32.gmra.mxu0 %v585
    %v604 = vpop.f32.mrf.mxu0
    %v605 = vadd.f32 0.0, %v604
    %606 = vdwg.mxu0
    %v607 = vadd.f32 %v584, %v605
    %v608 = vxor.u32 %v607, 2147483648
    %v609 = vmul.f32 %v608, 1.442695
    %v610 = vpow.pop %v609
    %v611 = vadd.f32 %v610, 1.0
    %v612 = vrcp.pop %v611
    %v613 = vmul.f32 %v611, %v612
    %v614 = vsub.f32 1.0, %v613
    %v615 = vmul.f32 %v612, %v614
    %v616 = vadd.f32 %v612, %v615
    %vm617 = vweird.f32 %v611
    %vm618 = vweird.f32 %v612
    %vm619 = vmor %vm617, %vm618
    %v620 = vsel %vm619, %v612, %v616
    %v621 = vand.u32 2147483647, %v611
    %vm622 = vcmp.eq.f32.partialorder %v621, 8.507059e+37
    %v623 = vand.u32 %v611, 2147483648
    %v624 = vor.u32 1.1754944e-38, %v623
    %v625 = vsel %vm622, %v624, %v620
    %v626 = vmul.f32 1.0, %v625
    %v627 = vtanh.pop %v607
    %v628 = vmul.f32 %v626, %v571
    %630 = vrot.lane.b32.xlu0 %v627, 64
    %v631 = vpop.permute.xlu0 %630
    %v633 = vmul.f32 %v626, %v631
    %635 = vrot.lane.b32.xlu0 %v633, 32
    %v636 = vpop.permute.xlu0 %635
    %v638 = vadd.f32 %v628, %v636
    %v639 = vtanh.pop %v638
    %641 = vrot.lane.b32.xlu0 %v639, 64
    %v642 = vpop.permute.xlu0 %641
    %v644 = vmul.f32 %v626, %v642
    %646 = vrot.lane.b32.xlu0 %v644, 32
    %v647 = vpop.permute.xlu0 %646
    %s649 = scalar_lea.vmem [#allocation3], 8
    %650 = vst.msk [vmem:[%s649] sm:$0x3] %vm381, %v647
    %v651 = vld [vmem:[%s252] sm:$0x3]
    %v652 = vsel %vm311, %v647, 0
    %654 = vmatpush.msra.mxu0 0.0
    %655 = vmatpush.msra.mxu0 0.0
    %656 = vmatpush.msra.mxu0 0.0
    %657 = vmatpush.msra.mxu0 0.0
    %658 = vmatpush.msra.mxu0 0.0
    %659 = vmatpush.msra.mxu0 0.0
    %660 = vmatpush.msra.mxu0 0.0
    %661 = vmatpush.msra.mxu0 0.0
    %662 = vmatpush.msra.mxu0 0.0
    %663 = vmatpush.msra.mxu0 0.0
    %664 = vmatpush.msra.mxu0 0.0
    %665 = vmatpush.msra.mxu0 0.0
    %666 = vmatpush.msra.mxu0 %v84
    %667 = vmatpush.msra.mxu0 %v83
    %668 = vmatpush.msra.mxu0 %v82
    %669 = vmatpush.msra.mxu0 %v81
    %670 = vmatmul.f32.gmra.mxu0 %v652
    %v671 = vpop.f32.mrf.mxu0
    %v672 = vadd.f32 0.0, %v671
    %673 = vdwg.mxu0
    %v674 = vadd.f32 %v651, %v672
    %v675 = vxor.u32 %v674, 2147483648
    %v676 = vmul.f32 %v675, 1.442695
    %v677 = vpow.pop %v676
    %v678 = vadd.f32 %v677, 1.0
    %v679 = vrcp.pop %v678
    %v680 = vmul.f32 %v678, %v679
    %v681 = vsub.f32 1.0, %v680
    %v682 = vmul.f32 %v679, %v681
    %v683 = vadd.f32 %v679, %v682
    %vm684 = vweird.f32 %v678
    %vm685 = vweird.f32 %v679
    %vm686 = vmor %vm684, %vm685
    %v687 = vsel %vm686, %v679, %v683
    %v688 = vand.u32 2147483647, %v678
    %vm689 = vcmp.eq.f32.partialorder %v688, 8.507059e+37
    %v690 = vand.u32 %v678, 2147483648
    %v691 = vor.u32 1.1754944e-38, %v690
    %v692 = vsel %vm689, %v691, %v687
    %v693 = vmul.f32 1.0, %v692
    %v694 = vtanh.pop %v674
    %v695 = vmul.f32 %v693, %v638
    %697 = vrot.lane.b32.xlu0 %v694, 64
    %v698 = vpop.permute.xlu0 %697
    %v700 = vmul.f32 %v693, %v698
    %702 = vrot.lane.b32.xlu0 %v700, 32
    %v703 = vpop.permute.xlu0 %702
    %v705 = vadd.f32 %v695, %v703
    %v706 = vtanh.pop %v705
    %708 = vrot.lane.b32.xlu0 %v706, 64
    %v709 = vpop.permute.xlu0 %708
    %v711 = vmul.f32 %v693, %v709
    %713 = vrot.lane.b32.xlu0 %v711, 32
    %v714 = vpop.permute.xlu0 %713
    %s716 = scalar_lea.vmem [#allocation3], 10
    %717 = vst.msk [vmem:[%s716] sm:$0x3] %vm381, %v714
    %v718 = vld [vmem:[%s279] sm:$0x3]
    %v719 = vsel %vm311, %v714, 0
    %721 = vmatpush.msra.mxu0 0.0
    %722 = vmatpush.msra.mxu0 0.0
    %723 = vmatpush.msra.mxu0 0.0
    %724 = vmatpush.msra.mxu0 0.0
    %725 = vmatpush.msra.mxu0 0.0
    %726 = vmatpush.msra.mxu0 0.0
    %727 = vmatpush.msra.mxu0 0.0
    %728 = vmatpush.msra.mxu0 0.0
    %729 = vmatpush.msra.mxu0 0.0
    %730 = vmatpush.msra.mxu0 0.0
    %731 = vmatpush.msra.mxu0 0.0
    %732 = vmatpush.msra.mxu0 0.0
    %733 = vmatpush.msra.mxu0 %v84
    %734 = vmatpush.msra.mxu0 %v83
    %735 = vmatpush.msra.mxu0 %v82
    %736 = vmatpush.msra.mxu0 %v81
    %737 = vmatmul.f32.gmra.mxu0 %v719
    %v738 = vpop.f32.mrf.mxu0
    %v739 = vadd.f32 0.0, %v738
    %740 = vdwg.mxu0
    %v741 = vadd.f32 %v718, %v739
    %v742 = vxor.u32 %v741, 2147483648
    %v743 = vmul.f32 %v742, 1.442695
    %v744 = vpow.pop %v743
    %v745 = vadd.f32 %v744, 1.0
    %v746 = vrcp.pop %v745
    %v747 = vmul.f32 %v745, %v746
    %v748 = vsub.f32 1.0, %v747
    %v749 = vmul.f32 %v746, %v748
    %v750 = vadd.f32 %v746, %v749
    %vm751 = vweird.f32 %v745
    %vm752 = vweird.f32 %v746
    %vm753 = vmor %vm751, %vm752
    %v754 = vsel %vm753, %v746, %v750
    %v755 = vand.u32 2147483647, %v745
    %vm756 = vcmp.eq.f32.partialorder %v755, 8.507059e+37
    %v757 = vand.u32 %v745, 2147483648
    %v758 = vor.u32 1.1754944e-38, %v757
    %v759 = vsel %vm756, %v758, %v754
    %v760 = vmul.f32 1.0, %v759
    %v761 = vtanh.pop %v741
    %v762 = vmul.f32 %v760, %v705
    %764 = vrot.lane.b32.xlu0 %v761, 64
    %v765 = vpop.permute.xlu0 %764
    %v767 = vmul.f32 %v760, %v765
    %769 = vrot.lane.b32.xlu0 %v767, 32
    %v770 = vpop.permute.xlu0 %769
    %v772 = vadd.f32 %v762, %v770
    %v773 = vtanh.pop %v772
    %775 = vrot.lane.b32.xlu0 %v773, 64
    %v776 = vpop.permute.xlu0 %775
    %v778 = vmul.f32 %v760, %v776
    %780 = vrot.lane.b32.xlu0 %v778, 32
    %v781 = vpop.permute.xlu0 %780
    %s783 = scalar_lea.vmem [#allocation3], 12
    %784 = vst.msk [vmem:[%s783] sm:$0x3] %vm381, %v781
    %v785 = vld [vmem:[%s306] sm:$0x3]
    %v786 = vsel %vm311, %v781, 0
    %788 = vmatpush.msra.mxu0 0.0
    %789 = vmatpush.msra.mxu0 0.0
    %790 = vmatpush.msra.mxu0 0.0
    %791 = vmatpush.msra.mxu0 0.0
    %792 = vmatpush.msra.mxu0 0.0
    %793 = vmatpush.msra.mxu0 0.0
    %794 = vmatpush.msra.mxu0 0.0
    %795 = vmatpush.msra.mxu0 0.0
    %796 = vmatpush.msra.mxu0 0.0
    %797 = vmatpush.msra.mxu0 0.0
    %798 = vmatpush.msra.mxu0 0.0
    %799 = vmatpush.msra.mxu0 0.0
    %800 = vmatpush.msra.mxu0 %v84
    %801 = vmatpush.msra.mxu0 %v83
    %802 = vmatpush.msra.mxu0 %v82
    %803 = vmatpush.msra.mxu0 %v81
    %804 = vmatmul.f32.gmra.mxu0 %v786
    %v805 = vpop.f32.mrf.mxu0
    %v806 = vadd.f32 0.0, %v805
    %807 = vdwg.mxu0
    %v808 = vadd.f32 %v785, %v806
    %v809 = vxor.u32 %v808, 2147483648
    %v810 = vmul.f32 %v809, 1.442695
    %v811 = vpow.pop %v810
    %v812 = vadd.f32 %v811, 1.0
    %v813 = vrcp.pop %v812
    %v814 = vmul.f32 %v812, %v813
    %v815 = vsub.f32 1.0, %v814
    %v816 = vmul.f32 %v813, %v815
    %v817 = vadd.f32 %v813, %v816
    %vm818 = vweird.f32 %v812
    %vm819 = vweird.f32 %v813
    %vm820 = vmor %vm818, %vm819
    %v821 = vsel %vm820, %v813, %v817
    %v822 = vand.u32 2147483647, %v812
    %vm823 = vcmp.eq.f32.partialorder %v822, 8.507059e+37
    %v824 = vand.u32 %v812, 2147483648
    %v825 = vor.u32 1.1754944e-38, %v824
    %v826 = vsel %vm823, %v825, %v821
    %v827 = vmul.f32 1.0, %v826
    %v828 = vtanh.pop %v808
    %v829 = vmul.f32 %v827, %v772
    %831 = vrot.lane.b32.xlu0 %v828, 64
    %v832 = vpop.permute.xlu0 %831
    %v834 = vmul.f32 %v827, %v832
    %836 = vrot.lane.b32.xlu0 %v834, 32
    %v837 = vpop.permute.xlu0 %836
    %v839 = vadd.f32 %v829, %v837
    %v840 = vtanh.pop %v839
    %842 = vrot.lane.b32.xlu0 %v840, 64
    %v843 = vpop.permute.xlu0 %842
    %v845 = vmul.f32 %v827, %v843
    %847 = vrot.lane.b32.xlu0 %v845, 32
    %v848 = vpop.permute.xlu0 %847
    %s850 = scalar_lea.vmem [#allocation3], 14
    %851 = vst.msk [vmem:[%s850] sm:$0x3] %vm381, %v848
    %852 = vst.msk [vmem:[#allocation9] sm:$0x3] %vm381, %v848
    %854 = vrot.lane.b32.xlu0 %v839, 96
    %v855 = vpop.permute.xlu0 %854
    %857 = vst.msk [vmem:[#allocation10] sm:$0x3] %vm381, %v855
    %v858 = vld [vmem:[#allocation4] sm:$0xff]
    %v859 = vld [vmem:[#allocation4 + $0x8] sm:$0xff]
    %v860 = vld [vmem:[#allocation4 + $0x10] sm:$0xff]
    %v861 = vld [vmem:[#allocation4 + $0x18] sm:$0xff]
    %v862 = vld [vmem:[#allocation7] sm:$0xff]
    %v863 = vld [vmem:[#allocation7 + $0x8] sm:$0xff]
    %v864 = vld [vmem:[#allocation7 + $0x10] sm:$0xff]
    %v865 = vld [vmem:[#allocation7 + $0x18] sm:$0xff]
    %v866 = vld [vmem:[%s8] sm:$0x1]
    %v867 = vld [vmem:[#allocation3] sm:$0x3]
    %v869 = vperm.slane %v866, 0
    %v872 = vsel %vm311, %v867, 0
    %874 = vmatpush.msra.mxu0 0.0
    %875 = vmatpush.msra.mxu0 0.0
    %876 = vmatpush.msra.mxu0 0.0
    %877 = vmatpush.msra.mxu0 0.0
    %878 = vmatpush.msra.mxu0 0.0
    %879 = vmatpush.msra.mxu0 0.0
    %880 = vmatpush.msra.mxu0 0.0
    %881 = vmatpush.msra.mxu0 0.0
    %882 = vmatpush.msra.mxu0 0.0
    %883 = vmatpush.msra.mxu0 0.0
    %884 = vmatpush.msra.mxu0 0.0
    %885 = vmatpush.msra.mxu0 0.0
    %886 = vmatpush.msra.mxu0 %v861
    %887 = vmatpush.msra.mxu0 %v860
    %888 = vmatpush.msra.mxu0 %v859
    %889 = vmatpush.msra.mxu0 %v858
    %890 = vmatmul.f32.gmra.mxu0 %v872
    %v891 = vpop.f32.mrf.mxu0
    %v892 = vadd.f32 %v869, %v891
    %893 = vdwg.mxu0
    %894 = vst [vmem:[#allocation2] sm:$0x3] %v892
    %v895 = vld [vmem:[%s448] sm:$0x3]
    %v897 = vsel %vm311, %v895, 0
    %899 = vmatpush.msra.mxu0 0.0
    %900 = vmatpush.msra.mxu0 0.0
    %901 = vmatpush.msra.mxu0 0.0
    %902 = vmatpush.msra.mxu0 0.0
    %903 = vmatpush.msra.mxu0 0.0
    %904 = vmatpush.msra.mxu0 0.0
    %905 = vmatpush.msra.mxu0 0.0
    %906 = vmatpush.msra.mxu0 0.0
    %907 = vmatpush.msra.mxu0 0.0
    %908 = vmatpush.msra.mxu0 0.0
    %909 = vmatpush.msra.mxu0 0.0
    %910 = vmatpush.msra.mxu0 0.0
    %911 = vmatpush.msra.mxu0 %v861
    %912 = vmatpush.msra.mxu0 %v860
    %913 = vmatpush.msra.mxu0 %v859
    %914 = vmatpush.msra.mxu0 %v858
    %915 = vmatmul.f32.gmra.mxu0 %v897
    %v916 = vpop.f32.mrf.mxu0
    %v917 = vadd.f32 %v869, %v916
    %918 = vdwg.mxu0
    %919 = vst [vmem:[%s144] sm:$0x3] %v917
    %v920 = vld [vmem:[%s515] sm:$0x3]
    %v922 = vsel %vm311, %v920, 0
    %924 = vmatpush.msra.mxu0 0.0
    %925 = vmatpush.msra.mxu0 0.0
    %926 = vmatpush.msra.mxu0 0.0
    %927 = vmatpush.msra.mxu0 0.0
    %928 = vmatpush.msra.mxu0 0.0
    %929 = vmatpush.msra.mxu0 0.0
    %930 = vmatpush.msra.mxu0 0.0
    %931 = vmatpush.msra.mxu0 0.0
    %932 = vmatpush.msra.mxu0 0.0
    %933 = vmatpush.msra.mxu0 0.0
    %934 = vmatpush.msra.mxu0 0.0
    %935 = vmatpush.msra.mxu0 0.0
    %936 = vmatpush.msra.mxu0 %v861
    %937 = vmatpush.msra.mxu0 %v860
    %938 = vmatpush.msra.mxu0 %v859
    %939 = vmatpush.msra.mxu0 %v858
    %940 = vmatmul.f32.gmra.mxu0 %v922
    %v941 = vpop.f32.mrf.mxu0
    %v942 = vadd.f32 %v869, %v941
    %943 = vdwg.mxu0
    %944 = vst [vmem:[%s171] sm:$0x3] %v942
    %v945 = vld [vmem:[%s582] sm:$0x3]
    %v947 = vsel %vm311, %v945, 0
    %949 = vmatpush.msra.mxu0 0.0
    %950 = vmatpush.msra.mxu0 0.0
    %951 = vmatpush.msra.mxu0 0.0
    %952 = vmatpush.msra.mxu0 0.0
    %953 = vmatpush.msra.mxu0 0.0
    %954 = vmatpush.msra.mxu0 0.0
    %955 = vmatpush.msra.mxu0 0.0
    %956 = vmatpush.msra.mxu0 0.0
    %957 = vmatpush.msra.mxu0 0.0
    %958 = vmatpush.msra.mxu0 0.0
    %959 = vmatpush.msra.mxu0 0.0
    %960 = vmatpush.msra.mxu0 0.0
    %961 = vmatpush.msra.mxu0 %v861
    %962 = vmatpush.msra.mxu0 %v860
    %963 = vmatpush.msra.mxu0 %v859
    %964 = vmatpush.msra.mxu0 %v858
    %965 = vmatmul.f32.gmra.mxu0 %v947
    %v966 = vpop.f32.mrf.mxu0
    %v967 = vadd.f32 %v869, %v966
    %968 = vdwg.mxu0
    %969 = vst [vmem:[%s198] sm:$0x3] %v967
    %v970 = vld [vmem:[%s649] sm:$0x3]
    %v972 = vsel %vm311, %v970, 0
    %974 = vmatpush.msra.mxu0 0.0
    %975 = vmatpush.msra.mxu0 0.0
    %976 = vmatpush.msra.mxu0 0.0
    %977 = vmatpush.msra.mxu0 0.0
    %978 = vmatpush.msra.mxu0 0.0
    %979 = vmatpush.msra.mxu0 0.0
    %980 = vmatpush.msra.mxu0 0.0
    %981 = vmatpush.msra.mxu0 0.0
    %982 = vmatpush.msra.mxu0 0.0
    %983 = vmatpush.msra.mxu0 0.0
    %984 = vmatpush.msra.mxu0 0.0
    %985 = vmatpush.msra.mxu0 0.0
    %986 = vmatpush.msra.mxu0 %v861
    %987 = vmatpush.msra.mxu0 %v860
    %988 = vmatpush.msra.mxu0 %v859
    %989 = vmatpush.msra.mxu0 %v858
    %990 = vmatmul.f32.gmra.mxu0 %v972
    %v991 = vpop.f32.mrf.mxu0
    %v992 = vadd.f32 %v869, %v991
    %993 = vdwg.mxu0
    %994 = vst [vmem:[%s225] sm:$0x3] %v992
    %v995 = vld [vmem:[%s716] sm:$0x3]
    %v997 = vsel %vm311, %v995, 0
    %999 = vmatpush.msra.mxu0 0.0
    %1000 = vmatpush.msra.mxu0 0.0
    %1001 = vmatpush.msra.mxu0 0.0
    %1002 = vmatpush.msra.mxu0 0.0
    %1003 = vmatpush.msra.mxu0 0.0
    %1004 = vmatpush.msra.mxu0 0.0
    %1005 = vmatpush.msra.mxu0 0.0
    %1006 = vmatpush.msra.mxu0 0.0
    %1007 = vmatpush.msra.mxu0 0.0
    %1008 = vmatpush.msra.mxu0 0.0
    %1009 = vmatpush.msra.mxu0 0.0
    %1010 = vmatpush.msra.mxu0 0.0
    %1011 = vmatpush.msra.mxu0 %v861
    %1012 = vmatpush.msra.mxu0 %v860
    %1013 = vmatpush.msra.mxu0 %v859
    %1014 = vmatpush.msra.mxu0 %v858
    %1015 = vmatmul.f32.gmra.mxu0 %v997
    %v1016 = vpop.f32.mrf.mxu0
    %v1017 = vadd.f32 %v869, %v1016
    %1018 = vdwg.mxu0
    %1019 = vst [vmem:[%s252] sm:$0x3] %v1017
    %v1020 = vld [vmem:[%s783] sm:$0x3]
    %v1022 = vsel %vm311, %v1020, 0
    %1024 = vmatpush.msra.mxu0 0.0
    %1025 = vmatpush.msra.mxu0 0.0
    %1026 = vmatpush.msra.mxu0 0.0
    %1027 = vmatpush.msra.mxu0 0.0
    %1028 = vmatpush.msra.mxu0 0.0
    %1029 = vmatpush.msra.mxu0 0.0
    %1030 = vmatpush.msra.mxu0 0.0
    %1031 = vmatpush.msra.mxu0 0.0
    %1032 = vmatpush.msra.mxu0 0.0
    %1033 = vmatpush.msra.mxu0 0.0
    %1034 = vmatpush.msra.mxu0 0.0
    %1035 = vmatpush.msra.mxu0 0.0
    %1036 = vmatpush.msra.mxu0 %v861
    %1037 = vmatpush.msra.mxu0 %v860
    %1038 = vmatpush.msra.mxu0 %v859
    %1039 = vmatpush.msra.mxu0 %v858
    %1040 = vmatmul.f32.gmra.mxu0 %v1022
    %v1041 = vpop.f32.mrf.mxu0
    %v1042 = vadd.f32 %v869, %v1041
    %1043 = vdwg.mxu0
    %1044 = vst [vmem:[%s279] sm:$0x3] %v1042
    %v1045 = vld [vmem:[%s850] sm:$0x3]
    %v1047 = vsel %vm311, %v1045, 0
    %1049 = vmatpush.msra.mxu0 0.0
    %1050 = vmatpush.msra.mxu0 0.0
    %1051 = vmatpush.msra.mxu0 0.0
    %1052 = vmatpush.msra.mxu0 0.0
    %1053 = vmatpush.msra.mxu0 0.0
    %1054 = vmatpush.msra.mxu0 0.0
    %1055 = vmatpush.msra.mxu0 0.0
    %1056 = vmatpush.msra.mxu0 0.0
    %1057 = vmatpush.msra.mxu0 0.0
    %1058 = vmatpush.msra.mxu0 0.0
    %1059 = vmatpush.msra.mxu0 0.0
    %1060 = vmatpush.msra.mxu0 0.0
    %1061 = vmatpush.msra.mxu0 %v861
    %1062 = vmatpush.msra.mxu0 %v860
    %1063 = vmatpush.msra.mxu0 %v859
    %1064 = vmatpush.msra.mxu0 %v858
    %1065 = vmatmul.f32.gmra.mxu0 %v1047
    %v1066 = vpop.f32.mrf.mxu0
    %v1067 = vadd.f32 %v869, %v1066
    %1068 = vdwg.mxu0
    %1069 = vst [vmem:[%s306] sm:$0x3] %v1067
    %s1070 = scalar_lea.vmem %s1, 2
    %v1071 = vld [vmem:[%s1070] sm:$0x3]
    %s1072 = scalar_lea.vmem %s2, 2
    %v1073 = vld [vmem:[%s1072] sm:$0x3]
    %v1074 = vld [vmem:[#allocation2] sm:$0x3]
    %v1076 = vsel %vm311, %v1071, 0
    %1078 = vmatpush.msra.mxu0 0.0
    %1079 = vmatpush.msra.mxu0 0.0
    %1080 = vmatpush.msra.mxu0 0.0
    %1081 = vmatpush.msra.mxu0 0.0
    %1082 = vmatpush.msra.mxu0 0.0
    %1083 = vmatpush.msra.mxu0 0.0
    %1084 = vmatpush.msra.mxu0 0.0
    %1085 = vmatpush.msra.mxu0 0.0
    %1086 = vmatpush.msra.mxu0 0.0
    %1087 = vmatpush.msra.mxu0 0.0
    %1088 = vmatpush.msra.mxu0 0.0
    %1089 = vmatpush.msra.mxu0 0.0
    %1090 = vmatpush.msra.mxu0 %v865
    %1091 = vmatpush.msra.mxu0 %v864
    %1092 = vmatpush.msra.mxu0 %v863
    %1093 = vmatpush.msra.mxu0 %v862
    %1094 = vmatmul.f32.gmra.mxu0 %v1076
    %v1095 = vpop.f32.mrf.mxu0
    %v1096 = vadd.f32 0.0, %v1095
    %1097 = vdwg.mxu0
    %v1098 = vadd.f32 %v1074, %v1096
    %v1099 = vxor.u32 %v1098, 2147483648
    %v1100 = vmul.f32 %v1099, 1.442695
    %v1101 = vpow.pop %v1100
    %v1102 = vadd.f32 %v1101, 1.0
    %v1103 = vrcp.pop %v1102
    %v1104 = vmul.f32 %v1102, %v1103
    %v1105 = vsub.f32 1.0, %v1104
    %v1106 = vmul.f32 %v1103, %v1105
    %v1107 = vadd.f32 %v1103, %v1106
    %vm1108 = vweird.f32 %v1102
    %vm1109 = vweird.f32 %v1103
    %vm1110 = vmor %vm1108, %vm1109
    %v1111 = vsel %vm1110, %v1103, %v1107
    %v1112 = vand.u32 2147483647, %v1102
    %vm1113 = vcmp.eq.f32.partialorder %v1112, 8.507059e+37
    %v1114 = vand.u32 %v1102, 2147483648
    %v1115 = vor.u32 1.1754944e-38, %v1114
    %v1116 = vsel %vm1113, %v1115, %v1111
    %v1117 = vmul.f32 1.0, %v1116
    %v1118 = vtanh.pop %v1098
    %1120 = vrot.lane.b32.xlu0 %v1073, 32
    %v1121 = vpop.permute.xlu0 %1120
    %v1123 = vmul.f32 %v1117, %v1121
    %1125 = vrot.lane.b32.xlu0 %v1118, 64
    %v1126 = vpop.permute.xlu0 %1125
    %v1128 = vmul.f32 %v1117, %v1126
    %1130 = vrot.lane.b32.xlu0 %v1128, 32
    %v1131 = vpop.permute.xlu0 %1130
    %v1133 = vadd.f32 %v1123, %v1131
    %v1134 = vtanh.pop %v1133
    %1136 = vrot.lane.b32.xlu0 %v1134, 64
    %v1137 = vpop.permute.xlu0 %1136
    %v1139 = vmul.f32 %v1117, %v1137
    %v1141 = vperm.slane %v79, 0
    %1144 = vrot.lane.b32.xlu0 %v1139, 32
    %v1145 = vpop.permute.xlu0 %1144
    %v1146 = vsel %vm311, %v1145, 0
    %1148 = vmatpush.msra.mxu0 0.0
    %1149 = vmatpush.msra.mxu0 0.0
    %1150 = vmatpush.msra.mxu0 0.0
    %1151 = vmatpush.msra.mxu0 0.0
    %1152 = vmatpush.msra.mxu0 0.0
    %1153 = vmatpush.msra.mxu0 0.0
    %1154 = vmatpush.msra.mxu0 0.0
    %1155 = vmatpush.msra.mxu0 0.0
    %1156 = vmatpush.msra.mxu0 0.0
    %1157 = vmatpush.msra.mxu0 0.0
    %1158 = vmatpush.msra.mxu0 0.0
    %1159 = vmatpush.msra.mxu0 0.0
    %1160 = vmatpush.msra.mxu0 %v78
    %1161 = vmatpush.msra.mxu0 %v77
    %1162 = vmatpush.msra.mxu0 %v76
    %1163 = vmatpush.msra.mxu0 %v75
    %1164 = vmatmul.f32.gmra.mxu0 %v1146
    %v1165 = vpop.f32.mrf.mxu0
    %v1166 = vadd.f32 %v1141, %v1165
    %1167 = vdwg.mxu0
    %vm1168 = vcmask 25600
    %1169 = vst.msk [vmem:[%s11] sm:$0x3] %vm1168, %v1166
    %v1170 = vld [vmem:[%s144] sm:$0x3]
    %1171 = vmatpush.msra.mxu0 0.0
    %1172 = vmatpush.msra.mxu0 0.0
    %1173 = vmatpush.msra.mxu0 0.0
    %1174 = vmatpush.msra.mxu0 0.0
    %1175 = vmatpush.msra.mxu0 0.0
    %1176 = vmatpush.msra.mxu0 0.0
    %1177 = vmatpush.msra.mxu0 0.0
    %1178 = vmatpush.msra.mxu0 0.0
    %1179 = vmatpush.msra.mxu0 0.0
    %1180 = vmatpush.msra.mxu0 0.0
    %1181 = vmatpush.msra.mxu0 0.0
    %1182 = vmatpush.msra.mxu0 0.0
    %1183 = vmatpush.msra.mxu0 %v865
    %1184 = vmatpush.msra.mxu0 %v864
    %1185 = vmatpush.msra.mxu0 %v863
    %1186 = vmatpush.msra.mxu0 %v862
    %1187 = vmatmul.f32.gmra.mxu0 %v1146
    %v1188 = vpop.f32.mrf.mxu0
    %v1189 = vadd.f32 0.0, %v1188
    %1190 = vdwg.mxu0
    %v1191 = vadd.f32 %v1170, %v1189
    %v1192 = vxor.u32 %v1191, 2147483648
    %v1193 = vmul.f32 %v1192, 1.442695
    %v1194 = vpow.pop %v1193
    %v1195 = vadd.f32 %v1194, 1.0
    %v1196 = vrcp.pop %v1195
    %v1197 = vmul.f32 %v1195, %v1196
    %v1198 = vsub.f32 1.0, %v1197
    %v1199 = vmul.f32 %v1196, %v1198
    %v1200 = vadd.f32 %v1196, %v1199
    %vm1201 = vweird.f32 %v1195
    %vm1202 = vweird.f32 %v1196
    %vm1203 = vmor %vm1201, %vm1202
    %v1204 = vsel %vm1203, %v1196, %v1200
    %v1205 = vand.u32 2147483647, %v1195
    %vm1206 = vcmp.eq.f32.partialorder %v1205, 8.507059e+37
    %v1207 = vand.u32 %v1195, 2147483648
    %v1208 = vor.u32 1.1754944e-38, %v1207
    %v1209 = vsel %vm1206, %v1208, %v1204
    %v1210 = vmul.f32 1.0, %v1209
    %v1211 = vtanh.pop %v1191
    %v1212 = vmul.f32 %v1210, %v1133
    %1214 = vrot.lane.b32.xlu0 %v1211, 64
    %v1215 = vpop.permute.xlu0 %1214
    %v1217 = vmul.f32 %v1210, %v1215
    %1219 = vrot.lane.b32.xlu0 %v1217, 32
    %v1220 = vpop.permute.xlu0 %1219
    %v1222 = vadd.f32 %v1212, %v1220
    %v1223 = vtanh.pop %v1222
    %1225 = vrot.lane.b32.xlu0 %v1223, 64
    %v1226 = vpop.permute.xlu0 %1225
    %v1228 = vmul.f32 %v1210, %v1226
    %1230 = vrot.lane.b32.xlu0 %v1228, 32
    %v1231 = vpop.permute.xlu0 %1230
    %v1232 = vsel %vm311, %v1231, 0
    %1234 = vmatpush.msra.mxu0 0.0
    %1235 = vmatpush.msra.mxu0 0.0
    %1236 = vmatpush.msra.mxu0 0.0
    %1237 = vmatpush.msra.mxu0 0.0
    %1238 = vmatpush.msra.mxu0 0.0
    %1239 = vmatpush.msra.mxu0 0.0
    %1240 = vmatpush.msra.mxu0 0.0
    %1241 = vmatpush.msra.mxu0 0.0
    %1242 = vmatpush.msra.mxu0 0.0
    %1243 = vmatpush.msra.mxu0 0.0
    %1244 = vmatpush.msra.mxu0 0.0
    %1245 = vmatpush.msra.mxu0 0.0
    %1246 = vmatpush.msra.mxu0 %v78
    %1247 = vmatpush.msra.mxu0 %v77
    %1248 = vmatpush.msra.mxu0 %v76
    %1249 = vmatpush.msra.mxu0 %v75
    %1250 = vmatmul.f32.gmra.mxu0 %v1232
    %v1251 = vpop.f32.mrf.mxu0
    %v1252 = vadd.f32 %v1141, %v1251
    %1253 = vdwg.mxu0
    %s1254 = scalar_lea.vmem %s11, 2
    %1255 = vst.msk [vmem:[%s1254] sm:$0x3] %vm1168, %v1252
    %v1256 = vld [vmem:[%s171] sm:$0x3]
    %1257 = vmatpush.msra.mxu0 0.0
    %1258 = vmatpush.msra.mxu0 0.0
    %1259 = vmatpush.msra.mxu0 0.0
    %1260 = vmatpush.msra.mxu0 0.0
    %1261 = vmatpush.msra.mxu0 0.0
    %1262 = vmatpush.msra.mxu0 0.0
    %1263 = vmatpush.msra.mxu0 0.0
    %1264 = vmatpush.msra.mxu0 0.0
    %1265 = vmatpush.msra.mxu0 0.0
    %1266 = vmatpush.msra.mxu0 0.0
    %1267 = vmatpush.msra.mxu0 0.0
    %1268 = vmatpush.msra.mxu0 0.0
    %1269 = vmatpush.msra.mxu0 %v865
    %1270 = vmatpush.msra.mxu0 %v864
    %1271 = vmatpush.msra.mxu0 %v863
    %1272 = vmatpush.msra.mxu0 %v862
    %1273 = vmatmul.f32.gmra.mxu0 %v1232
    %v1274 = vpop.f32.mrf.mxu0
    %v1275 = vadd.f32 0.0, %v1274
    %1276 = vdwg.mxu0
    %v1277 = vadd.f32 %v1256, %v1275
    %v1278 = vxor.u32 %v1277, 2147483648
    %v1279 = vmul.f32 %v1278, 1.442695
    %v1280 = vpow.pop %v1279
    %v1281 = vadd.f32 %v1280, 1.0
    %v1282 = vrcp.pop %v1281
    %v1283 = vmul.f32 %v1281, %v1282
    %v1284 = vsub.f32 1.0, %v1283
    %v1285 = vmul.f32 %v1282, %v1284
    %v1286 = vadd.f32 %v1282, %v1285
    %vm1287 = vweird.f32 %v1281
    %vm1288 = vweird.f32 %v1282
    %vm1289 = vmor %vm1287, %vm1288
    %v1290 = vsel %vm1289, %v1282, %v1286
    %v1291 = vand.u32 2147483647, %v1281
    %vm1292 = vcmp.eq.f32.partialorder %v1291, 8.507059e+37
    %v1293 = vand.u32 %v1281, 2147483648
    %v1294 = vor.u32 1.1754944e-38, %v1293
    %v1295 = vsel %vm1292, %v1294, %v1290
    %v1296 = vmul.f32 1.0, %v1295
    %v1297 = vtanh.pop %v1277
    %v1298 = vmul.f32 %v1296, %v1222
    %1300 = vrot.lane.b32.xlu0 %v1297, 64
    %v1301 = vpop.permute.xlu0 %1300
    %v1303 = vmul.f32 %v1296, %v1301
    %1305 = vrot.lane.b32.xlu0 %v1303, 32
    %v1306 = vpop.permute.xlu0 %1305
    %v1308 = vadd.f32 %v1298, %v1306
    %v1309 = vtanh.pop %v1308
    %1311 = vrot.lane.b32.xlu0 %v1309, 64
    %v1312 = vpop.permute.xlu0 %1311
    %v1314 = vmul.f32 %v1296, %v1312
    %1316 = vrot.lane.b32.xlu0 %v1314, 32
    %v1317 = vpop.permute.xlu0 %1316
    %v1318 = vsel %vm311, %v1317, 0
    %1320 = vmatpush.msra.mxu0 0.0
    %1321 = vmatpush.msra.mxu0 0.0
    %1322 = vmatpush.msra.mxu0 0.0
    %1323 = vmatpush.msra.mxu0 0.0
    %1324 = vmatpush.msra.mxu0 0.0
    %1325 = vmatpush.msra.mxu0 0.0
    %1326 = vmatpush.msra.mxu0 0.0
    %1327 = vmatpush.msra.mxu0 0.0
    %1328 = vmatpush.msra.mxu0 0.0
    %1329 = vmatpush.msra.mxu0 0.0
    %1330 = vmatpush.msra.mxu0 0.0
    %1331 = vmatpush.msra.mxu0 0.0
    %1332 = vmatpush.msra.mxu0 %v78
    %1333 = vmatpush.msra.mxu0 %v77
    %1334 = vmatpush.msra.mxu0 %v76
    %1335 = vmatpush.msra.mxu0 %v75
    %1336 = vmatmul.f32.gmra.mxu0 %v1318
    %v1337 = vpop.f32.mrf.mxu0
    %v1338 = vadd.f32 %v1141, %v1337
    %1339 = vdwg.mxu0
    %s1340 = scalar_lea.vmem %s11, 4
    %1341 = vst.msk [vmem:[%s1340] sm:$0x3] %vm1168, %v1338
    %v1342 = vld [vmem:[%s198] sm:$0x3]
    %1343 = vmatpush.msra.mxu0 0.0
    %1344 = vmatpush.msra.mxu0 0.0
    %1345 = vmatpush.msra.mxu0 0.0
    %1346 = vmatpush.msra.mxu0 0.0
    %1347 = vmatpush.msra.mxu0 0.0
    %1348 = vmatpush.msra.mxu0 0.0
    %1349 = vmatpush.msra.mxu0 0.0
    %1350 = vmatpush.msra.mxu0 0.0
    %1351 = vmatpush.msra.mxu0 0.0
    %1352 = vmatpush.msra.mxu0 0.0
    %1353 = vmatpush.msra.mxu0 0.0
    %1354 = vmatpush.msra.mxu0 0.0
    %1355 = vmatpush.msra.mxu0 %v865
    %1356 = vmatpush.msra.mxu0 %v864
    %1357 = vmatpush.msra.mxu0 %v863
    %1358 = vmatpush.msra.mxu0 %v862
    %1359 = vmatmul.f32.gmra.mxu0 %v1318
    %v1360 = vpop.f32.mrf.mxu0
    %v1361 = vadd.f32 0.0, %v1360
    %1362 = vdwg.mxu0
    %v1363 = vadd.f32 %v1342, %v1361
    %v1364 = vxor.u32 %v1363, 2147483648
    %v1365 = vmul.f32 %v1364, 1.442695
    %v1366 = vpow.pop %v1365
    %v1367 = vadd.f32 %v1366, 1.0
    %v1368 = vrcp.pop %v1367
    %v1369 = vmul.f32 %v1367, %v1368
    %v1370 = vsub.f32 1.0, %v1369
    %v1371 = vmul.f32 %v1368, %v1370
    %v1372 = vadd.f32 %v1368, %v1371
    %vm1373 = vweird.f32 %v1367
    %vm1374 = vweird.f32 %v1368
    %vm1375 = vmor %vm1373, %vm1374
    %v1376 = vsel %vm1375, %v1368, %v1372
    %v1377 = vand.u32 2147483647, %v1367
    %vm1378 = vcmp.eq.f32.partialorder %v1377, 8.507059e+37
    %v1379 = vand.u32 %v1367, 2147483648
    %v1380 = vor.u32 1.1754944e-38, %v1379
    %v1381 = vsel %vm1378, %v1380, %v1376
    %v1382 = vmul.f32 1.0, %v1381
    %v1383 = vtanh.pop %v1363
    %v1384 = vmul.f32 %v1382, %v1308
    %1386 = vrot.lane.b32.xlu0 %v1383, 64
    %v1387 = vpop.permute.xlu0 %1386
    %v1389 = vmul.f32 %v1382, %v1387
    %1391 = vrot.lane.b32.xlu0 %v1389, 32
    %v1392 = vpop.permute.xlu0 %1391
    %v1394 = vadd.f32 %v1384, %v1392
    %v1395 = vtanh.pop %v1394
    %1397 = vrot.lane.b32.xlu0 %v1395, 64
    %v1398 = vpop.permute.xlu0 %1397
    %v1400 = vmul.f32 %v1382, %v1398
    %1402 = vrot.lane.b32.xlu0 %v1400, 32
    %v1403 = vpop.permute.xlu0 %1402
    %v1404 = vsel %vm311, %v1403, 0
    %1406 = vmatpush.msra.mxu0 0.0
    %1407 = vmatpush.msra.mxu0 0.0
    %1408 = vmatpush.msra.mxu0 0.0
    %1409 = vmatpush.msra.mxu0 0.0
    %1410 = vmatpush.msra.mxu0 0.0
    %1411 = vmatpush.msra.mxu0 0.0
    %1412 = vmatpush.msra.mxu0 0.0
    %1413 = vmatpush.msra.mxu0 0.0
    %1414 = vmatpush.msra.mxu0 0.0
    %1415 = vmatpush.msra.mxu0 0.0
    %1416 = vmatpush.msra.mxu0 0.0
    %1417 = vmatpush.msra.mxu0 0.0
    %1418 = vmatpush.msra.mxu0 %v78
    %1419 = vmatpush.msra.mxu0 %v77
    %1420 = vmatpush.msra.mxu0 %v76
    %1421 = vmatpush.msra.mxu0 %v75
    %1422 = vmatmul.f32.gmra.mxu0 %v1404
    %v1423 = vpop.f32.mrf.mxu0
    %v1424 = vadd.f32 %v1141, %v1423
    %1425 = vdwg.mxu0
    %s1426 = scalar_lea.vmem %s11, 6
    %1427 = vst.msk [vmem:[%s1426] sm:$0x3] %vm1168, %v1424
    %v1428 = vld [vmem:[%s225] sm:$0x3]
    %1429 = vmatpush.msra.mxu0 0.0
    %1430 = vmatpush.msra.mxu0 0.0
    %1431 = vmatpush.msra.mxu0 0.0
    %1432 = vmatpush.msra.mxu0 0.0
    %1433 = vmatpush.msra.mxu0 0.0
    %1434 = vmatpush.msra.mxu0 0.0
    %1435 = vmatpush.msra.mxu0 0.0
    %1436 = vmatpush.msra.mxu0 0.0
    %1437 = vmatpush.msra.mxu0 0.0
    %1438 = vmatpush.msra.mxu0 0.0
    %1439 = vmatpush.msra.mxu0 0.0
    %1440 = vmatpush.msra.mxu0 0.0
    %1441 = vmatpush.msra.mxu0 %v865
    %1442 = vmatpush.msra.mxu0 %v864
    %1443 = vmatpush.msra.mxu0 %v863
    %1444 = vmatpush.msra.mxu0 %v862
    %1445 = vmatmul.f32.gmra.mxu0 %v1404
    %v1446 = vpop.f32.mrf.mxu0
    %v1447 = vadd.f32 0.0, %v1446
    %1448 = vdwg.mxu0
    %v1449 = vadd.f32 %v1428, %v1447
    %v1450 = vxor.u32 %v1449, 2147483648
    %v1451 = vmul.f32 %v1450, 1.442695
    %v1452 = vpow.pop %v1451
    %v1453 = vadd.f32 %v1452, 1.0
    %v1454 = vrcp.pop %v1453
    %v1455 = vmul.f32 %v1453, %v1454
    %v1456 = vsub.f32 1.0, %v1455
    %v1457 = vmul.f32 %v1454, %v1456
    %v1458 = vadd.f32 %v1454, %v1457
    %vm1459 = vweird.f32 %v1453
    %vm1460 = vweird.f32 %v1454
    %vm1461 = vmor %vm1459, %vm1460
    %v1462 = vsel %vm1461, %v1454, %v1458
    %v1463 = vand.u32 2147483647, %v1453
    %vm1464 = vcmp.eq.f32.partialorder %v1463, 8.507059e+37
    %v1465 = vand.u32 %v1453, 2147483648
    %v1466 = vor.u32 1.1754944e-38, %v1465
    %v1467 = vsel %vm1464, %v1466, %v1462
    %v1468 = vmul.f32 1.0, %v1467
    %v1469 = vtanh.pop %v1449
    %v1470 = vmul.f32 %v1468, %v1394
    %1472 = vrot.lane.b32.xlu0 %v1469, 64
    %v1473 = vpop.permute.xlu0 %1472
    %v1475 = vmul.f32 %v1468, %v1473
    %1477 = vrot.lane.b32.xlu0 %v1475, 32
    %v1478 = vpop.permute.xlu0 %1477
    %v1480 = vadd.f32 %v1470, %v1478
    %v1481 = vtanh.pop %v1480
    %1483 = vrot.lane.b32.xlu0 %v1481, 64
    %v1484 = vpop.permute.xlu0 %1483
    %v1486 = vmul.f32 %v1468, %v1484
    %1488 = vrot.lane.b32.xlu0 %v1486, 32
    %v1489 = vpop.permute.xlu0 %1488
    %v1490 = vsel %vm311, %v1489, 0
    %1492 = vmatpush.msra.mxu0 0.0
    %1493 = vmatpush.msra.mxu0 0.0
    %1494 = vmatpush.msra.mxu0 0.0
    %1495 = vmatpush.msra.mxu0 0.0
    %1496 = vmatpush.msra.mxu0 0.0
    %1497 = vmatpush.msra.mxu0 0.0
    %1498 = vmatpush.msra.mxu0 0.0
    %1499 = vmatpush.msra.mxu0 0.0
    %1500 = vmatpush.msra.mxu0 0.0
    %1501 = vmatpush.msra.mxu0 0.0
    %1502 = vmatpush.msra.mxu0 0.0
    %1503 = vmatpush.msra.mxu0 0.0
    %1504 = vmatpush.msra.mxu0 %v78
    %1505 = vmatpush.msra.mxu0 %v77
    %1506 = vmatpush.msra.mxu0 %v76
    %1507 = vmatpush.msra.mxu0 %v75
    %1508 = vmatmul.f32.gmra.mxu0 %v1490
    %v1509 = vpop.f32.mrf.mxu0
    %v1510 = vadd.f32 %v1141, %v1509
    %1511 = vdwg.mxu0
    %s1512 = scalar_lea.vmem %s11, 8
    %1513 = vst.msk [vmem:[%s1512] sm:$0x3] %vm1168, %v1510
    %v1514 = vld [vmem:[%s252] sm:$0x3]
    %1515 = vmatpush.msra.mxu0 0.0
    %1516 = vmatpush.msra.mxu0 0.0
    %1517 = vmatpush.msra.mxu0 0.0
    %1518 = vmatpush.msra.mxu0 0.0
    %1519 = vmatpush.msra.mxu0 0.0
    %1520 = vmatpush.msra.mxu0 0.0
    %1521 = vmatpush.msra.mxu0 0.0
    %1522 = vmatpush.msra.mxu0 0.0
    %1523 = vmatpush.msra.mxu0 0.0
    %1524 = vmatpush.msra.mxu0 0.0
    %1525 = vmatpush.msra.mxu0 0.0
    %1526 = vmatpush.msra.mxu0 0.0
    %1527 = vmatpush.msra.mxu0 %v865
    %1528 = vmatpush.msra.mxu0 %v864
    %1529 = vmatpush.msra.mxu0 %v863
    %1530 = vmatpush.msra.mxu0 %v862
    %1531 = vmatmul.f32.gmra.mxu0 %v1490
    %v1532 = vpop.f32.mrf.mxu0
    %v1533 = vadd.f32 0.0, %v1532
    %1534 = vdwg.mxu0
    %v1535 = vadd.f32 %v1514, %v1533
    %v1536 = vxor.u32 %v1535, 2147483648
    %v1537 = vmul.f32 %v1536, 1.442695
    %v1538 = vpow.pop %v1537
    %v1539 = vadd.f32 %v1538, 1.0
    %v1540 = vrcp.pop %v1539
    %v1541 = vmul.f32 %v1539, %v1540
    %v1542 = vsub.f32 1.0, %v1541
    %v1543 = vmul.f32 %v1540, %v1542
    %v1544 = vadd.f32 %v1540, %v1543
    %vm1545 = vweird.f32 %v1539
    %vm1546 = vweird.f32 %v1540
    %vm1547 = vmor %vm1545, %vm1546
    %v1548 = vsel %vm1547, %v1540, %v1544
    %v1549 = vand.u32 2147483647, %v1539
    %vm1550 = vcmp.eq.f32.partialorder %v1549, 8.507059e+37
    %v1551 = vand.u32 %v1539, 2147483648
    %v1552 = vor.u32 1.1754944e-38, %v1551
    %v1553 = vsel %vm1550, %v1552, %v1548
    %v1554 = vmul.f32 1.0, %v1553
    %v1555 = vtanh.pop %v1535
    %v1556 = vmul.f32 %v1554, %v1480
    %1558 = vrot.lane.b32.xlu0 %v1555, 64
    %v1559 = vpop.permute.xlu0 %1558
    %v1561 = vmul.f32 %v1554, %v1559
    %1563 = vrot.lane.b32.xlu0 %v1561, 32
    %v1564 = vpop.permute.xlu0 %1563
    %v1566 = vadd.f32 %v1556, %v1564
    %v1567 = vtanh.pop %v1566
    %1569 = vrot.lane.b32.xlu0 %v1567, 64
    %v1570 = vpop.permute.xlu0 %1569
    %v1572 = vmul.f32 %v1554, %v1570
    %1574 = vrot.lane.b32.xlu0 %v1572, 32
    %v1575 = vpop.permute.xlu0 %1574
    %v1576 = vsel %vm311, %v1575, 0
    %1578 = vmatpush.msra.mxu0 0.0
    %1579 = vmatpush.msra.mxu0 0.0
    %1580 = vmatpush.msra.mxu0 0.0
    %1581 = vmatpush.msra.mxu0 0.0
    %1582 = vmatpush.msra.mxu0 0.0
    %1583 = vmatpush.msra.mxu0 0.0
    %1584 = vmatpush.msra.mxu0 0.0
    %1585 = vmatpush.msra.mxu0 0.0
    %1586 = vmatpush.msra.mxu0 0.0
    %1587 = vmatpush.msra.mxu0 0.0
    %1588 = vmatpush.msra.mxu0 0.0
    %1589 = vmatpush.msra.mxu0 0.0
    %1590 = vmatpush.msra.mxu0 %v78
    %1591 = vmatpush.msra.mxu0 %v77
    %1592 = vmatpush.msra.mxu0 %v76
    %1593 = vmatpush.msra.mxu0 %v75
    %1594 = vmatmul.f32.gmra.mxu0 %v1576
    %v1595 = vpop.f32.mrf.mxu0
    %v1596 = vadd.f32 %v1141, %v1595
    %1597 = vdwg.mxu0
    %s1598 = scalar_lea.vmem %s11, 10
    %1599 = vst.msk [vmem:[%s1598] sm:$0x3] %vm1168, %v1596
    %v1600 = vld [vmem:[%s279] sm:$0x3]
    %1601 = vmatpush.msra.mxu0 0.0
    %1602 = vmatpush.msra.mxu0 0.0
    %1603 = vmatpush.msra.mxu0 0.0
    %1604 = vmatpush.msra.mxu0 0.0
    %1605 = vmatpush.msra.mxu0 0.0
    %1606 = vmatpush.msra.mxu0 0.0
    %1607 = vmatpush.msra.mxu0 0.0
    %1608 = vmatpush.msra.mxu0 0.0
    %1609 = vmatpush.msra.mxu0 0.0
    %1610 = vmatpush.msra.mxu0 0.0
    %1611 = vmatpush.msra.mxu0 0.0
    %1612 = vmatpush.msra.mxu0 0.0
    %1613 = vmatpush.msra.mxu0 %v865
    %1614 = vmatpush.msra.mxu0 %v864
    %1615 = vmatpush.msra.mxu0 %v863
    %1616 = vmatpush.msra.mxu0 %v862
    %1617 = vmatmul.f32.gmra.mxu0 %v1576
    %v1618 = vpop.f32.mrf.mxu0
    %v1619 = vadd.f32 0.0, %v1618
    %1620 = vdwg.mxu0
    %v1621 = vadd.f32 %v1600, %v1619
    %v1622 = vxor.u32 %v1621, 2147483648
    %v1623 = vmul.f32 %v1622, 1.442695
    %v1624 = vpow.pop %v1623
    %v1625 = vadd.f32 %v1624, 1.0
    %v1626 = vrcp.pop %v1625
    %v1627 = vmul.f32 %v1625, %v1626
    %v1628 = vsub.f32 1.0, %v1627
    %v1629 = vmul.f32 %v1626, %v1628
    %v1630 = vadd.f32 %v1626, %v1629
    %vm1631 = vweird.f32 %v1625
    %vm1632 = vweird.f32 %v1626
    %vm1633 = vmor %vm1631, %vm1632
    %v1634 = vsel %vm1633, %v1626, %v1630
    %v1635 = vand.u32 2147483647, %v1625
    %vm1636 = vcmp.eq.f32.partialorder %v1635, 8.507059e+37
    %v1637 = vand.u32 %v1625, 2147483648
    %v1638 = vor.u32 1.1754944e-38, %v1637
    %v1639 = vsel %vm1636, %v1638, %v1634
    %v1640 = vmul.f32 1.0, %v1639
    %v1641 = vtanh.pop %v1621
    %v1642 = vmul.f32 %v1640, %v1566
    %1644 = vrot.lane.b32.xlu0 %v1641, 64
    %v1645 = vpop.permute.xlu0 %1644
    %v1647 = vmul.f32 %v1640, %v1645
    %1649 = vrot.lane.b32.xlu0 %v1647, 32
    %v1650 = vpop.permute.xlu0 %1649
    %v1652 = vadd.f32 %v1642, %v1650
    %v1653 = vtanh.pop %v1652
    %1655 = vrot.lane.b32.xlu0 %v1653, 64
    %v1656 = vpop.permute.xlu0 %1655
    %v1658 = vmul.f32 %v1640, %v1656
    %1660 = vrot.lane.b32.xlu0 %v1658, 32
    %v1661 = vpop.permute.xlu0 %1660
    %v1662 = vsel %vm311, %v1661, 0
    %1664 = vmatpush.msra.mxu0 0.0
    %1665 = vmatpush.msra.mxu0 0.0
    %1666 = vmatpush.msra.mxu0 0.0
    %1667 = vmatpush.msra.mxu0 0.0
    %1668 = vmatpush.msra.mxu0 0.0
    %1669 = vmatpush.msra.mxu0 0.0
    %1670 = vmatpush.msra.mxu0 0.0
    %1671 = vmatpush.msra.mxu0 0.0
    %1672 = vmatpush.msra.mxu0 0.0
    %1673 = vmatpush.msra.mxu0 0.0
    %1674 = vmatpush.msra.mxu0 0.0
    %1675 = vmatpush.msra.mxu0 0.0
    %1676 = vmatpush.msra.mxu0 %v78
    %1677 = vmatpush.msra.mxu0 %v77
    %1678 = vmatpush.msra.mxu0 %v76
    %1679 = vmatpush.msra.mxu0 %v75
    %1680 = vmatmul.f32.gmra.mxu0 %v1662
    %v1681 = vpop.f32.mrf.mxu0
    %v1682 = vadd.f32 %v1141, %v1681
    %1683 = vdwg.mxu0
    %s1684 = scalar_lea.vmem %s11, 12
    %1685 = vst.msk [vmem:[%s1684] sm:$0x3] %vm1168, %v1682
    %v1686 = vld [vmem:[%s306] sm:$0x3]
    %1687 = vmatpush.msra.mxu0 0.0
    %1688 = vmatpush.msra.mxu0 0.0
    %1689 = vmatpush.msra.mxu0 0.0
    %1690 = vmatpush.msra.mxu0 0.0
    %1691 = vmatpush.msra.mxu0 0.0
    %1692 = vmatpush.msra.mxu0 0.0
    %1693 = vmatpush.msra.mxu0 0.0
    %1694 = vmatpush.msra.mxu0 0.0
    %1695 = vmatpush.msra.mxu0 0.0
    %1696 = vmatpush.msra.mxu0 0.0
    %1697 = vmatpush.msra.mxu0 0.0
    %1698 = vmatpush.msra.mxu0 0.0
    %1699 = vmatpush.msra.mxu0 %v865
    %1700 = vmatpush.msra.mxu0 %v864
    %1701 = vmatpush.msra.mxu0 %v863
    %1702 = vmatpush.msra.mxu0 %v862
    %1703 = vmatmul.f32.gmra.mxu0 %v1662
    %v1704 = vpop.f32.mrf.mxu0
    %v1705 = vadd.f32 0.0, %v1704
    %1706 = vdwg.mxu0
    %v1707 = vadd.f32 %v1686, %v1705
    %v1708 = vxor.u32 %v1707, 2147483648
    %v1709 = vmul.f32 %v1708, 1.442695
    %v1710 = vpow.pop %v1709
    %v1711 = vadd.f32 %v1710, 1.0
    %v1712 = vrcp.pop %v1711
    %v1713 = vmul.f32 %v1711, %v1712
    %v1714 = vsub.f32 1.0, %v1713
    %v1715 = vmul.f32 %v1712, %v1714
    %v1716 = vadd.f32 %v1712, %v1715
    %vm1717 = vweird.f32 %v1711
    %vm1718 = vweird.f32 %v1712
    %vm1719 = vmor %vm1717, %vm1718
    %v1720 = vsel %vm1719, %v1712, %v1716
    %v1721 = vand.u32 2147483647, %v1711
    %vm1722 = vcmp.eq.f32.partialorder %v1721, 8.507059e+37
    %v1723 = vand.u32 %v1711, 2147483648
    %v1724 = vor.u32 1.1754944e-38, %v1723
    %v1725 = vsel %vm1722, %v1724, %v1720
    %v1726 = vmul.f32 1.0, %v1725
    %v1727 = vtanh.pop %v1707
    %v1728 = vmul.f32 %v1726, %v1652
    %1730 = vrot.lane.b32.xlu0 %v1727, 64
    %v1731 = vpop.permute.xlu0 %1730
    %v1733 = vmul.f32 %v1726, %v1731
    %1735 = vrot.lane.b32.xlu0 %v1733, 32
    %v1736 = vpop.permute.xlu0 %1735
    %v1738 = vadd.f32 %v1728, %v1736
    %v1739 = vtanh.pop %v1738
    %1741 = vrot.lane.b32.xlu0 %v1739, 64
    %v1742 = vpop.permute.xlu0 %1741
    %v1744 = vmul.f32 %v1726, %v1742
    %1746 = vrot.lane.b32.xlu0 %v1744, 32
    %v1747 = vpop.permute.xlu0 %1746
    %v1748 = vsel %vm311, %v1747, 0
    %1750 = vmatpush.msra.mxu0 0.0
    %1751 = vmatpush.msra.mxu0 0.0
    %1752 = vmatpush.msra.mxu0 0.0
    %1753 = vmatpush.msra.mxu0 0.0
    %1754 = vmatpush.msra.mxu0 0.0
    %1755 = vmatpush.msra.mxu0 0.0
    %1756 = vmatpush.msra.mxu0 0.0
    %1757 = vmatpush.msra.mxu0 0.0
    %1758 = vmatpush.msra.mxu0 0.0
    %1759 = vmatpush.msra.mxu0 0.0
    %1760 = vmatpush.msra.mxu0 0.0
    %1761 = vmatpush.msra.mxu0 0.0
    %1762 = vmatpush.msra.mxu0 %v78
    %1763 = vmatpush.msra.mxu0 %v77
    %1764 = vmatpush.msra.mxu0 %v76
    %1765 = vmatpush.msra.mxu0 %v75
    %1766 = vmatmul.f32.gmra.mxu0 %v1748
    %v1767 = vpop.f32.mrf.mxu0
    %v1768 = vadd.f32 %v1141, %v1767
    %1769 = vdwg.mxu0
    %s1770 = scalar_lea.vmem %s11, 14
    %1771 = vst.msk [vmem:[%s1770] sm:$0x3] %vm1168, %v1768
    %s1773 = scalar_lea.vmem [#allocation9], 2
    %1774 = vst.msk [vmem:[%s1773] sm:$0x3] %vm381, %v1747
    %1776 = vrot.lane.b32.xlu0 %v1738, 96
    %v1777 = vpop.permute.xlu0 %1776
    %s1779 = scalar_lea.vmem [#allocation10], 2
    %1780 = vst.msk [vmem:[%s1779] sm:$0x3] %vm381, %v1777
    // Predicated region
    $region54: #{tpu_custom_call.1} parent=1 // pred_check
      _
    $region55: #{tpu_custom_call.1} parent=1 // pred_check_branch
      %1782 = sbr.rel (0) target = $region57
    $region56: #{tpu_custom_call.1} parent=1 // pred_region
      _
    $region57: #{tpu_custom_call.1} parent=1 // pred_fallthru
      _
    // Predicated region
    $region58: #{tpu_custom_call.1} parent=1 // pred_check
      _
    $region59: #{tpu_custom_call.1} parent=1 // pred_check_branch
      %1784 = sbr.rel (0) target = $region61
    $region60: #{tpu_custom_call.1} parent=1 // pred_region
      %1786 = vsyncadd [#allocation6], 0
      %s1787 = sshll.u32 [#allocation9], 4
      %s1788 = int_to_ptr.vmem [resolvable:$true] %s1787
      %s1789 = sshll.u32 %s12, 4
      %s1790 = int_to_ptr.hbm [resolvable:$true] %s1789
      %1795 = dma.vmem_to_hbm [thread:$0]  %s1788, 64, %s1790, [#allocation6], 32, 32, 2
    $region61: #{tpu_custom_call.1} parent=1 // pred_fallthru
      _
    // Predicated region
    $region62: #{tpu_custom_call.1} parent=1 // pred_check
      _
    $region63: #{tpu_custom_call.1} parent=1 // pred_check_branch
      %1797 = sbr.rel (0) target = $region65
    $region64: #{tpu_custom_call.1} parent=1 // pred_region
      %1799 = vsyncadd [#allocation11], 0
      %s1800 = sshll.u32 [#allocation10], 4
      %s1801 = int_to_ptr.vmem [resolvable:$true] %s1800
      %s1802 = sshll.u32 %s13, 4
      %s1803 = int_to_ptr.hbm [resolvable:$true] %s1802
      %1808 = dma.vmem_to_hbm [thread:$0]  %s1801, 64, %s1803, [#allocation11], 32, 32, 2
    $region65: #{tpu_custom_call.1} parent=1 // pred_fallthru
      _
    // Predicated region
    $region66: #{tpu_custom_call.1} parent=1 // pred_check
      _
    $region67: #{tpu_custom_call.1} parent=1 // pred_check_branch
      %1810 = sbr.rel (0) target = $region69
    $region68: #{tpu_custom_call.1} parent=1 // pred_region
      _
    $region69: #{tpu_custom_call.1} parent=1 // pred_fallthru
      _
    // Predicated region
    $region70: #{tpu_custom_call.1} parent=1 // pred_check
      _
    $region71: #{tpu_custom_call.1} parent=1 // pred_check_branch
      %1812 = sbr.rel (0) target = $region73
    $region72: #{tpu_custom_call.1} parent=1 // pred_region
      %1814 = dma.done [#allocation6], 64
    $region73: #{tpu_custom_call.1} parent=1 // pred_fallthru
      _
    // Predicated region
    $region74: #{tpu_custom_call.1} parent=1 // pred_check
      _
    $region75: #{tpu_custom_call.1} parent=1 // pred_check_branch
      %1816 = sbr.rel (0) target = $region77
    $region76: #{tpu_custom_call.1} parent=1 // pred_region
      %1818 = dma.done [#allocation11], 64
    $region77: #{tpu_custom_call.1} parent=1 // pred_fallthru
      _
    %1819 = vsyncpa [#allocation5], 1
    %1820 = vsyncpa [#allocation8], 1
    %1821 = vsyncpa [#allocation6], 1
    %1822 = vsyncpa [#allocation11], 1

</llo_original>
